<compile_context>
chip_gen: v7x
topology: tpu7x:2x2x1
jax: 0.10.0
libtpu: 0.0.40
codegen_flags: <defaults>
</compile_context>

<pallas_src>
import functools
import math

import jax
import jax.numpy as jnp
from jax.experimental import pallas as pl
from jax.experimental.pallas import tpu as pltpu


# ---------------------------------------------------------------------------
# helpers
# ---------------------------------------------------------------------------

_VMEM_LIMIT = 48 * 1024 * 1024     # scoped VMEM limit: fits v7x (64 MiB), fine on v5e/v6e
_TILE_BUDGET = 40 * 1024 * 1024    # budget for double-buffered tiles per kernel


def _gelu_exact(y):
    # erf-based GELU (PyTorch / whisper default), computed in fp32
    return 0.5 * y * (1.0 + jax.lax.erf(y * 0.7071067811865475))


def _round_up(x, m):
    return ((x + m - 1) // m) * m


def _pick_tile(dim, target, align=1):
    """Largest divisor of `dim` that is <= target, preferring multiples of `align`."""
    if dim <= target:
        return dim
    best = None
    for t in range(target, 0, -1):
        if dim % t == 0:
            if t % align == 0:
                return t
            if best is None:
                best = t
    return best if best is not None else dim


# ---------------------------------------------------------------------------
# Pallas kernels
# ---------------------------------------------------------------------------

def _gemm_fullk_kernel(x_ref, w_ref, b_ref, *rest, activation, has_residual,
                       fuse_ln, ln_eps):
    """Single-shot GEMM (full contraction in one block).

    Epilogue = bias (+gelu) (+residual); optional fused LayerNorm on the x tile
    (fp32 statistics) before the MXU dot.
    """
    rest = list(rest)
    if fuse_ln:
        g_ref = rest.pop(0)
        bt_ref = rest.pop(0)
    if has_residual:
        res_ref = rest.pop(0)
    o_ref = rest.pop(0)

    x = x_ref[...]
    if fuse_ln:
        xf = x.astype(jnp.float32)
        mean = jnp.mean(xf, axis=-1, keepdims=True)
        xc = xf - mean
        var = jnp.mean(xc * xc, axis=-1, keepdims=True)
        x = ((xc * jax.lax.rsqrt(var + ln_eps)) * g_ref[...]
             + bt_ref[...]).astype(x_ref.dtype)

    y = jnp.dot(x, w_ref[...], preferred_element_type=jnp.float32) + b_ref[...]
    if activation == "gelu":
        y = _gelu_exact(y)
    if has_residual:
        y = y + res_ref[...].astype(jnp.float32)
    o_ref[...] = y.astype(o_ref.dtype)


def _gemm_splitk_kernel(x_ref, w_ref, b_ref, *rest, activation, has_residual):
    """Split-K fallback: fp32 VMEM accumulator, init/epilogue via pl.when."""
    if has_residual:
        res_ref, o_ref, acc_ref = rest
    else:
        res_ref = None
        o_ref, acc_ref = rest

    @pl.when(pl.program_id(2) == 0)
    def _():
        acc_ref[...] = jnp.zeros(acc_ref.shape, dtype=jnp.float32)

    acc_ref[...] += jnp.dot(x_ref[...], w_ref[...],
                            preferred_element_type=jnp.float32)

    @pl.when(pl.program_id(2) == pl.num_programs(2) - 1)
    def _():
        y = acc_ref[...] + b_ref[...]
        if activation == "gelu":
            y = _gelu_exact(y)
        if has_residual:
            y = y + res_ref[...].astype(jnp.float32)
        o_ref[...] = y.astype(o_ref.dtype)


def _layernorm_kernel(x_ref, g_ref, b_ref, o_ref, *, eps):
    x = x_ref[...].astype(jnp.float32)
    mean = jnp.mean(x, axis=-1, keepdims=True)
    xc = x - mean
    var = jnp.mean(xc * xc, axis=-1, keepdims=True)
    o_ref[...] = (xc * jax.lax.rsqrt(var + eps) * g_ref[...]
                  + b_ref[...]).astype(o_ref.dtype)


def _flash_attn_kernel(q_ref, k_ref, v_ref, o_ref, m_sc, l_sc, acc_sc,
                       *, hb, hd, tkv, t_real, t_pad):
    """Flash attention over KV tiles for a group of `hb` heads.

    q/k/v refs: (tile, hb*hd) slices of the (3,B,T,C) qkv slab (q pre-scaled).
    Epilogue assembles the full (tq, hb*hd) tile and issues one lane-dense store.
    Padded KV positions (>= t_real) are masked out.
    """
    ki = pl.program_id(3)

    @pl.when(ki == 0)
    def _():
        m_sc[...] = jnp.full(m_sc.shape, -jnp.inf, dtype=jnp.float32)
        l_sc[...] = jnp.zeros(l_sc.shape, dtype=jnp.float32)
        acc_sc[...] = jnp.zeros(acc_sc.shape, dtype=jnp.float32)

    need_mask = t_real != t_pad
    if need_mask:
        col = jax.lax.broadcasted_iota(jnp.int32, (1, tkv), 1) + ki * tkv
        kv_valid = col < t_real

    for h in range(hb):                       # static, small (2 at real Whisper shapes)
        sl = pl.ds(h * hd, hd)
        q = q_ref[:, sl]                      # (tq, hd)  bf16
        k = k_ref[:, sl]                      # (tkv, hd) bf16
        v = v_ref[:, sl]                      # (tkv, hd) bf16
        s = jax.lax.dot_general(q, k, (((1,), (1,)), ((), ())),
                                preferred_element_type=jnp.float32)   # (tq, tkv)
        if need_mask:
            s = jnp.where(kv_valid, s, -1e30)
        m_prev = m_sc[h]
        m_new = jnp.maximum(m_prev, jnp.max(s, axis=-1, keepdims=True))
        alpha = jnp.exp(m_prev - m_new)
        p = jnp.exp(s - m_new)
        l_sc[h] = alpha * l_sc[h] + jnp.sum(p, axis=-1, keepdims=True)
        acc_sc[h] = alpha * acc_sc[h] + jnp.dot(p.astype(v.dtype), v,
                                                preferred_element_type=jnp.float32)
        m_sc[h] = m_new

    @pl.when(ki == pl.num_programs(3) - 1)
    def _():
        parts = [acc_sc[h] * pl.reciprocal(l_sc[h], approx=True) for h in range(hb)]
        o_ref[...] = jnp.concatenate(parts, axis=-1).astype(o_ref.dtype)


# ---------------------------------------------------------------------------
# Pallas wrappers
# ---------------------------------------------------------------------------

def pallas_layernorm(x2d, gamma, beta, eps=1e-5, out_dtype=jnp.bfloat16, tm=512):
    """Row-tiled standalone LayerNorm (used for ln_post); fp32 statistics."""
    M, N = x2d.shape
    tm = _pick_tile(M, tm, align=8)
    kernel = functools.partial(_layernorm_kernel, eps=eps)
    return pl.pallas_call(
        kernel,
        out_shape=jax.ShapeDtypeStruct((M, N), out_dtype),
        grid=(M // tm,),
        in_specs=[
            pl.BlockSpec((tm, N), lambda i: (i, 0)),
            pl.BlockSpec((1, N), lambda i: (0, 0)),
            pl.BlockSpec((1, N), lambda i: (0, 0)),
        ],
        out_specs=pl.BlockSpec((tm, N), lambda i: (i, 0)),
        compiler_params=pltpu.CompilerParams(
            dimension_semantics=("parallel",),
            vmem_limit_bytes=_VMEM_LIMIT),
    )(x2d, gamma.reshape(1, N).astype(jnp.float32),
      beta.reshape(1, N).astype(jnp.float32))


def pallas_linear(x, w, b, activation=None, residual=None, ln=None,
                  out_dtype=jnp.bfloat16, tm_target=512, tn_target=640):
    """y = act(LN?(x) @ w + b) (+ residual).

    x:(M,K) bf16, w:(K,N) bf16, b:(N,).  `ln=(gamma,beta)` fuses a pre-LayerNorm.
    `residual` may have M rows, or R rows with M % R == 0 (periodic, e.g. pos_emb).
    """
    M, K = x.shape
    N = w.shape[1]
    has_res = residual is not None
    res_rows = residual.shape[0] if has_res else M
    periodic = has_res and res_rows != M
    if periodic:
        assert M % res_rows == 0

    tm = _pick_tile(res_rows if periodic else M, tm_target, align=8)
    tn = _pick_tile(N, tn_target, align=128)
    out_b = jnp.dtype(out_dtype).itemsize

    def footprint(tk, split):
        fp = 4 * (tm * tk + tk * tn)          # double-buffered bf16 x / w tiles
        fp += 2 * tm * tn * out_b             # double-buffered output tile
        if has_res:
            fp += 4 * tm * tn
        if split:
            fp += 4 * tm * tn                 # fp32 accumulator scratch
        fp += 16 * (tn + K)                   # bias / LN params (generous)
        return fp

    tk = K
    if footprint(K, split=False) > _TILE_BUDGET:
        tk = _pick_tile(K, 2048, align=128)
        while tk > 256 and footprint(tk, split=True) > _TILE_BUDGET:
            tk = _pick_tile(K, tk // 2, align=128)

    if ln is not None and tk < K:
        # LN fusion needs the full contraction row; fall back to a standalone pass.
        x = pallas_layernorm(x, ln[0], ln[1], out_dtype=x.dtype)
        ln = None
    fuse_ln = ln is not None

    b2 = b.reshape(1, N).astype(jnp.float32)
    rp = res_rows // tm if has_res else 1

    if tk == K:
        # -------- full-K path: no k axis, no accumulator scratch --------
        in_specs = [
            pl.BlockSpec((tm, K), lambda i, j: (i, 0)),
            pl.BlockSpec((K, tn), lambda i, j: (0, j)),
            pl.BlockSpec((1, tn), lambda i, j: (0, j)),
        ]
        args = [x, w, b2]
        if fuse_ln:
            in_specs += [pl.BlockSpec((1, K), lambda i, j: (0, 0)),
                         pl.BlockSpec((1, K), lambda i, j: (0, 0))]
            args += [ln[0].reshape(1, K).astype(jnp.float32),
                     ln[1].reshape(1, K).astype(jnp.float32)]
        if has_res:
            if periodic:
                in_specs.append(pl.BlockSpec((tm, tn), lambda i, j: (i % rp, j)))
            else:
                in_specs.append(pl.BlockSpec((tm, tn), lambda i, j: (i, j)))
            args.append(residual)
        kernel = functools.partial(_gemm_fullk_kernel, activation=activation,
                                   has_residual=has_res, fuse_ln=fuse_ln,
                                   ln_eps=1e-5)
        return pl.pallas_call(
            kernel,
            out_shape=jax.ShapeDtypeStruct((M, N), out_dtype),
            grid=(M // tm, N // tn),
            in_specs=in_specs,
            out_specs=pl.BlockSpec((tm, tn), lambda i, j: (i, j)),
            compiler_params=pltpu.CompilerParams(
                dimension_semantics=("parallel", "parallel"),
                vmem_limit_bytes=_VMEM_LIMIT),
            cost_estimate=pl.CostEstimate(
                flops=2 * M * K * N,
                transcendentals=M * N if activation == "gelu" else 0,
                bytes_accessed=2 * M * K * (N // tn) + 2 * K * N * (M // tm)
                               + out_b * M * N + (2 * M * N if has_res else 0)),
        )(*args)

    # -------- split-K fallback --------
    in_specs = [
        pl.BlockSpec((tm, tk), lambda i, j, k: (i, k)),
        pl.BlockSpec((tk, tn), lambda i, j, k: (k, j)),
        pl.BlockSpec((1, tn), lambda i, j, k: (0, j)),
    ]
    args = [x, w, b2]
    if has_res:
        if periodic:
            in_specs.append(pl.BlockSpec((tm, tn), lambda i, j, k: (i % rp, j)))
        else:
            in_specs.append(pl.BlockSpec((tm, tn), lambda i, j, k: (i, j)))
        args.append(residual)
    kernel = functools.partial(_gemm_splitk_kernel, activation=activation,
                               has_residual=has_res)
    return pl.pallas_call(
        kernel,
        out_shape=jax.ShapeDtypeStruct((M, N), out_dtype),
        grid=(M // tm, N // tn, K // tk),
        in_specs=in_specs,
        out_specs=pl.BlockSpec((tm, tn), lambda i, j, k: (i, j)),
        scratch_shapes=[pltpu.VMEM((tm, tn), jnp.float32)],
        compiler_params=pltpu.CompilerParams(
            dimension_semantics=("parallel", "parallel", "arbitrary"),
            vmem_limit_bytes=_VMEM_LIMIT),
        cost_estimate=pl.CostEstimate(
            flops=2 * M * K * N,
            transcendentals=M * N if activation == "gelu" else 0,
            bytes_accessed=2 * M * K * (N // tn) + 2 * K * N * (M // tm)
                           + out_b * M * N + (2 * M * N if has_res else 0)),
    )(*args)


def pallas_qkv_linear(x, w3, b3, ln, out_dtype=jnp.bfloat16,
                      tm_target=512, tn_target=640):
    """Fused QKV projection with fused pre-LayerNorm.

    x:(M,K), w3:(3,K,N), b3:(3,N) -> (3,M,N); LN applied to x before every dot.
    """
    M, K = x.shape
    _, _, N = w3.shape
    tm = _pick_tile(M, tm_target, align=8)
    tn = _pick_tile(N, tn_target, align=128)
    while 4 * (tm * K + K * tn) + 4 * tm * tn > _TILE_BUDGET and tn > 128:
        tn = _pick_tile(N, tn // 2, align=128)

    kernel = functools.partial(_gemm_fullk_kernel, activation=None,
                               has_residual=False, fuse_ln=True, ln_eps=1e-5)
    return pl.pallas_call(
        kernel,
        out_shape=jax.ShapeDtypeStruct((3, M, N), out_dtype),
        grid=(3, M // tm, N // tn),
        in_specs=[
            pl.BlockSpec((tm, K), lambda s, i, j: (i, 0)),
            pl.BlockSpec((None, K, tn), lambda s, i, j: (s, 0, j)),
            pl.BlockSpec((None, 1, tn), lambda s, i, j: (s, 0, j)),
            pl.BlockSpec((1, K), lambda s, i, j: (0, 0)),
            pl.BlockSpec((1, K), lambda s, i, j: (0, 0)),
        ],
        out_specs=pl.BlockSpec((None, tm, tn), lambda s, i, j: (s, i, j)),
        compiler_params=pltpu.CompilerParams(
            dimension_semantics=("parallel", "parallel", "parallel"),
            vmem_limit_bytes=_VMEM_LIMIT),
        cost_estimate=pl.CostEstimate(
            flops=2 * 3 * M * K * N, transcendentals=0,
            bytes_accessed=2 * 3 * M * K * (N // tn) + 2 * 3 * K * N * (M // tm)
                           + 2 * 3 * M * N),
    )(x, w3, b3.reshape(3, 1, N).astype(jnp.float32),
      ln[0].reshape(1, K).astype(jnp.float32),
      ln[1].reshape(1, K).astype(jnp.float32))


def pallas_attention(qkv, n_head, t_real, out_dtype=jnp.bfloat16,
                     tq_target=512, tkv_target=512):
    """qkv: (3, B, Tp, C) slab (q pre-scaled by D**-0.5). Returns (B, Tp, C).

    KV positions >= t_real (padding) are masked out inside the kernel.
    """
    _, B, Tp, C = qkv.shape
    D = C // n_head
    # group heads so the block lane width is 128 (or full C) -> lane-dense stores
    hb = math.gcd(n_head, max(1, 128 // D))
    if (hb * D) % 128 != 0 and hb * D != C:
        hb = n_head
    bw = hb * D
    ng = C // bw
    tq = _pick_tile(Tp, tq_target, align=8)
    tkv = _pick_tile(Tp, tkv_target, align=8)

    kernel = functools.partial(_flash_attn_kernel, hb=hb, hd=D, tkv=tkv,
                               t_real=t_real, t_pad=Tp)
    return pl.pallas_call(
        kernel,
        out_shape=jax.ShapeDtypeStruct((B, Tp, C), out_dtype),
        grid=(B, ng, Tp // tq, Tp // tkv),
        in_specs=[
            pl.BlockSpec((None, None, tq, bw), lambda b, g, qi, ki: (0, b, qi, g)),
            pl.BlockSpec((None, None, tkv, bw), lambda b, g, qi, ki: (1, b, ki, g)),
            pl.BlockSpec((None, None, tkv, bw), lambda b, g, qi, ki: (2, b, ki, g)),
        ],
        out_specs=pl.BlockSpec((None, tq, bw), lambda b, g, qi, ki: (b, qi, g)),
        scratch_shapes=[
            pltpu.VMEM((hb, tq, 1), jnp.float32),   # running max
            pltpu.VMEM((hb, tq, 1), jnp.float32),   # running denom
            pltpu.VMEM((hb, tq, D), jnp.float32),   # running numerator
        ],
        compiler_params=pltpu.CompilerParams(
            dimension_semantics=("parallel", "parallel", "parallel", "arbitrary"),
            vmem_limit_bytes=_VMEM_LIMIT),
        cost_estimate=pl.CostEstimate(
            flops=4 * B * n_head * Tp * Tp * D,
            transcendentals=B * n_head * Tp * Tp,
            bytes_accessed=2 * B * Tp * C * (2 + 2 * (Tp // tq))),
    )(qkv, qkv, qkv)


# ---------------------------------------------------------------------------
# Conv stem (channels-last im2col -> GEMM), blocks, full encoder
# ---------------------------------------------------------------------------

def conv1d_gelu(x, w2, b, stride, t_out, residual=None):
    """Conv1d(k=3, pad=1, stride) + exact GELU, channels-last.

    x:(B,T,Cin); w2:(3*Cin,Cout) with rows ordered (tap k, cin).
    Produces exactly `t_out` output frames (extra frames use zero right-padding).
    """
    # TODO(synk): fold the 3 taps into the GEMM grid with manual DMA row-shifts to
    #             avoid materializing the 3x patch slab in HBM.
    B, T, Cin = x.shape
    Cout = w2.shape[1]
    K = 3
    need = stride * (t_out - 1) + K
    xp = jnp.pad(x, ((0, 0), (1, max(0, need - (T + 1))), (0, 0)))[:, :need, :]
    cols = [xp[:, k: k + stride * (t_out - 1) + 1: stride, :] for k in range(K)]
    patches = jnp.concatenate(cols, axis=-1).reshape(B * t_out, K * Cin)
    y = pallas_linear(patches.astype(jnp.bfloat16), w2, b, activation="gelu",
                      residual=residual)
    return y.reshape(B, t_out, Cout)


def sinusoids(length, channels, max_timescale=10000.0):
    assert channels % 2 == 0
    log_inc = jnp.log(max_timescale) / (channels // 2 - 1)
    inv_timescales = jnp.exp(-log_inc * jnp.arange(channels // 2, dtype=jnp.float32))
    scaled_time = jnp.arange(length, dtype=jnp.float32)[:, None] * inv_timescales[None, :]
    return jnp.concatenate([jnp.sin(scaled_time), jnp.cos(scaled_time)], axis=1)


def residual_attention_block(x2, p, n_head, B, Tp, t_real):
    C = x2.shape[1]
    # --- self attention (pre-LN fused into QKV GEMM), residual fused into o-proj ---
    qkv = pallas_qkv_linear(x2, p["qkv_w"], p["qkv_b"],
                            ln=(p["attn_ln_w"], p["attn_ln_b"]))        # (3, B*Tp, C)
    a = pallas_attention(qkv.reshape(3, B, Tp, C), n_head, t_real=t_real)
    x2 = pallas_linear(a.reshape(B * Tp, C), p["o_w"], p["o_b"], residual=x2)
    # --- MLP (pre-LN fused into fc1 GEMM), residual fused into fc2 epilogue ---
    h = pallas_linear(x2, p["fc1_w"], p["fc1_b"], activation="gelu",
                      ln=(p["mlp_ln_w"], p["mlp_ln_b"]))
    x2 = pallas_linear(h, p["fc2_w"], p["fc2_b"], residual=x2)
    return x2


def whisper_encoder_forward(audio, pp, n_head):
    """audio: (B, n_mels, T) NCW (PyTorch layout). Returns (B, T//2, n_state) f32."""
    B, n_mels, T = audio.shape
    T2 = (T - 1) // 2 + 1                          # conv2 (k=3, pad=1, stride=2) length
    T1p = _round_up(T, 8)                          # aligned conv1 GEMM rows
    Tp = _round_up(T2, 128 if T2 >= 128 else 8)    # padded transformer sequence

    x = audio.transpose(0, 2, 1).astype(jnp.bfloat16)                  # NTC once
    x = conv1d_gelu(x, pp["conv1_w2"], pp["conv1_b"], stride=1, t_out=T1p)
    x = x[:, :T, :]                                                    # drop align pad
    # conv2 (stride 2) with +pos_emb fused into its epilogue (periodic residual,
    # no broadcast materialization); output already padded to Tp frames.
    pos = pp["pos_emb"].astype(jnp.bfloat16)
    if pos.shape[0] < Tp:
        pos = jnp.pad(pos, ((0, Tp - pos.shape[0]), (0, 0)))
    else:
        pos = pos[:Tp]
    x = conv1d_gelu(x, pp["conv2_w2"], pp["conv2_b"], stride=2, t_out=Tp,
                    residual=pos)                                      # (B, Tp, C)
    C = x.shape[-1]

    x2 = x.reshape(B * Tp, C)
    for blk in pp["blocks"]:
        x2 = residual_attention_block(x2, blk, n_head, B, Tp, t_real=T2)
    out = pallas_layernorm(x2, pp["ln_post_w"], pp["ln_post_b"], out_dtype=jnp.float32)
    return out.reshape(B, Tp, C)[:, :T2, :]


# ---------------------------------------------------------------------------
# Parameters (synthetic "checkpoint") + prep (bf16 cast, QKV fusion, scale folding)
# ---------------------------------------------------------------------------

def make_params(key, n_mels, n_state, n_head, n_layer, n_ctx):
    # TODO(synk): real module loads a Whisper checkpoint from disk (deepspeed zero
    # partition loading); here weights are deterministic random tensors of matching shape.
    del n_head
    keys = iter(jax.random.split(key, 8 + 16 * n_layer))
    s = 0.02

    def rnd(shape):
        return s * jax.random.normal(next(keys), shape, dtype=jnp.float32)

    params = {
        "conv1_w": rnd((n_state, n_mels, 3)), "conv1_b": rnd((n_state,)),
        "conv2_w": rnd((n_state, n_state, 3)), "conv2_b": rnd((n_state,)),
        "pos_emb": sinusoids(n_ctx, n_state),
        "ln_post_w": jnp.ones((n_state,), jnp.float32),
        "ln_post_b": jnp.zeros((n_state,), jnp.float32),
        "blocks": [],
    }
    for _ in range(n_layer):
        params["blocks"].append({
            "attn_ln_w": jnp.ones((n_state,), jnp.float32),
            "attn_ln_b": jnp.zeros((n_state,), jnp.float32),
            "q_w": rnd((n_state, n_state)), "q_b": rnd((n_state,)),
            "k_w": rnd((n_state, n_state)),                       # whisper: key has no bias
            "v_w": rnd((n_state, n_state)), "v_b": rnd((n_state,)),
            "o_w": rnd((n_state, n_state)), "o_b": rnd((n_state,)),
            "mlp_ln_w": jnp.ones((n_state,), jnp.float32),
            "mlp_ln_b": jnp.zeros((n_state,), jnp.float32),
            "fc1_w": rnd((n_state, 4 * n_state)), "fc1_b": rnd((4 * n_state,)),
            "fc2_w": rnd((4 * n_state, n_state)), "fc2_b": rnd((n_state,)),
        })
    return params


def prepare_params(p, n_head):
    """Cast weights to bf16, fuse QKV, fold whisper's D**-0.25 q/k scaling into q."""
    bf = lambda a: a.astype(jnp.bfloat16)
    Cout, Cin, K = p["conv1_w"].shape
    C = Cout
    D = C // n_head
    scale = D ** -0.5                 # (D**-0.25 on q) * (D**-0.25 on k) folded into q
    prep = {
        # conv weights as (k, cin)-ordered GEMM matrices for channels-last im2col
        "conv1_w2": bf(p["conv1_w"].transpose(2, 1, 0).reshape(K * Cin, C)),
        "conv1_b": p["conv1_b"],
        "conv2_w2": bf(p["conv2_w"].transpose(2, 1, 0).reshape(K * C, C)),
        "conv2_b": p["conv2_b"],
        "pos_emb": p["pos_emb"],
        "ln_post_w": p["ln_post_w"], "ln_post_b": p["ln_post_b"],
        "blocks": [],
    }
    for blk in p["blocks"]:
        prep["blocks"].append({
            "attn_ln_w": blk["attn_ln_w"], "attn_ln_b": blk["attn_ln_b"],
            "qkv_w": bf(jnp.stack([blk["q_w"] * scale, blk["k_w"], blk["v_w"]])),  # (3,C,C)
            "qkv_b": jnp.stack([blk["q_b"] * scale,
                                jnp.zeros_like(blk["v_b"]), blk["v_b"]]),          # (3,C)
            "o_w": bf(blk["o_w"]), "o_b": blk["o_b"],
            "mlp_ln_w": blk["mlp_ln_w"], "mlp_ln_b": blk["mlp_ln_b"],
            "fc1_w": bf(blk["fc1_w"]), "fc1_b": blk["fc1_b"],
            "fc2_w": bf(blk["fc2_w"]), "fc2_b": blk["fc2_b"],
        })
    return prep


# ---------------------------------------------------------------------------
# Main
# ---------------------------------------------------------------------------

if __name__ == "__main__":
    B, n_mels, T = 2, 16, 16         # small stand-ins for (batch, 80 mels, 3000 frames)
    n_state, n_head, n_layer = 32, 4, 2
    n_ctx = T // 2                   # conv2 has stride 2

    key = jax.random.PRNGKey(0)
    k_param, k_audio = jax.random.split(key)
    raw_params = make_params(k_param, n_mels, n_state, n_head, n_layer, n_ctx)
    params = prepare_params(raw_params, n_head)
    audio = jax.random.normal(k_audio, (B, n_mels, T), dtype=jnp.float32)

    fwd = jax.jit(functools.partial(whisper_encoder_forward, n_head=n_head))
    out = jax.block_until_ready(fwd(audio, params))
    assert out.shape == (B, n_ctx, n_state), out.shape
    assert bool(jnp.all(jnp.isfinite(out)))
    print("KERNEL_OK")
</pallas_src>

<mosaic_0001>
module attributes {stable_mosaic.version = 11 : i64} {
  func.func @_gemm_fullk_kernel(%arg0: i32, %arg1: i32, %arg2: memref<32x48xbf16, #tpu.memory_space<vmem>>, %arg3: memref<48x32xbf16, #tpu.memory_space<vmem>>, %arg4: memref<1x32xf32, #tpu.memory_space<vmem>>, %arg5: memref<32x32xbf16, #tpu.memory_space<vmem>>) attributes {dimension_semantics = [#tpu.dimension_semantics<parallel>, #tpu.dimension_semantics<parallel>], iteration_bounds = array<i64: 1, 1>, scalar_prefetch = 0 : i64, scratch_operands = 0 : i64, tpu.core_type = #tpu.core_type<tc>, window_params = [{transform_indices = @transform_0, window_bounds = array<i64: 32, 48>}, {transform_indices = @transform_1, window_bounds = array<i64: 48, 32>}, {transform_indices = @transform_2, window_bounds = array<i64: 1, 32>}, {transform_indices = @transform_3, window_bounds = array<i64: 32, 32>}]} {
    %c0 = arith.constant 0 : index
    %c0_0 = arith.constant 0 : index
    %0 = vector.load %arg2[%c0, %c0_0] : memref<32x48xbf16, #tpu.memory_space<vmem>>, vector<32x48xbf16>
    %c0_1 = arith.constant 0 : index
    %c0_2 = arith.constant 0 : index
    %1 = vector.load %arg3[%c0_1, %c0_2] : memref<48x32xbf16, #tpu.memory_space<vmem>>, vector<48x32xbf16>
    %cst = arith.constant dense<0.000000e+00> : vector<32x32xf32>
    %2 = tpu.matmul %0, %1, %cst {dimension_numbers = #tpu.dot_dimension_numbers<[1], [0], [0], [1], [0, 0, 1, 1], [], []>} : vector<32x48xbf16>, vector<48x32xbf16>, vector<32x32xf32> -> vector<32x32xf32>
    %c0_3 = arith.constant 0 : index
    %c0_4 = arith.constant 0 : index
    %3 = vector.load %arg4[%c0_3, %c0_4] : memref<1x32xf32, #tpu.memory_space<vmem>>, vector<1x32xf32>
    %4 = vector.broadcast %3 : vector<1x32xf32> to vector<32x32xf32>
    %5 = arith.addf %2, %4 : vector<32x32xf32>
    %cst_5 = arith.constant 5.000000e-01 : f32
    %6 = vector.broadcast %cst_5 : f32 to vector<32x32xf32>
    %7 = arith.mulf %6, %5 : vector<32x32xf32>
    %cst_6 = arith.constant 0.707106769 : f32
    %8 = vector.broadcast %cst_6 : f32 to vector<32x32xf32>
    %9 = arith.mulf %5, %8 : vector<32x32xf32>
    %10 = math.erf %9 : vector<32x32xf32>
    %cst_7 = arith.constant 1.000000e+00 : f32
    %11 = vector.broadcast %cst_7 : f32 to vector<32x32xf32>
    %12 = arith.addf %11, %10 : vector<32x32xf32>
    %13 = arith.mulf %7, %12 : vector<32x32xf32>
    %14 = arith.truncf %13 : vector<32x32xf32> to vector<32x32xbf16>
    %c0_8 = arith.constant 0 : index
    %c0_9 = arith.constant 0 : index
    %15 = vector.load %arg5[%c0_8, %c0_9] : memref<32x32xbf16, #tpu.memory_space<vmem>>, vector<32x32xbf16>
    tpu.vector_store %arg5[%c0_8, %c0_9], %14 {strides = array<i32>} : memref<32x32xbf16, #tpu.memory_space<vmem>>, vector<32x32xbf16>,
    return
  }
  func.func @transform_0(%arg0: i32, %arg1: i32) -> (i32, i32) {
    %c0_i32 = arith.constant 0 : i32
    %c0_i32_0 = arith.constant 0 : i32
    return %arg0, %c0_i32 : i32, i32
  }
  func.func @transform_1(%arg0: i32, %arg1: i32) -> (i32, i32) {
    %c0_i32 = arith.constant 0 : i32
    %c0_i32_0 = arith.constant 0 : i32
    return %c0_i32, %arg1 : i32, i32
  }
  func.func @transform_2(%arg0: i32, %arg1: i32) -> (i32, i32) {
    %c0_i32 = arith.constant 0 : i32
    %c0_i32_0 = arith.constant 0 : i32
    return %c0_i32, %arg1 : i32, i32
  }
  func.func @transform_3(%arg0: i32, %arg1: i32) -> (i32, i32) {
    %c0_i32 = arith.constant 0 : i32
    return %arg0, %arg1 : i32, i32
  }
}

module attributes {stable_mosaic.version = 11 : i64} {
  func.func @_gemm_fullk_kernel(%arg0: i32, %arg1: i32, %arg2: memref<8x96xbf16, #tpu.memory_space<vmem>>, %arg3: memref<96x32xbf16, #tpu.memory_space<vmem>>, %arg4: memref<1x32xf32, #tpu.memory_space<vmem>>, %arg5: memref<8x32xbf16, #tpu.memory_space<vmem>>, %arg6: memref<8x32xbf16, #tpu.memory_space<vmem>>) attributes {dimension_semantics = [#tpu.dimension_semantics<parallel>, #tpu.dimension_semantics<parallel>], iteration_bounds = array<i64: 2, 1>, scalar_prefetch = 0 : i64, scratch_operands = 0 : i64, tpu.core_type = #tpu.core_type<tc>, window_params = [{transform_indices = @transform_0, window_bounds = array<i64: 8, 96>}, {transform_indices = @transform_1, window_bounds = array<i64: 96, 32>}, {transform_indices = @transform_2, window_bounds = array<i64: 1, 32>}, {transform_indices = @transform_3, window_bounds = array<i64: 8, 32>}, {transform_indices = @transform_4, window_bounds = array<i64: 8, 32>}]} {
    %c0 = arith.constant 0 : index
    %c0_0 = arith.constant 0 : index
    %0 = vector.load %arg2[%c0, %c0_0] : memref<8x96xbf16, #tpu.memory_space<vmem>>, vector<8x96xbf16>
    %c0_1 = arith.constant 0 : index
    %c0_2 = arith.constant 0 : index
    %1 = vector.load %arg3[%c0_1, %c0_2] : memref<96x32xbf16, #tpu.memory_space<vmem>>, vector<96x32xbf16>
    %cst = arith.constant dense<0.000000e+00> : vector<8x32xf32>
    %2 = tpu.matmul %0, %1, %cst {dimension_numbers = #tpu.dot_dimension_numbers<[1], [0], [0], [1], [0, 0, 1, 1], [], []>} : vector<8x96xbf16>, vector<96x32xbf16>, vector<8x32xf32> -> vector<8x32xf32>
    %c0_3 = arith.constant 0 : index
    %c0_4 = arith.constant 0 : index
    %3 = vector.load %arg4[%c0_3, %c0_4] : memref<1x32xf32, #tpu.memory_space<vmem>>, vector<1x32xf32>
    %4 = vector.broadcast %3 : vector<1x32xf32> to vector<8x32xf32>
    %5 = arith.addf %2, %4 : vector<8x32xf32>
    %cst_5 = arith.constant 5.000000e-01 : f32
    %6 = vector.broadcast %cst_5 : f32 to vector<8x32xf32>
    %7 = arith.mulf %6, %5 : vector<8x32xf32>
    %cst_6 = arith.constant 0.707106769 : f32
    %8 = vector.broadcast %cst_6 : f32 to vector<8x32xf32>
    %9 = arith.mulf %5, %8 : vector<8x32xf32>
    %10 = math.erf %9 : vector<8x32xf32>
    %cst_7 = arith.constant 1.000000e+00 : f32
    %11 = vector.broadcast %cst_7 : f32 to vector<8x32xf32>
    %12 = arith.addf %11, %10 : vector<8x32xf32>
    %13 = arith.mulf %7, %12 : vector<8x32xf32>
    %c0_8 = arith.constant 0 : index
    %c0_9 = arith.constant 0 : index
    %14 = vector.load %arg5[%c0_8, %c0_9] : memref<8x32xbf16, #tpu.memory_space<vmem>>, vector<8x32xbf16>
    %15 = arith.extf %14 : vector<8x32xbf16> to vector<8x32xf32>
    %16 = arith.addf %13, %15 : vector<8x32xf32>
    %17 = arith.truncf %16 : vector<8x32xf32> to vector<8x32xbf16>
    %c0_10 = arith.constant 0 : index
    %c0_11 = arith.constant 0 : index
    %18 = vector.load %arg6[%c0_10, %c0_11] : memref<8x32xbf16, #tpu.memory_space<vmem>>, vector<8x32xbf16>
    tpu.vector_store %arg6[%c0_10, %c0_11], %17 {strides = array<i32>} : memref<8x32xbf16, #tpu.memory_space<vmem>>, vector<8x32xbf16>,
    return
  }
  func.func @transform_0(%arg0: i32, %arg1: i32) -> (i32, i32) {
    %c0_i32 = arith.constant 0 : i32
    %c0_i32_0 = arith.constant 0 : i32
    return %arg0, %c0_i32 : i32, i32
  }
  func.func @transform_1(%arg0: i32, %arg1: i32) -> (i32, i32) {
    %c0_i32 = arith.constant 0 : i32
    %c0_i32_0 = arith.constant 0 : i32
    return %c0_i32, %arg1 : i32, i32
  }
  func.func @transform_2(%arg0: i32, %arg1: i32) -> (i32, i32) {
    %c0_i32 = arith.constant 0 : i32
    %c0_i32_0 = arith.constant 0 : i32
    return %c0_i32, %arg1 : i32, i32
  }
  func.func @transform_3(%arg0: i32, %arg1: i32) -> (i32, i32) {
    %c1_i32 = arith.constant 1 : i32
    %c0_i32 = arith.constant 0 : i32
    %0 = arith.cmpi eq, %c1_i32, %c0_i32 : i32
    %c1_i32_0 = arith.constant 1 : i32
    %1 = arith.select %0, %c1_i32_0, %c1_i32 : i32
    %2 = arith.remsi %arg0, %1 : i32
    %c0_i32_1 = arith.constant 0 : i32
    %3 = arith.cmpi ne, %2, %c0_i32_1 : i32
    %c0_i32_2 = arith.constant 0 : i32
    %4 = arith.cmpi slt, %2, %c0_i32_2 : i32
    %c0_i32_3 = arith.constant 0 : i32
    %5 = arith.cmpi slt, %1, %c0_i32_3 : i32
    %6 = arith.xori %4, %5 : i1
    %7 = arith.andi %6, %3 : i1
    %8 = arith.addi %2, %1 : i32
    %9 = arith.select %7, %8, %2 : i32
    %c0_i32_4 = arith.constant 0 : i32
    return %9, %arg1 : i32, i32
  }
  func.func @transform_4(%arg0: i32, %arg1: i32) -> (i32, i32) {
    %c0_i32 = arith.constant 0 : i32
    return %arg0, %arg1 : i32, i32
  }
}

module attributes {stable_mosaic.version = 11 : i64} {
  func.func @_flash_attn_kernel(%arg0: i32, %arg1: i32, %arg2: i32, %arg3: i32, %arg4: memref<1x1x8x32xbf16, #tpu.memory_space<vmem>>, %arg5: memref<1x1x8x32xbf16, #tpu.memory_space<vmem>>, %arg6: memref<1x1x8x32xbf16, #tpu.memory_space<vmem>>, %arg7: memref<1x8x32xbf16, #tpu.memory_space<vmem>>, %arg8: memref<4x8x1xf32, #tpu.memory_space<vmem>>, %arg9: memref<4x8x1xf32, #tpu.memory_space<vmem>>, %arg10: memref<4x8x8xf32, #tpu.memory_space<vmem>>) attributes {dimension_semantics = [#tpu.dimension_semantics<parallel>, #tpu.dimension_semantics<parallel>, #tpu.dimension_semantics<parallel>, #tpu.dimension_semantics<arbitrary>], iteration_bounds = array<i64: 2, 1, 1, 1>, scalar_prefetch = 0 : i64, scratch_operands = 3 : i64, tpu.core_type = #tpu.core_type<tc>, window_params = [{transform_indices = @transform_0, window_bounds = array<i64: 1, 1, 8, 32>}, {transform_indices = @transform_1, window_bounds = array<i64: 1, 1, 8, 32>}, {transform_indices = @transform_2, window_bounds = array<i64: 1, 1, 8, 32>}, {transform_indices = @transform_3, window_bounds = array<i64: 1, 8, 32>}]} {
    %c0_i32 = arith.constant 0 : i32
    %0 = arith.cmpi eq, %arg3, %c0_i32 : i32
    %1 = arith.extui %0 : i1 to i32
    %c0_i32_0 = arith.constant 0 : i32
    %2 = arith.cmpi ne, %1, %c0_i32_0 : i32
    scf.if %2 {
      %cst_131 = arith.constant 0xFF800000 : f32
      %162 = vector.broadcast %cst_131 : f32 to vector<4x8x1xf32>
      %c0_132 = arith.constant 0 : index
      %c0_133 = arith.constant 0 : index
      %c0_134 = arith.constant 0 : index
      %163 = vector.load %arg8[%c0_132, %c0_133, %c0_134] : memref<4x8x1xf32, #tpu.memory_space<vmem>>, vector<4x8x1xf32>
      tpu.vector_store %arg8[%c0_132, %c0_133, %c0_134], %162 {strides = array<i32>} : memref<4x8x1xf32, #tpu.memory_space<vmem>>, vector<4x8x1xf32>,
      %cst_135 = arith.constant 0.000000e+00 : f32
      %164 = vector.broadcast %cst_135 : f32 to vector<4x8x1xf32>
      %c0_136 = arith.constant 0 : index
      %c0_137 = arith.constant 0 : index
      %c0_138 = arith.constant 0 : index
      %165 = vector.load %arg9[%c0_136, %c0_137, %c0_138] : memref<4x8x1xf32, #tpu.memory_space<vmem>>, vector<4x8x1xf32>
      tpu.vector_store %arg9[%c0_136, %c0_137, %c0_138], %164 {strides = array<i32>} : memref<4x8x1xf32, #tpu.memory_space<vmem>>, vector<4x8x1xf32>,
      %cst_139 = arith.constant 0.000000e+00 : f32
      %166 = vector.broadcast %cst_139 : f32 to vector<4x8x8xf32>
      %c0_140 = arith.constant 0 : index
      %c0_141 = arith.constant 0 : index
      %c0_142 = arith.constant 0 : index
      %167 = vector.load %arg10[%c0_140, %c0_141, %c0_142] : memref<4x8x8xf32, #tpu.memory_space<vmem>>, vector<4x8x8xf32>
      tpu.vector_store %arg10[%c0_140, %c0_141, %c0_142], %166 {strides = array<i32>} : memref<4x8x8xf32, #tpu.memory_space<vmem>>, vector<4x8x8xf32>,
    } else {
    }
    %c0 = arith.constant 0 : index
    %c0_1 = arith.constant 0 : index
    %c0_2 = arith.constant 0 : index
    %c0_3 = arith.constant 0 : index
    %3 = vector.load %arg4[%c0, %c0_1, %c0_2, %c0_3] : memref<1x1x8x32xbf16, #tpu.memory_space<vmem>>, vector<1x1x8x8xbf16>
    %4 = vector.shape_cast %3 : vector<1x1x8x8xbf16> to vector<8x8xbf16>
    %c0_4 = arith.constant 0 : index
    %c0_5 = arith.constant 0 : index
    %c0_6 = arith.constant 0 : index
    %c0_7 = arith.constant 0 : index
    %5 = vector.load %arg5[%c0_4, %c0_5, %c0_6, %c0_7] : memref<1x1x8x32xbf16, #tpu.memory_space<vmem>>, vector<1x1x8x8xbf16>
    %6 = vector.shape_cast %5 : vector<1x1x8x8xbf16> to vector<8x8xbf16>
    %c0_8 = arith.constant 0 : index
    %c0_9 = arith.constant 0 : index
    %c0_10 = arith.constant 0 : index
    %c0_11 = arith.constant 0 : index
    %7 = vector.load %arg6[%c0_8, %c0_9, %c0_10, %c0_11] : memref<1x1x8x32xbf16, #tpu.memory_space<vmem>>, vector<1x1x8x8xbf16>
    %8 = vector.shape_cast %7 : vector<1x1x8x8xbf16> to vector<8x8xbf16>
    %cst = arith.constant dense<0.000000e+00> : vector<8x8xf32>
    %9 = tpu.matmul %4, %6, %cst {dimension_numbers = #tpu.dot_dimension_numbers<[1], [1], [0], [0], [0, 0, 1, 0], [], []>} : vector<8x8xbf16>, vector<8x8xbf16>, vector<8x8xf32> -> vector<8x8xf32>
    %c0_12 = arith.constant 0 : index
    %c0_13 = arith.constant 0 : index
    %c0_14 = arith.constant 0 : index
    %10 = vector.load %arg8[%c0_12, %c0_13, %c0_14] : memref<4x8x1xf32, #tpu.memory_space<vmem>>, vector<1x8x1xf32>
    %11 = vector.shape_cast %10 : vector<1x8x1xf32> to vector<8x1xf32>
    %cst_15 = arith.constant dense<0xFF800000> : vector<8xf32>
    %12 = vector.multi_reduction <maximumf>, %9, %cst_15 [1] : vector<8x8xf32> to vector<8xf32>
    %13 = vector.shape_cast %12 : vector<8xf32> to vector<8x1xf32>
    %14 = arith.maximumf %11, %13 : vector<8x1xf32>
    %15 = arith.subf %11, %14 : vector<8x1xf32>
    %16 = math.exp %15 : vector<8x1xf32>
    %17 = vector.broadcast %14 : vector<8x1xf32> to vector<8x8xf32>
    %18 = arith.subf %9, %17 : vector<8x8xf32>
    %19 = math.exp %18 : vector<8x8xf32>
    %c0_16 = arith.constant 0 : index
    %c0_17 = arith.constant 0 : index
    %c0_18 = arith.constant 0 : index
    %20 = vector.load %arg9[%c0_16, %c0_17, %c0_18] : memref<4x8x1xf32, #tpu.memory_space<vmem>>, vector<1x8x1xf32>
    %21 = vector.shape_cast %20 : vector<1x8x1xf32> to vector<8x1xf32>
    %22 = arith.mulf %16, %21 : vector<8x1xf32>
    %cst_19 = arith.constant dense<0.000000e+00> : vector<8xf32>
    %23 = vector.multi_reduction <add>, %19, %cst_19 [1] : vector<8x8xf32> to vector<8xf32>
    %24 = vector.shape_cast %23 : vector<8xf32> to vector<8x1xf32>
    %25 = arith.addf %22, %24 : vector<8x1xf32>
    %c0_20 = arith.constant 0 : index
    %c0_21 = arith.constant 0 : index
    %c0_22 = arith.constant 0 : index
    %26 = vector.load %arg9[%c0_20, %c0_21, %c0_22] : memref<4x8x1xf32, #tpu.memory_space<vmem>>, vector<1x8x1xf32>
    %27 = vector.shape_cast %26 : vector<1x8x1xf32> to vector<8x1xf32>
    %28 = vector.shape_cast %25 : vector<8x1xf32> to vector<1x8x1xf32>
    tpu.vector_store %arg9[%c0_20, %c0_21, %c0_22], %28 {strides = array<i32>} : memref<4x8x1xf32, #tpu.memory_space<vmem>>, vector<1x8x1xf32>,
    %c0_23 = arith.constant 0 : index
    %c0_24 = arith.constant 0 : index
    %c0_25 = arith.constant 0 : index
    %29 = vector.load %arg10[%c0_23, %c0_24, %c0_25] : memref<4x8x8xf32, #tpu.memory_space<vmem>>, vector<1x8x8xf32>
    %30 = vector.shape_cast %29 : vector<1x8x8xf32> to vector<8x8xf32>
    %31 = vector.broadcast %16 : vector<8x1xf32> to vector<8x8xf32>
    %32 = arith.mulf %31, %30 : vector<8x8xf32>
    %33 = arith.truncf %19 : vector<8x8xf32> to vector<8x8xbf16>
    %cst_26 = arith.constant dense<0.000000e+00> : vector<8x8xf32>
    %34 = tpu.matmul %33, %8, %cst_26 {dimension_numbers = #tpu.dot_dimension_numbers<[1], [0], [0], [1], [0, 0, 1, 1], [], []>} : vector<8x8xbf16>, vector<8x8xbf16>, vector<8x8xf32> -> vector<8x8xf32>
    %35 = arith.addf %32, %34 : vector<8x8xf32>
    %c0_27 = arith.constant 0 : index
    %c0_28 = arith.constant 0 : index
    %c0_29 = arith.constant 0 : index
    %36 = vector.load %arg10[%c0_27, %c0_28, %c0_29] : memref<4x8x8xf32, #tpu.memory_space<vmem>>, vector<1x8x8xf32>
    %37 = vector.shape_cast %36 : vector<1x8x8xf32> to vector<8x8xf32>
    %38 = vector.shape_cast %35 : vector<8x8xf32> to vector<1x8x8xf32>
    tpu.vector_store %arg10[%c0_27, %c0_28, %c0_29], %38 {strides = array<i32>} : memref<4x8x8xf32, #tpu.memory_space<vmem>>, vector<1x8x8xf32>,
    %c0_30 = arith.constant 0 : index
    %c0_31 = arith.constant 0 : index
    %c0_32 = arith.constant 0 : index
    %39 = vector.load %arg8[%c0_30, %c0_31, %c0_32] : memref<4x8x1xf32, #tpu.memory_space<vmem>>, vector<1x8x1xf32>
    %40 = vector.shape_cast %39 : vector<1x8x1xf32> to vector<8x1xf32>
    %41 = vector.shape_cast %14 : vector<8x1xf32> to vector<1x8x1xf32>
    tpu.vector_store %arg8[%c0_30, %c0_31, %c0_32], %41 {strides = array<i32>} : memref<4x8x1xf32, #tpu.memory_space<vmem>>, vector<1x8x1xf32>,
    %c0_33 = arith.constant 0 : index
    %c0_34 = arith.constant 0 : index
    %c0_35 = arith.constant 0 : index
    %c8 = arith.constant 8 : index
    %42 = vector.load %arg4[%c0_33, %c0_34, %c0_35, %c8] : memref<1x1x8x32xbf16, #tpu.memory_space<vmem>>, vector<1x1x8x8xbf16>
    %43 = vector.shape_cast %42 : vector<1x1x8x8xbf16> to vector<8x8xbf16>
    %c0_36 = arith.constant 0 : index
    %c0_37 = arith.constant 0 : index
    %c0_38 = arith.constant 0 : index
    %c8_39 = arith.constant 8 : index
    %44 = vector.load %arg5[%c0_36, %c0_37, %c0_38, %c8_39] : memref<1x1x8x32xbf16, #tpu.memory_space<vmem>>, vector<1x1x8x8xbf16>
    %45 = vector.shape_cast %44 : vector<1x1x8x8xbf16> to vector<8x8xbf16>
    %c0_40 = arith.constant 0 : index
    %c0_41 = arith.constant 0 : index
    %c0_42 = arith.constant 0 : index
    %c8_43 = arith.constant 8 : index
    %46 = vector.load %arg6[%c0_40, %c0_41, %c0_42, %c8_43] : memref<1x1x8x32xbf16, #tpu.memory_space<vmem>>, vector<1x1x8x8xbf16>
    %47 = vector.shape_cast %46 : vector<1x1x8x8xbf16> to vector<8x8xbf16>
    %cst_44 = arith.constant dense<0.000000e+00> : vector<8x8xf32>
    %48 = tpu.matmul %43, %45, %cst_44 {dimension_numbers = #tpu.dot_dimension_numbers<[1], [1], [0], [0], [0, 0, 1, 0], [], []>} : vector<8x8xbf16>, vector<8x8xbf16>, vector<8x8xf32> -> vector<8x8xf32>
    %c1 = arith.constant 1 : index
    %c0_45 = arith.constant 0 : index
    %c0_46 = arith.constant 0 : index
    %49 = vector.load %arg8[%c1, %c0_45, %c0_46] : memref<4x8x1xf32, #tpu.memory_space<vmem>>, vector<1x8x1xf32>
    %50 = vector.shape_cast %49 : vector<1x8x1xf32> to vector<8x1xf32>
    %cst_47 = arith.constant dense<0xFF800000> : vector<8xf32>
    %51 = vector.multi_reduction <maximumf>, %48, %cst_47 [1] : vector<8x8xf32> to vector<8xf32>
    %52 = vector.shape_cast %51 : vector<8xf32> to vector<8x1xf32>
    %53 = arith.maximumf %50, %52 : vector<8x1xf32>
    %54 = arith.subf %50, %53 : vector<8x1xf32>
    %55 = math.exp %54 : vector<8x1xf32>
    %56 = vector.broadcast %53 : vector<8x1xf32> to vector<8x8xf32>
    %57 = arith.subf %48, %56 : vector<8x8xf32>
    %58 = math.exp %57 : vector<8x8xf32>
    %c1_48 = arith.constant 1 : index
    %c0_49 = arith.constant 0 : index
    %c0_50 = arith.constant 0 : index
    %59 = vector.load %arg9[%c1_48, %c0_49, %c0_50] : memref<4x8x1xf32, #tpu.memory_space<vmem>>, vector<1x8x1xf32>
    %60 = vector.shape_cast %59 : vector<1x8x1xf32> to vector<8x1xf32>
    %61 = arith.mulf %55, %60 : vector<8x1xf32>
    %cst_51 = arith.constant dense<0.000000e+00> : vector<8xf32>
    %62 = vector.multi_reduction <add>, %58, %cst_51 [1] : vector<8x8xf32> to vector<8xf32>
    %63 = vector.shape_cast %62 : vector<8xf32> to vector<8x1xf32>
    %64 = arith.addf %61, %63 : vector<8x1xf32>
    %c1_52 = arith.constant 1 : index
    %c0_53 = arith.constant 0 : index
    %c0_54 = arith.constant 0 : index
    %65 = vector.load %arg9[%c1_52, %c0_53, %c0_54] : memref<4x8x1xf32, #tpu.memory_space<vmem>>, vector<1x8x1xf32>
    %66 = vector.shape_cast %65 : vector<1x8x1xf32> to vector<8x1xf32>
    %67 = vector.shape_cast %64 : vector<8x1xf32> to vector<1x8x1xf32>
    tpu.vector_store %arg9[%c1_52, %c0_53, %c0_54], %67 {strides = array<i32>} : memref<4x8x1xf32, #tpu.memory_space<vmem>>, vector<1x8x1xf32>,
    %c1_55 = arith.constant 1 : index
    %c0_56 = arith.constant 0 : index
    %c0_57 = arith.constant 0 : index
    %68 = vector.load %arg10[%c1_55, %c0_56, %c0_57] : memref<4x8x8xf32, #tpu.memory_space<vmem>>, vector<1x8x8xf32>
    %69 = vector.shape_cast %68 : vector<1x8x8xf32> to vector<8x8xf32>
    %70 = vector.broadcast %55 : vector<8x1xf32> to vector<8x8xf32>
    %71 = arith.mulf %70, %69 : vector<8x8xf32>
    %72 = arith.truncf %58 : vector<8x8xf32> to vector<8x8xbf16>
    %cst_58 = arith.constant dense<0.000000e+00> : vector<8x8xf32>
    %73 = tpu.matmul %72, %47, %cst_58 {dimension_numbers = #tpu.dot_dimension_numbers<[1], [0], [0], [1], [0, 0, 1, 1], [], []>} : vector<8x8xbf16>, vector<8x8xbf16>, vector<8x8xf32> -> vector<8x8xf32>
    %74 = arith.addf %71, %73 : vector<8x8xf32>
    %c1_59 = arith.constant 1 : index
    %c0_60 = arith.constant 0 : index
    %c0_61 = arith.constant 0 : index
    %75 = vector.load %arg10[%c1_59, %c0_60, %c0_61] : memref<4x8x8xf32, #tpu.memory_space<vmem>>, vector<1x8x8xf32>
    %76 = vector.shape_cast %75 : vector<1x8x8xf32> to vector<8x8xf32>
    %77 = vector.shape_cast %74 : vector<8x8xf32> to vector<1x8x8xf32>
    tpu.vector_store %arg10[%c1_59, %c0_60, %c0_61], %77 {strides = array<i32>} : memref<4x8x8xf32, #tpu.memory_space<vmem>>, vector<1x8x8xf32>,
    %c1_62 = arith.constant 1 : index
    %c0_63 = arith.constant 0 : index
    %c0_64 = arith.constant 0 : index
    %78 = vector.load %arg8[%c1_62, %c0_63, %c0_64] : memref<4x8x1xf32, #tpu.memory_space<vmem>>, vector<1x8x1xf32>
    %79 = vector.shape_cast %78 : vector<1x8x1xf32> to vector<8x1xf32>
    %80 = vector.shape_cast %53 : vector<8x1xf32> to vector<1x8x1xf32>
    tpu.vector_store %arg8[%c1_62, %c0_63, %c0_64], %80 {strides = array<i32>} : memref<4x8x1xf32, #tpu.memory_space<vmem>>, vector<1x8x1xf32>,
    %c0_65 = arith.constant 0 : index
    %c0_66 = arith.constant 0 : index
    %c0_67 = arith.constant 0 : index
    %c16 = arith.constant 16 : index
    %81 = vector.load %arg4[%c0_65, %c0_66, %c0_67, %c16] : memref<1x1x8x32xbf16, #tpu.memory_space<vmem>>, vector<1x1x8x8xbf16>
    %82 = vector.shape_cast %81 : vector<1x1x8x8xbf16> to vector<8x8xbf16>
    %c0_68 = arith.constant 0 : index
    %c0_69 = arith.constant 0 : index
    %c0_70 = arith.constant 0 : index
    %c16_71 = arith.constant 16 : index
    %83 = vector.load %arg5[%c0_68, %c0_69, %c0_70, %c16_71] : memref<1x1x8x32xbf16, #tpu.memory_space<vmem>>, vector<1x1x8x8xbf16>
    %84 = vector.shape_cast %83 : vector<1x1x8x8xbf16> to vector<8x8xbf16>
    %c0_72 = arith.constant 0 : index
    %c0_73 = arith.constant 0 : index
    %c0_74 = arith.constant 0 : index
    %c16_75 = arith.constant 16 : index
    %85 = vector.load %arg6[%c0_72, %c0_73, %c0_74, %c16_75] : memref<1x1x8x32xbf16, #tpu.memory_space<vmem>>, vector<1x1x8x8xbf16>
    %86 = vector.shape_cast %85 : vector<1x1x8x8xbf16> to vector<8x8xbf16>
    %cst_76 = arith.constant dense<0.000000e+00> : vector<8x8xf32>
    %87 = tpu.matmul %82, %84, %cst_76 {dimension_numbers = #tpu.dot_dimension_numbers<[1], [1], [0], [0], [0, 0, 1, 0], [], []>} : vector<8x8xbf16>, vector<8x8xbf16>, vector<8x8xf32> -> vector<8x8xf32>
    %c2 = arith.constant 2 : index
    %c0_77 = arith.constant 0 : index
    %c0_78 = arith.constant 0 : index
    %88 = vector.load %arg8[%c2, %c0_77, %c0_78] : memref<4x8x1xf32, #tpu.memory_space<vmem>>, vector<1x8x1xf32>
    %89 = vector.shape_cast %88 : vector<1x8x1xf32> to vector<8x1xf32>
    %cst_79 = arith.constant dense<0xFF800000> : vector<8xf32>
    %90 = vector.multi_reduction <maximumf>, %87, %cst_79 [1] : vector<8x8xf32> to vector<8xf32>
    %91 = vector.shape_cast %90 : vector<8xf32> to vector<8x1xf32>
    %92 = arith.maximumf %89, %91 : vector<8x1xf32>
    %93 = arith.subf %89, %92 : vector<8x1xf32>
    %94 = math.exp %93 : vector<8x1xf32>
    %95 = vector.broadcast %92 : vector<8x1xf32> to vector<8x8xf32>
    %96 = arith.subf %87, %95 : vector<8x8xf32>
    %97 = math.exp %96 : vector<8x8xf32>
    %c2_80 = arith.constant 2 : index
    %c0_81 = arith.constant 0 : index
    %c0_82 = arith.constant 0 : index
    %98 = vector.load %arg9[%c2_80, %c0_81, %c0_82] : memref<4x8x1xf32, #tpu.memory_space<vmem>>, vector<1x8x1xf32>
    %99 = vector.shape_cast %98 : vector<1x8x1xf32> to vector<8x1xf32>
    %100 = arith.mulf %94, %99 : vector<8x1xf32>
    %cst_83 = arith.constant dense<0.000000e+00> : vector<8xf32>
    %101 = vector.multi_reduction <add>, %97, %cst_83 [1] : vector<8x8xf32> to vector<8xf32>
    %102 = vector.shape_cast %101 : vector<8xf32> to vector<8x1xf32>
    %103 = arith.addf %100, %102 : vector<8x1xf32>
    %c2_84 = arith.constant 2 : index
    %c0_85 = arith.constant 0 : index
    %c0_86 = arith.constant 0 : index
    %104 = vector.load %arg9[%c2_84, %c0_85, %c0_86] : memref<4x8x1xf32, #tpu.memory_space<vmem>>, vector<1x8x1xf32>
    %105 = vector.shape_cast %104 : vector<1x8x1xf32> to vector<8x1xf32>
    %106 = vector.shape_cast %103 : vector<8x1xf32> to vector<1x8x1xf32>
    tpu.vector_store %arg9[%c2_84, %c0_85, %c0_86], %106 {strides = array<i32>} : memref<4x8x1xf32, #tpu.memory_space<vmem>>, vector<1x8x1xf32>,
    %c2_87 = arith.constant 2 : index
    %c0_88 = arith.constant 0 : index
    %c0_89 = arith.constant 0 : index
    %107 = vector.load %arg10[%c2_87, %c0_88, %c0_89] : memref<4x8x8xf32, #tpu.memory_space<vmem>>, vector<1x8x8xf32>
    %108 = vector.shape_cast %107 : vector<1x8x8xf32> to vector<8x8xf32>
    %109 = vector.broadcast %94 : vector<8x1xf32> to vector<8x8xf32>
    %110 = arith.mulf %109, %108 : vector<8x8xf32>
    %111 = arith.truncf %97 : vector<8x8xf32> to vector<8x8xbf16>
    %cst_90 = arith.constant dense<0.000000e+00> : vector<8x8xf32>
    %112 = tpu.matmul %111, %86, %cst_90 {dimension_numbers = #tpu.dot_dimension_numbers<[1], [0], [0], [1], [0, 0, 1, 1], [], []>} : vector<8x8xbf16>, vector<8x8xbf16>, vector<8x8xf32> -> vector<8x8xf32>
    %113 = arith.addf %110, %112 : vector<8x8xf32>
    %c2_91 = arith.constant 2 : index
    %c0_92 = arith.constant 0 : index
    %c0_93 = arith.constant 0 : index
    %114 = vector.load %arg10[%c2_91, %c0_92, %c0_93] : memref<4x8x8xf32, #tpu.memory_space<vmem>>, vector<1x8x8xf32>
    %115 = vector.shape_cast %114 : vector<1x8x8xf32> to vector<8x8xf32>
    %116 = vector.shape_cast %113 : vector<8x8xf32> to vector<1x8x8xf32>
    tpu.vector_store %arg10[%c2_91, %c0_92, %c0_93], %116 {strides = array<i32>} : memref<4x8x8xf32, #tpu.memory_space<vmem>>, vector<1x8x8xf32>,
    %c2_94 = arith.constant 2 : index
    %c0_95 = arith.constant 0 : index
    %c0_96 = arith.constant 0 : index
    %117 = vector.load %arg8[%c2_94, %c0_95, %c0_96] : memref<4x8x1xf32, #tpu.memory_space<vmem>>, vector<1x8x1xf32>
    %118 = vector.shape_cast %117 : vector<1x8x1xf32> to vector<8x1xf32>
    %119 = vector.shape_cast %92 : vector<8x1xf32> to vector<1x8x1xf32>
    tpu.vector_store %arg8[%c2_94, %c0_95, %c0_96], %119 {strides = array<i32>} : memref<4x8x1xf32, #tpu.memory_space<vmem>>, vector<1x8x1xf32>,
    %c0_97 = arith.constant 0 : index
    %c0_98 = arith.constant 0 : index
    %c0_99 = arith.constant 0 : index
    %c24 = arith.constant 24 : index
    %120 = vector.load %arg4[%c0_97, %c0_98, %c0_99, %c24] : memref<1x1x8x32xbf16, #tpu.memory_space<vmem>>, vector<1x1x8x8xbf16>
    %121 = vector.shape_cast %120 : vector<1x1x8x8xbf16> to vector<8x8xbf16>
    %c0_100 = arith.constant 0 : index
    %c0_101 = arith.constant 0 : index
    %c0_102 = arith.constant 0 : index
    %c24_103 = arith.constant 24 : index
    %122 = vector.load %arg5[%c0_100, %c0_101, %c0_102, %c24_103] : memref<1x1x8x32xbf16, #tpu.memory_space<vmem>>, vector<1x1x8x8xbf16>
    %123 = vector.shape_cast %122 : vector<1x1x8x8xbf16> to vector<8x8xbf16>
    %c0_104 = arith.constant 0 : index
    %c0_105 = arith.constant 0 : index
    %c0_106 = arith.constant 0 : index
    %c24_107 = arith.constant 24 : index
    %124 = vector.load %arg6[%c0_104, %c0_105, %c0_106, %c24_107] : memref<1x1x8x32xbf16, #tpu.memory_space<vmem>>, vector<1x1x8x8xbf16>
    %125 = vector.shape_cast %124 : vector<1x1x8x8xbf16> to vector<8x8xbf16>
    %cst_108 = arith.constant dense<0.000000e+00> : vector<8x8xf32>
    %126 = tpu.matmul %121, %123, %cst_108 {dimension_numbers = #tpu.dot_dimension_numbers<[1], [1], [0], [0], [0, 0, 1, 0], [], []>} : vector<8x8xbf16>, vector<8x8xbf16>, vector<8x8xf32> -> vector<8x8xf32>
    %c3 = arith.constant 3 : index
    %c0_109 = arith.constant 0 : index
    %c0_110 = arith.constant 0 : index
    %127 = vector.load %arg8[%c3, %c0_109, %c0_110] : memref<4x8x1xf32, #tpu.memory_space<vmem>>, vector<1x8x1xf32>
    %128 = vector.shape_cast %127 : vector<1x8x1xf32> to vector<8x1xf32>
    %cst_111 = arith.constant dense<0xFF800000> : vector<8xf32>
    %129 = vector.multi_reduction <maximumf>, %126, %cst_111 [1] : vector<8x8xf32> to vector<8xf32>
    %130 = vector.shape_cast %129 : vector<8xf32> to vector<8x1xf32>
    %131 = arith.maximumf %128, %130 : vector<8x1xf32>
    %132 = arith.subf %128, %131 : vector<8x1xf32>
    %133 = math.exp %132 : vector<8x1xf32>
    %134 = vector.broadcast %131 : vector<8x1xf32> to vector<8x8xf32>
    %135 = arith.subf %126, %134 : vector<8x8xf32>
    %136 = math.exp %135 : vector<8x8xf32>
    %c3_112 = arith.constant 3 : index
    %c0_113 = arith.constant 0 : index
    %c0_114 = arith.constant 0 : index
    %137 = vector.load %arg9[%c3_112, %c0_113, %c0_114] : memref<4x8x1xf32, #tpu.memory_space<vmem>>, vector<1x8x1xf32>
    %138 = vector.shape_cast %137 : vector<1x8x1xf32> to vector<8x1xf32>
    %139 = arith.mulf %133, %138 : vector<8x1xf32>
    %cst_115 = arith.constant dense<0.000000e+00> : vector<8xf32>
    %140 = vector.multi_reduction <add>, %136, %cst_115 [1] : vector<8x8xf32> to vector<8xf32>
    %141 = vector.shape_cast %140 : vector<8xf32> to vector<8x1xf32>
    %142 = arith.addf %139, %141 : vector<8x1xf32>
    %c3_116 = arith.constant 3 : index
    %c0_117 = arith.constant 0 : index
    %c0_118 = arith.constant 0 : index
    %143 = vector.load %arg9[%c3_116, %c0_117, %c0_118] : memref<4x8x1xf32, #tpu.memory_space<vmem>>, vector<1x8x1xf32>
    %144 = vector.shape_cast %143 : vector<1x8x1xf32> to vector<8x1xf32>
    %145 = vector.shape_cast %142 : vector<8x1xf32> to vector<1x8x1xf32>
    tpu.vector_store %arg9[%c3_116, %c0_117, %c0_118], %145 {strides = array<i32>} : memref<4x8x1xf32, #tpu.memory_space<vmem>>, vector<1x8x1xf32>,
    %c3_119 = arith.constant 3 : index
    %c0_120 = arith.constant 0 : index
    %c0_121 = arith.constant 0 : index
    %146 = vector.load %arg10[%c3_119, %c0_120, %c0_121] : memref<4x8x8xf32, #tpu.memory_space<vmem>>, vector<1x8x8xf32>
    %147 = vector.shape_cast %146 : vector<1x8x8xf32> to vector<8x8xf32>
    %148 = vector.broadcast %133 : vector<8x1xf32> to vector<8x8xf32>
    %149 = arith.mulf %148, %147 : vector<8x8xf32>
    %150 = arith.truncf %136 : vector<8x8xf32> to vector<8x8xbf16>
    %cst_122 = arith.constant dense<0.000000e+00> : vector<8x8xf32>
    %151 = tpu.matmul %150, %125, %cst_122 {dimension_numbers = #tpu.dot_dimension_numbers<[1], [0], [0], [1], [0, 0, 1, 1], [], []>} : vector<8x8xbf16>, vector<8x8xbf16>, vector<8x8xf32> -> vector<8x8xf32>
    %152 = arith.addf %149, %151 : vector<8x8xf32>
    %c3_123 = arith.constant 3 : index
    %c0_124 = arith.constant 0 : index
    %c0_125 = arith.constant 0 : index
    %153 = vector.load %arg10[%c3_123, %c0_124, %c0_125] : memref<4x8x8xf32, #tpu.memory_space<vmem>>, vector<1x8x8xf32>
    %154 = vector.shape_cast %153 : vector<1x8x8xf32> to vector<8x8xf32>
    %155 = vector.shape_cast %152 : vector<8x8xf32> to vector<1x8x8xf32>
    tpu.vector_store %arg10[%c3_123, %c0_124, %c0_125], %155 {strides = array<i32>} : memref<4x8x8xf32, #tpu.memory_space<vmem>>, vector<1x8x8xf32>,
    %c3_126 = arith.constant 3 : index
    %c0_127 = arith.constant 0 : index
    %c0_128 = arith.constant 0 : index
    %156 = vector.load %arg8[%c3_126, %c0_127, %c0_128] : memref<4x8x1xf32, #tpu.memory_space<vmem>>, vector<1x8x1xf32>
    %157 = vector.shape_cast %156 : vector<1x8x1xf32> to vector<8x1xf32>
    %158 = vector.shape_cast %131 : vector<8x1xf32> to vector<1x8x1xf32>
    tpu.vector_store %arg8[%c3_126, %c0_127, %c0_128], %158 {strides = array<i32>} : memref<4x8x1xf32, #tpu.memory_space<vmem>>, vector<1x8x1xf32>,
    %c0_i32_129 = arith.constant 0 : i32
    %159 = arith.cmpi eq, %arg3, %c0_i32_129 : i32
    %160 = arith.extui %159 : i1 to i32
    %c0_i32_130 = arith.constant 0 : i32
    %161 = arith.cmpi ne, %160, %c0_i32_130 : i32
    scf.if %161 {
      %c0_131 = arith.constant 0 : index
      %c0_132 = arith.constant 0 : index
      %c0_133 = arith.constant 0 : index
      %162 = vector.load %arg10[%c0_131, %c0_132, %c0_133] : memref<4x8x8xf32, #tpu.memory_space<vmem>>, vector<1x8x8xf32>
      %163 = vector.shape_cast %162 : vector<1x8x8xf32> to vector<8x8xf32>
      %c0_134 = arith.constant 0 : index
      %c0_135 = arith.constant 0 : index
      %c0_136 = arith.constant 0 : index
      %164 = vector.load %arg9[%c0_134, %c0_135, %c0_136] : memref<4x8x1xf32, #tpu.memory_space<vmem>>, vector<1x8x1xf32>
      %165 = vector.shape_cast %164 : vector<1x8x1xf32> to vector<8x1xf32>
      %166 = tpu.reciprocal %165 {approx = true} : vector<8x1xf32> -> vector<8x1xf32>
      %167 = vector.broadcast %166 : vector<8x1xf32> to vector<8x8xf32>
      %168 = arith.mulf %163, %167 : vector<8x8xf32>
      %c1_137 = arith.constant 1 : index
      %c0_138 = arith.constant 0 : index
      %c0_139 = arith.constant 0 : index
      %169 = vector.load %arg10[%c1_137, %c0_138, %c0_139] : memref<4x8x8xf32, #tpu.memory_space<vmem>>, vector<1x8x8xf32>
      %170 = vector.shape_cast %169 : vector<1x8x8xf32> to vector<8x8xf32>
      %c1_140 = arith.constant 1 : index
      %c0_141 = arith.constant 0 : index
      %c0_142 = arith.constant 0 : index
      %171 = vector.load %arg9[%c1_140, %c0_141, %c0_142] : memref<4x8x1xf32, #tpu.memory_space<vmem>>, vector<1x8x1xf32>
      %172 = vector.shape_cast %171 : vector<1x8x1xf32> to vector<8x1xf32>
      %173 = tpu.reciprocal %172 {approx = true} : vector<8x1xf32> -> vector<8x1xf32>
      %174 = vector.broadcast %173 : vector<8x1xf32> to vector<8x8xf32>
      %175 = arith.mulf %170, %174 : vector<8x8xf32>
      %c2_143 = arith.constant 2 : index
      %c0_144 = arith.constant 0 : index
      %c0_145 = arith.constant 0 : index
      %176 = vector.load %arg10[%c2_143, %c0_144, %c0_145] : memref<4x8x8xf32, #tpu.memory_space<vmem>>, vector<1x8x8xf32>
      %177 = vector.shape_cast %176 : vector<1x8x8xf32> to vector<8x8xf32>
      %c2_146 = arith.constant 2 : index
      %c0_147 = arith.constant 0 : index
      %c0_148 = arith.constant 0 : index
      %178 = vector.load %arg9[%c2_146, %c0_147, %c0_148] : memref<4x8x1xf32, #tpu.memory_space<vmem>>, vector<1x8x1xf32>
      %179 = vector.shape_cast %178 : vector<1x8x1xf32> to vector<8x1xf32>
      %180 = tpu.reciprocal %179 {approx = true} : vector<8x1xf32> -> vector<8x1xf32>
      %181 = vector.broadcast %180 : vector<8x1xf32> to vector<8x8xf32>
      %182 = arith.mulf %177, %181 : vector<8x8xf32>
      %c3_149 = arith.constant 3 : index
      %c0_150 = arith.constant 0 : index
      %c0_151 = arith.constant 0 : index
      %183 = vector.load %arg10[%c3_149, %c0_150, %c0_151] : memref<4x8x8xf32, #tpu.memory_space<vmem>>, vector<1x8x8xf32>
      %184 = vector.shape_cast %183 : vector<1x8x8xf32> to vector<8x8xf32>
      %c3_152 = arith.constant 3 : index
      %c0_153 = arith.constant 0 : index
      %c0_154 = arith.constant 0 : index
      %185 = vector.load %arg9[%c3_152, %c0_153, %c0_154] : memref<4x8x1xf32, #tpu.memory_space<vmem>>, vector<1x8x1xf32>
      %186 = vector.shape_cast %185 : vector<1x8x1xf32> to vector<8x1xf32>
      %187 = tpu.reciprocal %186 {approx = true} : vector<8x1xf32> -> vector<8x1xf32>
      %188 = vector.broadcast %187 : vector<8x1xf32> to vector<8x8xf32>
      %189 = arith.mulf %184, %188 : vector<8x8xf32>
      %190 = tpu.concatenate %168, %175, %182, %189 in 1 : vector<8x8xf32>, vector<8x8xf32>, vector<8x8xf32>, vector<8x8xf32> -> vector<8x32xf32>
      %191 = arith.truncf %190 : vector<8x32xf32> to vector<8x32xbf16>
      %c0_155 = arith.constant 0 : index
      %c0_156 = arith.constant 0 : index
      %c0_157 = arith.constant 0 : index
      %192 = vector.load %arg7[%c0_155, %c0_156, %c0_157] : memref<1x8x32xbf16, #tpu.memory_space<vmem>>, vector<1x8x32xbf16>
      %193 = vector.shape_cast %192 : vector<1x8x32xbf16> to vector<8x32xbf16>
      %194 = vector.shape_cast %191 : vector<8x32xbf16> to vector<1x8x32xbf16>
      tpu.vector_store %arg7[%c0_155, %c0_156, %c0_157], %194 {strides = array<i32>} : memref<1x8x32xbf16, #tpu.memory_space<vmem>>, vector<1x8x32xbf16>,
    } else {
    }
    return
  }
  func.func @transform_0(%arg0: i32, %arg1: i32, %arg2: i32, %arg3: i32) -> (i32, i32, i32, i32) {
    %c0_i32 = arith.constant 0 : i32
    %c0_i32_0 = arith.constant 0 : i32
    return %c0_i32, %arg0, %arg2, %arg1 : i32, i32, i32, i32
  }
  func.func @transform_1(%arg0: i32, %arg1: i32, %arg2: i32, %arg3: i32) -> (i32, i32, i32, i32) {
    %c1_i32 = arith.constant 1 : i32
    %c0_i32 = arith.constant 0 : i32
    return %c1_i32, %arg0, %arg3, %arg1 : i32, i32, i32, i32
  }
  func.func @transform_2(%arg0: i32, %arg1: i32, %arg2: i32, %arg3: i32) -> (i32, i32, i32, i32) {
    %c2_i32 = arith.constant 2 : i32
    %c0_i32 = arith.constant 0 : i32
    return %c2_i32, %arg0, %arg3, %arg1 : i32, i32, i32, i32
  }
  func.func @transform_3(%arg0: i32, %arg1: i32, %arg2: i32, %arg3: i32) -> (i32, i32, i32) {
    %c0_i32 = arith.constant 0 : i32
    return %arg0, %arg2, %arg1 : i32, i32, i32
  }
}

module attributes {stable_mosaic.version = 11 : i64} {
  func.func @_gemm_fullk_kernel(%arg0: i32, %arg1: i32, %arg2: i32, %arg3: memref<16x32xbf16, #tpu.memory_space<vmem>>, %arg4: memref<1x32x32xbf16, #tpu.memory_space<vmem>>, %arg5: memref<1x1x32xf32, #tpu.memory_space<vmem>>, %arg6: memref<1x32xf32, #tpu.memory_space<vmem>>, %arg7: memref<1x32xf32, #tpu.memory_space<vmem>>, %arg8: memref<1x16x32xbf16, #tpu.memory_space<vmem>>) attributes {dimension_semantics = [#tpu.dimension_semantics<parallel>, #tpu.dimension_semantics<parallel>, #tpu.dimension_semantics<parallel>], iteration_bounds = array<i64: 3, 1, 1>, scalar_prefetch = 0 : i64, scratch_operands = 0 : i64, tpu.core_type = #tpu.core_type<tc>, window_params = [{transform_indices = @transform_0, window_bounds = array<i64: 16, 32>}, {transform_indices = @transform_1, window_bounds = array<i64: 1, 32, 32>}, {transform_indices = @transform_2, window_bounds = array<i64: 1, 1, 32>}, {pipeline_mode = #tpu.pipeline_mode<synchronous>, transform_indices = @transform_3, window_bounds = array<i64: 1, 32>}, {pipeline_mode = #tpu.pipeline_mode<synchronous>, transform_indices = @transform_4, window_bounds = array<i64: 1, 32>}, {transform_indices = @transform_5, window_bounds = array<i64: 1, 16, 32>}]} {
    %c0 = arith.constant 0 : index
    %c0_0 = arith.constant 0 : index
    %0 = vector.load %arg3[%c0, %c0_0] : memref<16x32xbf16, #tpu.memory_space<vmem>>, vector<16x32xbf16>
    %1 = arith.extf %0 : vector<16x32xbf16> to vector<16x32xf32>
    %cst = arith.constant dense<0.000000e+00> : vector<16xf32>
    %2 = vector.multi_reduction <add>, %1, %cst [1] : vector<16x32xf32> to vector<16xf32>
    %3 = vector.shape_cast %2 : vector<16xf32> to vector<16x1xf32>
    %cst_1 = arith.constant 3.200000e+01 : f32
    %4 = vector.broadcast %cst_1 : f32 to vector<16x1xf32>
    %5 = arith.divf %3, %4 : vector<16x1xf32>
    %6 = vector.broadcast %5 : vector<16x1xf32> to vector<16x32xf32>
    %7 = arith.subf %1, %6 : vector<16x32xf32>
    %8 = arith.mulf %7, %7 : vector<16x32xf32>
    %cst_2 = arith.constant dense<0.000000e+00> : vector<16xf32>
    %9 = vector.multi_reduction <add>, %8, %cst_2 [1] : vector<16x32xf32> to vector<16xf32>
    %10 = vector.shape_cast %9 : vector<16xf32> to vector<16x1xf32>
    %cst_3 = arith.constant 3.200000e+01 : f32
    %11 = vector.broadcast %cst_3 : f32 to vector<16x1xf32>
    %12 = arith.divf %10, %11 : vector<16x1xf32>
    %cst_4 = arith.constant 9.99999974E-6 : f32
    %13 = vector.broadcast %cst_4 : f32 to vector<16x1xf32>
    %14 = arith.addf %12, %13 : vector<16x1xf32>
    %15 = math.rsqrt %14 : vector<16x1xf32>
    %16 = vector.broadcast %15 : vector<16x1xf32> to vector<16x32xf32>
    %17 = arith.mulf %7, %16 : vector<16x32xf32>
    %c0_5 = arith.constant 0 : index
    %c0_6 = arith.constant 0 : index
    %18 = vector.load %arg6[%c0_5, %c0_6] : memref<1x32xf32, #tpu.memory_space<vmem>>, vector<1x32xf32>
    %19 = vector.broadcast %18 : vector<1x32xf32> to vector<16x32xf32>
    %20 = arith.mulf %17, %19 : vector<16x32xf32>
    %c0_7 = arith.constant 0 : index
    %c0_8 = arith.constant 0 : index
    %21 = vector.load %arg7[%c0_7, %c0_8] : memref<1x32xf32, #tpu.memory_space<vmem>>, vector<1x32xf32>
    %22 = vector.broadcast %21 : vector<1x32xf32> to vector<16x32xf32>
    %23 = arith.addf %20, %22 : vector<16x32xf32>
    %24 = arith.truncf %23 : vector<16x32xf32> to vector<16x32xbf16>
    %c0_9 = arith.constant 0 : index
    %c0_10 = arith.constant 0 : index
    %c0_11 = arith.constant 0 : index
    %25 = vector.load %arg4[%c0_9, %c0_10, %c0_11] : memref<1x32x32xbf16, #tpu.memory_space<vmem>>, vector<1x32x32xbf16>
    %26 = vector.shape_cast %25 : vector<1x32x32xbf16> to vector<32x32xbf16>
    %cst_12 = arith.constant dense<0.000000e+00> : vector<16x32xf32>
    %27 = tpu.matmul %24, %26, %cst_12 {dimension_numbers = #tpu.dot_dimension_numbers<[1], [0], [0], [1], [0, 0, 1, 1], [], []>} : vector<16x32xbf16>, vector<32x32xbf16>, vector<16x32xf32> -> vector<16x32xf32>
    %c0_13 = arith.constant 0 : index
    %c0_14 = arith.constant 0 : index
    %c0_15 = arith.constant 0 : index
    %28 = vector.load %arg5[%c0_13, %c0_14, %c0_15] : memref<1x1x32xf32, #tpu.memory_space<vmem>>, vector<1x1x32xf32>
    %29 = vector.shape_cast %28 : vector<1x1x32xf32> to vector<1x32xf32>
    %30 = vector.broadcast %29 : vector<1x32xf32> to vector<16x32xf32>
    %31 = arith.addf %27, %30 : vector<16x32xf32>
    %32 = arith.truncf %31 : vector<16x32xf32> to vector<16x32xbf16>
    %c0_16 = arith.constant 0 : index
    %c0_17 = arith.constant 0 : index
    %c0_18 = arith.constant 0 : index
    %33 = vector.load %arg8[%c0_16, %c0_17, %c0_18] : memref<1x16x32xbf16, #tpu.memory_space<vmem>>, vector<1x16x32xbf16>
    %34 = vector.shape_cast %33 : vector<1x16x32xbf16> to vector<16x32xbf16>
    %35 = vector.shape_cast %32 : vector<16x32xbf16> to vector<1x16x32xbf16>
    tpu.vector_store %arg8[%c0_16, %c0_17, %c0_18], %35 {strides = array<i32>} : memref<1x16x32xbf16, #tpu.memory_space<vmem>>, vector<1x16x32xbf16>,
    return
  }
  func.func @transform_0(%arg0: i32, %arg1: i32, %arg2: i32) -> (i32, i32) {
    %c0_i32 = arith.constant 0 : i32
    %c0_i32_0 = arith.constant 0 : i32
    return %arg1, %c0_i32 : i32, i32
  }
  func.func @transform_1(%arg0: i32, %arg1: i32, %arg2: i32) -> (i32, i32, i32) {
    %c0_i32 = arith.constant 0 : i32
    %c0_i32_0 = arith.constant 0 : i32
    return %arg0, %c0_i32, %arg2 : i32, i32, i32
  }
  func.func @transform_2(%arg0: i32, %arg1: i32, %arg2: i32) -> (i32, i32, i32) {
    %c0_i32 = arith.constant 0 : i32
    %c0_i32_0 = arith.constant 0 : i32
    return %arg0, %c0_i32, %arg2 : i32, i32, i32
  }
  func.func @transform_3(%arg0: i32, %arg1: i32, %arg2: i32) -> (i32, i32) {
    %c0_i32 = arith.constant 0 : i32
    %c0_i32_0 = arith.constant 0 : i32
    %c0_i32_1 = arith.constant 0 : i32
    return %c0_i32, %c0_i32_0 : i32, i32
  }
  func.func @transform_4(%arg0: i32, %arg1: i32, %arg2: i32) -> (i32, i32) {
    %c0_i32 = arith.constant 0 : i32
    %c0_i32_0 = arith.constant 0 : i32
    %c0_i32_1 = arith.constant 0 : i32
    return %c0_i32, %c0_i32_0 : i32, i32
  }
  func.func @transform_5(%arg0: i32, %arg1: i32, %arg2: i32) -> (i32, i32, i32) {
    %c0_i32 = arith.constant 0 : i32
    return %arg0, %arg1, %arg2 : i32, i32, i32
  }
}

module attributes {stable_mosaic.version = 11 : i64} {
  func.func @_gemm_fullk_kernel(%arg0: i32, %arg1: i32, %arg2: memref<16x32xbf16, #tpu.memory_space<vmem>>, %arg3: memref<32x32xbf16, #tpu.memory_space<vmem>>, %arg4: memref<1x32xf32, #tpu.memory_space<vmem>>, %arg5: memref<16x32xbf16, #tpu.memory_space<vmem>>, %arg6: memref<16x32xbf16, #tpu.memory_space<vmem>>) attributes {dimension_semantics = [#tpu.dimension_semantics<parallel>, #tpu.dimension_semantics<parallel>], iteration_bounds = array<i64: 1, 1>, scalar_prefetch = 0 : i64, scratch_operands = 0 : i64, tpu.core_type = #tpu.core_type<tc>, window_params = [{transform_indices = @transform_0, window_bounds = array<i64: 16, 32>}, {transform_indices = @transform_1, window_bounds = array<i64: 32, 32>}, {transform_indices = @transform_2, window_bounds = array<i64: 1, 32>}, {transform_indices = @transform_3, window_bounds = array<i64: 16, 32>}, {transform_indices = @transform_4, window_bounds = array<i64: 16, 32>}]} {
    %c0 = arith.constant 0 : index
    %c0_0 = arith.constant 0 : index
    %0 = vector.load %arg2[%c0, %c0_0] : memref<16x32xbf16, #tpu.memory_space<vmem>>, vector<16x32xbf16>
    %c0_1 = arith.constant 0 : index
    %c0_2 = arith.constant 0 : index
    %1 = vector.load %arg3[%c0_1, %c0_2] : memref<32x32xbf16, #tpu.memory_space<vmem>>, vector<32x32xbf16>
    %cst = arith.constant dense<0.000000e+00> : vector<16x32xf32>
    %2 = tpu.matmul %0, %1, %cst {dimension_numbers = #tpu.dot_dimension_numbers<[1], [0], [0], [1], [0, 0, 1, 1], [], []>} : vector<16x32xbf16>, vector<32x32xbf16>, vector<16x32xf32> -> vector<16x32xf32>
    %c0_3 = arith.constant 0 : index
    %c0_4 = arith.constant 0 : index
    %3 = vector.load %arg4[%c0_3, %c0_4] : memref<1x32xf32, #tpu.memory_space<vmem>>, vector<1x32xf32>
    %4 = vector.broadcast %3 : vector<1x32xf32> to vector<16x32xf32>
    %5 = arith.addf %2, %4 : vector<16x32xf32>
    %c0_5 = arith.constant 0 : index
    %c0_6 = arith.constant 0 : index
    %6 = vector.load %arg5[%c0_5, %c0_6] : memref<16x32xbf16, #tpu.memory_space<vmem>>, vector<16x32xbf16>
    %7 = arith.extf %6 : vector<16x32xbf16> to vector<16x32xf32>
    %8 = arith.addf %5, %7 : vector<16x32xf32>
    %9 = arith.truncf %8 : vector<16x32xf32> to vector<16x32xbf16>
    %c0_7 = arith.constant 0 : index
    %c0_8 = arith.constant 0 : index
    %10 = vector.load %arg6[%c0_7, %c0_8] : memref<16x32xbf16, #tpu.memory_space<vmem>>, vector<16x32xbf16>
    tpu.vector_store %arg6[%c0_7, %c0_8], %9 {strides = array<i32>} : memref<16x32xbf16, #tpu.memory_space<vmem>>, vector<16x32xbf16>,
    return
  }
  func.func @transform_0(%arg0: i32, %arg1: i32) -> (i32, i32) {
    %c0_i32 = arith.constant 0 : i32
    %c0_i32_0 = arith.constant 0 : i32
    return %arg0, %c0_i32 : i32, i32
  }
  func.func @transform_1(%arg0: i32, %arg1: i32) -> (i32, i32) {
    %c0_i32 = arith.constant 0 : i32
    %c0_i32_0 = arith.constant 0 : i32
    return %c0_i32, %arg1 : i32, i32
  }
  func.func @transform_2(%arg0: i32, %arg1: i32) -> (i32, i32) {
    %c0_i32 = arith.constant 0 : i32
    %c0_i32_0 = arith.constant 0 : i32
    return %c0_i32, %arg1 : i32, i32
  }
  func.func @transform_3(%arg0: i32, %arg1: i32) -> (i32, i32) {
    %c0_i32 = arith.constant 0 : i32
    return %arg0, %arg1 : i32, i32
  }
  func.func @transform_4(%arg0: i32, %arg1: i32) -> (i32, i32) {
    %c0_i32 = arith.constant 0 : i32
    return %arg0, %arg1 : i32, i32
  }
}

module attributes {stable_mosaic.version = 11 : i64} {
  func.func @_gemm_fullk_kernel(%arg0: i32, %arg1: i32, %arg2: memref<16x32xbf16, #tpu.memory_space<vmem>>, %arg3: memref<32x128xbf16, #tpu.memory_space<vmem>>, %arg4: memref<1x128xf32, #tpu.memory_space<vmem>>, %arg5: memref<1x32xf32, #tpu.memory_space<vmem>>, %arg6: memref<1x32xf32, #tpu.memory_space<vmem>>, %arg7: memref<16x128xbf16, #tpu.memory_space<vmem>>) attributes {dimension_semantics = [#tpu.dimension_semantics<parallel>, #tpu.dimension_semantics<parallel>], iteration_bounds = array<i64: 1, 1>, scalar_prefetch = 0 : i64, scratch_operands = 0 : i64, tpu.core_type = #tpu.core_type<tc>, window_params = [{transform_indices = @transform_0, window_bounds = array<i64: 16, 32>}, {transform_indices = @transform_1, window_bounds = array<i64: 32, 128>}, {transform_indices = @transform_2, window_bounds = array<i64: 1, 128>}, {pipeline_mode = #tpu.pipeline_mode<synchronous>, transform_indices = @transform_3, window_bounds = array<i64: 1, 32>}, {pipeline_mode = #tpu.pipeline_mode<synchronous>, transform_indices = @transform_4, window_bounds = array<i64: 1, 32>}, {transform_indices = @transform_5, window_bounds = array<i64: 16, 128>}]} {
    %c0 = arith.constant 0 : index
    %c0_0 = arith.constant 0 : index
    %0 = vector.load %arg2[%c0, %c0_0] : memref<16x32xbf16, #tpu.memory_space<vmem>>, vector<16x32xbf16>
    %1 = arith.extf %0 : vector<16x32xbf16> to vector<16x32xf32>
    %cst = arith.constant dense<0.000000e+00> : vector<16xf32>
    %2 = vector.multi_reduction <add>, %1, %cst [1] : vector<16x32xf32> to vector<16xf32>
    %3 = vector.shape_cast %2 : vector<16xf32> to vector<16x1xf32>
    %cst_1 = arith.constant 3.200000e+01 : f32
    %4 = vector.broadcast %cst_1 : f32 to vector<16x1xf32>
    %5 = arith.divf %3, %4 : vector<16x1xf32>
    %6 = vector.broadcast %5 : vector<16x1xf32> to vector<16x32xf32>
    %7 = arith.subf %1, %6 : vector<16x32xf32>
    %8 = arith.mulf %7, %7 : vector<16x32xf32>
    %cst_2 = arith.constant dense<0.000000e+00> : vector<16xf32>
    %9 = vector.multi_reduction <add>, %8, %cst_2 [1] : vector<16x32xf32> to vector<16xf32>
    %10 = vector.shape_cast %9 : vector<16xf32> to vector<16x1xf32>
    %cst_3 = arith.constant 3.200000e+01 : f32
    %11 = vector.broadcast %cst_3 : f32 to vector<16x1xf32>
    %12 = arith.divf %10, %11 : vector<16x1xf32>
    %cst_4 = arith.constant 9.99999974E-6 : f32
    %13 = vector.broadcast %cst_4 : f32 to vector<16x1xf32>
    %14 = arith.addf %12, %13 : vector<16x1xf32>
    %15 = math.rsqrt %14 : vector<16x1xf32>
    %16 = vector.broadcast %15 : vector<16x1xf32> to vector<16x32xf32>
    %17 = arith.mulf %7, %16 : vector<16x32xf32>
    %c0_5 = arith.constant 0 : index
    %c0_6 = arith.constant 0 : index
    %18 = vector.load %arg5[%c0_5, %c0_6] : memref<1x32xf32, #tpu.memory_space<vmem>>, vector<1x32xf32>
    %19 = vector.broadcast %18 : vector<1x32xf32> to vector<16x32xf32>
    %20 = arith.mulf %17, %19 : vector<16x32xf32>
    %c0_7 = arith.constant 0 : index
    %c0_8 = arith.constant 0 : index
    %21 = vector.load %arg6[%c0_7, %c0_8] : memref<1x32xf32, #tpu.memory_space<vmem>>, vector<1x32xf32>
    %22 = vector.broadcast %21 : vector<1x32xf32> to vector<16x32xf32>
    %23 = arith.addf %20, %22 : vector<16x32xf32>
    %24 = arith.truncf %23 : vector<16x32xf32> to vector<16x32xbf16>
    %c0_9 = arith.constant 0 : index
    %c0_10 = arith.constant 0 : index
    %25 = vector.load %arg3[%c0_9, %c0_10] : memref<32x128xbf16, #tpu.memory_space<vmem>>, vector<32x128xbf16>
    %cst_11 = arith.constant dense<0.000000e+00> : vector<16x128xf32>
    %26 = tpu.matmul %24, %25, %cst_11 {dimension_numbers = #tpu.dot_dimension_numbers<[1], [0], [0], [1], [0, 0, 1, 1], [], []>} : vector<16x32xbf16>, vector<32x128xbf16>, vector<16x128xf32> -> vector<16x128xf32>
    %c0_12 = arith.constant 0 : index
    %c0_13 = arith.constant 0 : index
    %27 = vector.load %arg4[%c0_12, %c0_13] : memref<1x128xf32, #tpu.memory_space<vmem>>, vector<1x128xf32>
    %28 = vector.broadcast %27 : vector<1x128xf32> to vector<16x128xf32>
    %29 = arith.addf %26, %28 : vector<16x128xf32>
    %cst_14 = arith.constant 5.000000e-01 : f32
    %30 = vector.broadcast %cst_14 : f32 to vector<16x128xf32>
    %31 = arith.mulf %30, %29 : vector<16x128xf32>
    %cst_15 = arith.constant 0.707106769 : f32
    %32 = vector.broadcast %cst_15 : f32 to vector<16x128xf32>
    %33 = arith.mulf %29, %32 : vector<16x128xf32>
    %34 = math.erf %33 : vector<16x128xf32>
    %cst_16 = arith.constant 1.000000e+00 : f32
    %35 = vector.broadcast %cst_16 : f32 to vector<16x128xf32>
    %36 = arith.addf %35, %34 : vector<16x128xf32>
    %37 = arith.mulf %31, %36 : vector<16x128xf32>
    %38 = arith.truncf %37 : vector<16x128xf32> to vector<16x128xbf16>
    %c0_17 = arith.constant 0 : index
    %c0_18 = arith.constant 0 : index
    %39 = vector.load %arg7[%c0_17, %c0_18] : memref<16x128xbf16, #tpu.memory_space<vmem>>, vector<16x128xbf16>
    tpu.vector_store %arg7[%c0_17, %c0_18], %38 {strides = array<i32>} : memref<16x128xbf16, #tpu.memory_space<vmem>>, vector<16x128xbf16>,
    return
  }
  func.func @transform_0(%arg0: i32, %arg1: i32) -> (i32, i32) {
    %c0_i32 = arith.constant 0 : i32
    %c0_i32_0 = arith.constant 0 : i32
    return %arg0, %c0_i32 : i32, i32
  }
  func.func @transform_1(%arg0: i32, %arg1: i32) -> (i32, i32) {
    %c0_i32 = arith.constant 0 : i32
    %c0_i32_0 = arith.constant 0 : i32
    return %c0_i32, %arg1 : i32, i32
  }
  func.func @transform_2(%arg0: i32, %arg1: i32) -> (i32, i32) {
    %c0_i32 = arith.constant 0 : i32
    %c0_i32_0 = arith.constant 0 : i32
    return %c0_i32, %arg1 : i32, i32
  }
  func.func @transform_3(%arg0: i32, %arg1: i32) -> (i32, i32) {
    %c0_i32 = arith.constant 0 : i32
    %c0_i32_0 = arith.constant 0 : i32
    %c0_i32_1 = arith.constant 0 : i32
    return %c0_i32, %c0_i32_0 : i32, i32
  }
  func.func @transform_4(%arg0: i32, %arg1: i32) -> (i32, i32) {
    %c0_i32 = arith.constant 0 : i32
    %c0_i32_0 = arith.constant 0 : i32
    %c0_i32_1 = arith.constant 0 : i32
    return %c0_i32, %c0_i32_0 : i32, i32
  }
  func.func @transform_5(%arg0: i32, %arg1: i32) -> (i32, i32) {
    %c0_i32 = arith.constant 0 : i32
    return %arg0, %arg1 : i32, i32
  }
}

module attributes {stable_mosaic.version = 11 : i64} {
  func.func @_gemm_fullk_kernel(%arg0: i32, %arg1: i32, %arg2: memref<16x128xbf16, #tpu.memory_space<vmem>>, %arg3: memref<128x32xbf16, #tpu.memory_space<vmem>>, %arg4: memref<1x32xf32, #tpu.memory_space<vmem>>, %arg5: memref<16x32xbf16, #tpu.memory_space<vmem>>, %arg6: memref<16x32xbf16, #tpu.memory_space<vmem>>) attributes {dimension_semantics = [#tpu.dimension_semantics<parallel>, #tpu.dimension_semantics<parallel>], iteration_bounds = array<i64: 1, 1>, scalar_prefetch = 0 : i64, scratch_operands = 0 : i64, tpu.core_type = #tpu.core_type<tc>, window_params = [{transform_indices = @transform_0, window_bounds = array<i64: 16, 128>}, {transform_indices = @transform_1, window_bounds = array<i64: 128, 32>}, {transform_indices = @transform_2, window_bounds = array<i64: 1, 32>}, {transform_indices = @transform_3, window_bounds = array<i64: 16, 32>}, {transform_indices = @transform_4, window_bounds = array<i64: 16, 32>}]} {
    %c0 = arith.constant 0 : index
    %c0_0 = arith.constant 0 : index
    %0 = vector.load %arg2[%c0, %c0_0] : memref<16x128xbf16, #tpu.memory_space<vmem>>, vector<16x128xbf16>
    %c0_1 = arith.constant 0 : index
    %c0_2 = arith.constant 0 : index
    %1 = vector.load %arg3[%c0_1, %c0_2] : memref<128x32xbf16, #tpu.memory_space<vmem>>, vector<128x32xbf16>
    %cst = arith.constant dense<0.000000e+00> : vector<16x32xf32>
    %2 = tpu.matmul %0, %1, %cst {dimension_numbers = #tpu.dot_dimension_numbers<[1], [0], [0], [1], [0, 0, 1, 1], [], []>} : vector<16x128xbf16>, vector<128x32xbf16>, vector<16x32xf32> -> vector<16x32xf32>
    %c0_3 = arith.constant 0 : index
    %c0_4 = arith.constant 0 : index
    %3 = vector.load %arg4[%c0_3, %c0_4] : memref<1x32xf32, #tpu.memory_space<vmem>>, vector<1x32xf32>
    %4 = vector.broadcast %3 : vector<1x32xf32> to vector<16x32xf32>
    %5 = arith.addf %2, %4 : vector<16x32xf32>
    %c0_5 = arith.constant 0 : index
    %c0_6 = arith.constant 0 : index
    %6 = vector.load %arg5[%c0_5, %c0_6] : memref<16x32xbf16, #tpu.memory_space<vmem>>, vector<16x32xbf16>
    %7 = arith.extf %6 : vector<16x32xbf16> to vector<16x32xf32>
    %8 = arith.addf %5, %7 : vector<16x32xf32>
    %9 = arith.truncf %8 : vector<16x32xf32> to vector<16x32xbf16>
    %c0_7 = arith.constant 0 : index
    %c0_8 = arith.constant 0 : index
    %10 = vector.load %arg6[%c0_7, %c0_8] : memref<16x32xbf16, #tpu.memory_space<vmem>>, vector<16x32xbf16>
    tpu.vector_store %arg6[%c0_7, %c0_8], %9 {strides = array<i32>} : memref<16x32xbf16, #tpu.memory_space<vmem>>, vector<16x32xbf16>,
    return
  }
  func.func @transform_0(%arg0: i32, %arg1: i32) -> (i32, i32) {
    %c0_i32 = arith.constant 0 : i32
    %c0_i32_0 = arith.constant 0 : i32
    return %arg0, %c0_i32 : i32, i32
  }
  func.func @transform_1(%arg0: i32, %arg1: i32) -> (i32, i32) {
    %c0_i32 = arith.constant 0 : i32
    %c0_i32_0 = arith.constant 0 : i32
    return %c0_i32, %arg1 : i32, i32
  }
  func.func @transform_2(%arg0: i32, %arg1: i32) -> (i32, i32) {
    %c0_i32 = arith.constant 0 : i32
    %c0_i32_0 = arith.constant 0 : i32
    return %c0_i32, %arg1 : i32, i32
  }
  func.func @transform_3(%arg0: i32, %arg1: i32) -> (i32, i32) {
    %c0_i32 = arith.constant 0 : i32
    return %arg0, %arg1 : i32, i32
  }
  func.func @transform_4(%arg0: i32, %arg1: i32) -> (i32, i32) {
    %c0_i32 = arith.constant 0 : i32
    return %arg0, %arg1 : i32, i32
  }
}

module attributes {stable_mosaic.version = 11 : i64} {
  func.func @_layernorm_kernel(%arg0: i32, %arg1: memref<16x32xbf16, #tpu.memory_space<vmem>>, %arg2: memref<1x32xf32, #tpu.memory_space<vmem>>, %arg3: memref<1x32xf32, #tpu.memory_space<vmem>>, %arg4: memref<16x32xf32, #tpu.memory_space<vmem>>) attributes {dimension_semantics = [#tpu.dimension_semantics<parallel>], iteration_bounds = array<i64: 1>, scalar_prefetch = 0 : i64, scratch_operands = 0 : i64, tpu.core_type = #tpu.core_type<tc>, window_params = [{transform_indices = @transform_0, window_bounds = array<i64: 16, 32>}, {pipeline_mode = #tpu.pipeline_mode<synchronous>, transform_indices = @transform_1, window_bounds = array<i64: 1, 32>}, {pipeline_mode = #tpu.pipeline_mode<synchronous>, transform_indices = @transform_2, window_bounds = array<i64: 1, 32>}, {transform_indices = @transform_3, window_bounds = array<i64: 16, 32>}]} {
    %c0 = arith.constant 0 : index
    %c0_0 = arith.constant 0 : index
    %0 = vector.load %arg1[%c0, %c0_0] : memref<16x32xbf16, #tpu.memory_space<vmem>>, vector<16x32xbf16>
    %1 = arith.extf %0 : vector<16x32xbf16> to vector<16x32xf32>
    %cst = arith.constant dense<0.000000e+00> : vector<16xf32>
    %2 = vector.multi_reduction <add>, %1, %cst [1] : vector<16x32xf32> to vector<16xf32>
    %3 = vector.shape_cast %2 : vector<16xf32> to vector<16x1xf32>
    %cst_1 = arith.constant 3.200000e+01 : f32
    %4 = vector.broadcast %cst_1 : f32 to vector<16x1xf32>
    %5 = arith.divf %3, %4 : vector<16x1xf32>
    %6 = vector.broadcast %5 : vector<16x1xf32> to vector<16x32xf32>
    %7 = arith.subf %1, %6 : vector<16x32xf32>
    %8 = arith.mulf %7, %7 : vector<16x32xf32>
    %cst_2 = arith.constant dense<0.000000e+00> : vector<16xf32>
    %9 = vector.multi_reduction <add>, %8, %cst_2 [1] : vector<16x32xf32> to vector<16xf32>
    %10 = vector.shape_cast %9 : vector<16xf32> to vector<16x1xf32>
    %cst_3 = arith.constant 3.200000e+01 : f32
    %11 = vector.broadcast %cst_3 : f32 to vector<16x1xf32>
    %12 = arith.divf %10, %11 : vector<16x1xf32>
    %cst_4 = arith.constant 9.99999974E-6 : f32
    %13 = vector.broadcast %cst_4 : f32 to vector<16x1xf32>
    %14 = arith.addf %12, %13 : vector<16x1xf32>
    %15 = math.rsqrt %14 : vector<16x1xf32>
    %16 = vector.broadcast %15 : vector<16x1xf32> to vector<16x32xf32>
    %17 = arith.mulf %7, %16 : vector<16x32xf32>
    %c0_5 = arith.constant 0 : index
    %c0_6 = arith.constant 0 : index
    %18 = vector.load %arg2[%c0_5, %c0_6] : memref<1x32xf32, #tpu.memory_space<vmem>>, vector<1x32xf32>
    %19 = vector.broadcast %18 : vector<1x32xf32> to vector<16x32xf32>
    %20 = arith.mulf %17, %19 : vector<16x32xf32>
    %c0_7 = arith.constant 0 : index
    %c0_8 = arith.constant 0 : index
    %21 = vector.load %arg3[%c0_7, %c0_8] : memref<1x32xf32, #tpu.memory_space<vmem>>, vector<1x32xf32>
    %22 = vector.broadcast %21 : vector<1x32xf32> to vector<16x32xf32>
    %23 = arith.addf %20, %22 : vector<16x32xf32>
    %c0_9 = arith.constant 0 : index
    %c0_10 = arith.constant 0 : index
    %24 = vector.load %arg4[%c0_9, %c0_10] : memref<16x32xf32, #tpu.memory_space<vmem>>, vector<16x32xf32>
    tpu.vector_store %arg4[%c0_9, %c0_10], %23 {strides = array<i32>} : memref<16x32xf32, #tpu.memory_space<vmem>>, vector<16x32xf32>,
    return
  }
  func.func @transform_0(%arg0: i32) -> (i32, i32) {
    %c0_i32 = arith.constant 0 : i32
    %c0_i32_0 = arith.constant 0 : i32
    return %arg0, %c0_i32 : i32, i32
  }
  func.func @transform_1(%arg0: i32) -> (i32, i32) {
    %c0_i32 = arith.constant 0 : i32
    %c0_i32_0 = arith.constant 0 : i32
    %c0_i32_1 = arith.constant 0 : i32
    return %c0_i32, %c0_i32_0 : i32, i32
  }
  func.func @transform_2(%arg0: i32) -> (i32, i32) {
    %c0_i32 = arith.constant 0 : i32
    %c0_i32_0 = arith.constant 0 : i32
    %c0_i32_1 = arith.constant 0 : i32
    return %c0_i32, %c0_i32_0 : i32, i32
  }
  func.func @transform_3(%arg0: i32) -> (i32, i32) {
    %c0_i32 = arith.constant 0 : i32
    %c0_i32_0 = arith.constant 0 : i32
    return %arg0, %c0_i32 : i32, i32
  }
}

</mosaic_0001>

<llo_original>
// kernel: whisper_encoder_forward.14
$region0: #{whisper_encoder_forward.14}
  #allocation0 [shape = 'u32[]', space=smem, size = 0x4, offset = 0x4, fixed_abs, tag = 'smem constant byte address 0x4 - core index']
  #allocation1 [shape = 'u32[144,128]{1,0:T(1,128)}', space=vmem, size = 0x12000, scoped, tag = 'internal scratch']
  %s0 = inlined_call_operand.vmem [shape: bf16[16,96], index: 0, kind: input, shape index: {}]
  %s1 = inlined_call_operand.vmem [shape: bf16[96,32], index: 1, kind: input, shape index: {}]
  %s2 = inlined_call_operand.vmem [shape: f32[1,32], index: 2, kind: input, shape index: {}]
  %s3 = inlined_call_operand.vmem [shape: bf16[8,32], index: 3, kind: input, shape index: {}]
  %s4 = inlined_call_operand.vmem [shape: bf16[16,32], index: 4, kind: output, shape index: {}]
  %s5 = sld [smem:[#allocation0]]
  $region49: #{whisper_encoder_forward.14} parent=0
    _
  %s7 = ssub.s32 1, %s5
  %s8 = scalar_select 0, %s7, %s5
  loop: start=0, step=1, limit=4
  $region2: #{whisper_encoder_forward.14} parent=0 // loop_pre_header
    _
  $region3: #{whisper_encoder_forward.14} parent=0 // loop_header
    %s10 = sphi 0, %s14
    %p11 = scmp.ge.s32.totalorder %s10, 4
    %s17 = sphi 0, %s29
    %s18 = sphi 0, %s25
    %s19 = sphi 0, %s17
    %s20 = sphi 0, %s18
    %s21 = sphi 0, %s19
    %s22 = sphi 0, %s20
    %s32 = sphi 0, %s34
    %s35 = sphi 0, %s32
    %s36 = sphi 0, %s35
    %s52 = sphi 0, %s36
    %s58 = sphi 0, %s60
    %s61 = sphi 0, %s58
    %s62 = sphi 0, %s61
    %s78 = sphi 0, %s62
    %s84 = sphi 0, %s86
    %s87 = sphi 0, %s84
    %s88 = sphi 0, %s87
    %s104 = sphi 0, %s88
    %s110 = sphi 0, %s112
    %s113 = sphi 0, %s110
    %s114 = sphi 0, %s113
    %s130 = sphi 0, %s114
    %s138 = sphi 0, %s140
    %s141 = sphi 0, %s138
    %s142 = sphi 0, %s141
    %s158 = sphi 0, %s142
  $region4: #{whisper_encoder_forward.14} parent=0 // loop_header_branch
    %13 = sbr.rel (%p11) target = $region8
  $region5: #{whisper_encoder_forward.14} parent=0 // loop_body
    %s15 = ssub.s32 %s10, 1
    %s16 = ssub.s32 %s10, 2
    %s23 = sadd.s32 1, %s18
    %p24 = scmp.ge.s32.totalorder %s23, 1
    %s25 = scalar_select %p24, 0, %s23
    %s26 = sadd.s32 1, %s17
    %s27 = scalar_select %p24, %s26, %s17
    %p28 = scmp.ge.s32.totalorder %s27, 2
    %s29 = scalar_select %p28, 0, %s27
    %s30 = ssub.s32 %s17, %s29
    %p31 = scmp.eq.s32.totalorder %s30, 0
    %s33 = sadd.s32 %s32, 1
    %s34 = scalar_select %p31, %s32, %s33
    %p37 = pneg %p31
    %p38 = scmp.eq.s32.totalorder %s10, 1
    %p39 = por %p37, %p38
    %p40 = scmp.ne.s32.totalorder %s32, %s35
    %p41 = scmp.eq.s32.totalorder %s10, 0
    %p42 = por %p40, %p41
    %p43 = scmp.ne.s32.totalorder %s32, %s35
    %p44 = scmp.eq.s32.totalorder %s15, 1
    %p45 = por %p43, %p44
    %p46 = scmp.ne.s32.totalorder %s35, %s36
    %p47 = scmp.eq.s32.totalorder %s15, 0
    %p48 = por %p46, %p47
    %p49 = scmp.ne.s32.totalorder %s35, %s36
    %p50 = scmp.eq.s32.totalorder %s16, 1
    %p51 = por %p49, %p50
    %p53 = scmp.ne.s32.totalorder %s36, %s52
    %p54 = scmp.eq.s32.totalorder %s16, 0
    %p55 = por %p53, %p54
    %s56 = ssub.s32 %s18, %s25
    %p57 = scmp.eq.s32.totalorder %s56, 0
    %s59 = sadd.s32 %s58, 1
    %s60 = scalar_select %p57, %s58, %s59
    %p63 = pneg %p57
    %p64 = scmp.eq.s32.totalorder %s10, 1
    %p65 = por %p63, %p64
    %p66 = scmp.ne.s32.totalorder %s58, %s61
    %p67 = scmp.eq.s32.totalorder %s10, 0
    %p68 = por %p66, %p67
    %p69 = scmp.ne.s32.totalorder %s58, %s61
    %p70 = scmp.eq.s32.totalorder %s15, 1
    %p71 = por %p69, %p70
    %p72 = scmp.ne.s32.totalorder %s61, %s62
    %p73 = scmp.eq.s32.totalorder %s15, 0
    %p74 = por %p72, %p73
    %p75 = scmp.ne.s32.totalorder %s61, %s62
    %p76 = scmp.eq.s32.totalorder %s16, 1
    %p77 = por %p75, %p76
    %p79 = scmp.ne.s32.totalorder %s62, %s78
    %p80 = scmp.eq.s32.totalorder %s16, 0
    %p81 = por %p79, %p80
    %s82 = ssub.s32 %s18, %s25
    %p83 = scmp.eq.s32.totalorder %s82, 0
    %s85 = sadd.s32 %s84, 1
    %s86 = scalar_select %p83, %s84, %s85
    %p89 = pneg %p83
    %p90 = scmp.eq.s32.totalorder %s10, 1
    %p91 = por %p89, %p90
    %p92 = scmp.ne.s32.totalorder %s84, %s87
    %p93 = scmp.eq.s32.totalorder %s10, 0
    %p94 = por %p92, %p93
    %p95 = scmp.ne.s32.totalorder %s84, %s87
    %p96 = scmp.eq.s32.totalorder %s15, 1
    %p97 = por %p95, %p96
    %p98 = scmp.ne.s32.totalorder %s87, %s88
    %p99 = scmp.eq.s32.totalorder %s15, 0
    %p100 = por %p98, %p99
    %p101 = scmp.ne.s32.totalorder %s87, %s88
    %p102 = scmp.eq.s32.totalorder %s16, 1
    %p103 = por %p101, %p102
    %p105 = scmp.ne.s32.totalorder %s88, %s104
    %p106 = scmp.eq.s32.totalorder %s16, 0
    %p107 = por %p105, %p106
    %s108 = ssub.s32 %s18, %s25
    %p109 = scmp.eq.s32.totalorder %s108, 0
    %s111 = sadd.s32 %s110, 1
    %s112 = scalar_select %p109, %s110, %s111
    %p115 = pneg %p109
    %p116 = scmp.eq.s32.totalorder %s10, 1
    %p117 = por %p115, %p116
    %p118 = scmp.ne.s32.totalorder %s110, %s113
    %p119 = scmp.eq.s32.totalorder %s10, 0
    %p120 = por %p118, %p119
    %p121 = scmp.ne.s32.totalorder %s110, %s113
    %p122 = scmp.eq.s32.totalorder %s15, 1
    %p123 = por %p121, %p122
    %p124 = scmp.ne.s32.totalorder %s113, %s114
    %p125 = scmp.eq.s32.totalorder %s15, 0
    %p126 = por %p124, %p125
    %p127 = scmp.ne.s32.totalorder %s113, %s114
    %p128 = scmp.eq.s32.totalorder %s16, 1
    %p129 = por %p127, %p128
    %p131 = scmp.ne.s32.totalorder %s114, %s130
    %p132 = scmp.eq.s32.totalorder %s16, 0
    %p133 = por %p131, %p132
    %s134 = ssub.s32 %s17, %s29
    %s135 = ssub.s32 %s18, %s25
    %s136 = sor.u32 %s134, %s135
    %p137 = scmp.eq.s32.totalorder %s136, 0
    %s139 = sadd.s32 %s138, 1
    %s140 = scalar_select %p137, %s138, %s139
    %p143 = pneg %p137
    %p144 = scmp.eq.s32.totalorder %s10, 1
    %p145 = por %p143, %p144
    %p146 = scmp.ne.s32.totalorder %s138, %s141
    %p147 = scmp.eq.s32.totalorder %s10, 0
    %p148 = por %p146, %p147
    %p149 = scmp.ne.s32.totalorder %s138, %s141
    %p150 = scmp.eq.s32.totalorder %s15, 1
    %p151 = por %p149, %p150
    %p152 = scmp.ne.s32.totalorder %s141, %s142
    %p153 = scmp.eq.s32.totalorder %s15, 0
    %p154 = por %p152, %p153
    %p155 = scmp.ne.s32.totalorder %s141, %s142
    %p156 = scmp.eq.s32.totalorder %s16, 1
    %p157 = por %p155, %p156
    %p159 = scmp.ne.s32.totalorder %s142, %s158
    %p160 = scmp.eq.s32.totalorder %s16, 0
    %p161 = por %p159, %p160
    %p162 = scmp.le.s32.totalorder 1, %s10
    %p163 = scmp.lt.s32.totalorder %s10, 3
    %p164 = pnand %p162, %p163
    %p165 = pneg %p164
    // Predicated region
    $region9: #{whisper_encoder_forward.14} parent=5 // pred_check
      _
    $region10: #{whisper_encoder_forward.14} parent=5 // pred_check_branch
      %167 = sbr.rel (%p164) target = $region12
    $region11: #{whisper_encoder_forward.14} parent=5 // pred_region
      %s168 = ssub.s32 %s10, 1
      // Predicated region
      $region13: #{whisper_encoder_forward.14} parent=11 // pred_check
        %p169 = pneg %p74
      $region14: #{whisper_encoder_forward.14} parent=11 // pred_check_branch
        %171 = sbr.rel (%p169) target = $region16
      $region15: #{whisper_encoder_forward.14} parent=11 // pred_region
        %p172 = scmp.lt.s32.totalorder %s20, 0
        %s173 = scalar_select %p172, %s20, 0
        %s174 = smul.addr %s173, 4
        %s175 = scalar_lea.vmem %s1, %s174
      $region16: #{whisper_encoder_forward.14} parent=11 // pred_fallthru
        _
      // Predicated region
      $region17: #{whisper_encoder_forward.14} parent=11 // pred_check
        %p176 = pneg %p100
      $region18: #{whisper_encoder_forward.14} parent=11 // pred_check_branch
        %178 = sbr.rel (%p176) target = $region20
      $region19: #{whisper_encoder_forward.14} parent=11 // pred_region
        %p179 = scmp.lt.s32.totalorder %s20, 0
        %s180 = scalar_select %p179, %s20, 0
        %s181 = scalar_lea.vmem %s2, %s180
      $region20: #{whisper_encoder_forward.14} parent=11 // pred_fallthru
        _
      // Predicated region
      $region21: #{whisper_encoder_forward.14} parent=11 // pred_check
        %p182 = pneg %p126
      $region22: #{whisper_encoder_forward.14} parent=11 // pred_check_branch
        %184 = sbr.rel (%p182) target = $region24
      $region23: #{whisper_encoder_forward.14} parent=11 // pred_region
        %p185 = scmp.lt.s32.totalorder %s20, 0
        %s186 = scalar_select %p185, %s20, 0
        %s187 = smul.addr %s186, 4
        %s188 = scalar_lea.vmem %s3, %s187
      $region24: #{whisper_encoder_forward.14} parent=11 // pred_fallthru
        _
    $region12: #{whisper_encoder_forward.14} parent=5 // pred_fallthru
      _
    %p189 = scmp.lt.s32.totalorder %s10, 2
    // Predicated region
    $region25: #{whisper_encoder_forward.14} parent=5 // pred_check
      %p190 = pneg %p189
    $region26: #{whisper_encoder_forward.14} parent=5 // pred_check_branch
      %192 = sbr.rel (%p190) target = $region28
    $region27: #{whisper_encoder_forward.14} parent=5 // pred_region
      // Predicated region
      $region29: #{whisper_encoder_forward.14} parent=27 // pred_check
        %p193 = pneg %p42
      $region30: #{whisper_encoder_forward.14} parent=27 // pred_check_branch
        %195 = sbr.rel (%p193) target = $region32
      $region31: #{whisper_encoder_forward.14} parent=27 // pred_region
        %p196 = scmp.lt.s32.totalorder %s17, 1
        %s197 = scalar_select %p196, %s17, 1
        %s198 = smul.addr %s197, 4
        %s199 = scalar_lea.vmem %s0, %s198
      $region32: #{whisper_encoder_forward.14} parent=27 // pred_fallthru
        _
    $region28: #{whisper_encoder_forward.14} parent=5 // pred_fallthru
      _
    %p200 = scmp.le.s32.totalorder 1, %s10
    %p201 = scmp.lt.s32.totalorder %s10, 3
    %p202 = pnand %p200, %p201
    %p203 = pneg %p202
    // Predicated region
    $region33: #{whisper_encoder_forward.14} parent=5 // pred_check
      _
    $region34: #{whisper_encoder_forward.14} parent=5 // pred_check_branch
      %205 = sbr.rel (%p202) target = $region36
    $region35: #{whisper_encoder_forward.14} parent=5 // pred_region
      %s206 = ssub.s32 %s10, 1
      %p207 = scmp.lt.s32.totalorder %s19, 1
      %s208 = scalar_select %p207, %s19, 1
      %s209 = smul.addr %s208, 4
      %s210 = scalar_lea.vmem %s0, %s209
      %p211 = pneg %p48
      %p212 = pneg %p45
      %p213 = scmp.lt.s32.totalorder %s20, 0
      %s214 = scalar_select %p213, %s20, 0
      %s215 = smul.addr %s214, 4
      %s216 = scalar_lea.vmem %s1, %s215
      %p217 = pneg %p74
      %p218 = pneg %p71
      %p219 = scmp.lt.s32.totalorder %s20, 0
      %s220 = scalar_select %p219, %s20, 0
      %s221 = scalar_lea.vmem %s2, %s220
      %p222 = pneg %p100
      %p223 = pneg %p97
      %p224 = scmp.lt.s32.totalorder %s20, 0
      %s225 = scalar_select %p224, %s20, 0
      %s226 = smul.addr %s225, 4
      %s227 = scalar_lea.vmem %s3, %s226
      %p228 = pneg %p126
      %p229 = pneg %p123
      %p230 = pneg %p154
      %p231 = pneg %p151
      %p232 = scmp.lt.s32.totalorder %s19, 1
      %s233 = scalar_select %p232, %s19, 1
      %p234 = scmp.lt.s32.totalorder %s20, 0
      %s235 = scalar_select %p234, %s20, 0
      %s236 = sadd.s32 %s235, %s233
      %s237 = smul.addr %s236, 4
      %s238 = scalar_lea.vmem %s4, %s237
      %p239 = scmp.lt.s32.totalorder %s19, 1
      %s240 = scalar_select %p239, %s19, 1
      %s241 = smul.addr %s240, 4
      %s242 = scalar_lea.vmem %s0, %s241
      %p243 = scmp.lt.s32.totalorder %s20, 0
      %s244 = scalar_select %p243, %s20, 0
      %s245 = smul.addr %s244, 4
      %s246 = scalar_lea.vmem %s1, %s245
      %p247 = scmp.lt.s32.totalorder %s20, 0
      %s248 = scalar_select %p247, %s20, 0
      %s249 = scalar_lea.vmem %s2, %s248
      %p250 = scmp.lt.s32.totalorder %s20, 0
      %s251 = scalar_select %p250, %s20, 0
      %s252 = smul.addr %s251, 4
      %s253 = scalar_lea.vmem %s3, %s252
      %p254 = scmp.lt.s32.totalorder %s19, 1
      %s255 = scalar_select %p254, %s19, 1
      %p256 = scmp.lt.s32.totalorder %s20, 0
      %s257 = scalar_select %p256, %s20, 0
      %s258 = sadd.s32 %s257, %s255
      %s259 = smul.addr %s258, 4
      %s260 = scalar_lea.vmem %s4, %s259
      %v262 = vld [vmem:[%s242] sm:$0xf]
      %v263 = vld [vmem:[%s246] sm:$0xf]
      %v264 = vld [vmem:[%s246 + $0x4] sm:$0xf]
      %v265 = vld [vmem:[%s246 + $0x8] sm:$0xf]
      %v266 = vld [vmem:[%s246 + $0xc] sm:$0xf]
      %v267 = vld [vmem:[%s246 + $0x10] sm:$0xf]
      %v268 = vld [vmem:[%s246 + $0x14] sm:$0xf]
      %v269 = vld [vmem:[%s246 + $0x18] sm:$0xf]
      %v270 = vld [vmem:[%s246 + $0x1c] sm:$0xf]
      %v271 = vld [vmem:[%s246 + $0x20] sm:$0xf]
      %v272 = vld [vmem:[%s246 + $0x24] sm:$0xf]
      %v273 = vld [vmem:[%s246 + $0x28] sm:$0xf]
      %v274 = vld [vmem:[%s246 + $0x2c] sm:$0xf]
      %v275 = vld [vmem:[%s249] sm:$0x1]
      %v277 = vlaneseq
      %v278 = vshrl.u32 %v277, 7
      %v279 = vsub.s32 0, %v278
      %v280 = vrot.slane %v275, %v279
      %v294 = vunpack.c.l.b16 %v263
      %v295 = vunpack.c.l.b16 %v264
      %v296 = vunpack.c.l.b16 %v265
      %v297 = vunpack.c.l.b16 %v266
      %v298 = vunpack.c.l.b16 %v267
      %v299 = vunpack.c.l.b16 %v268
      %v300 = vunpack.c.l.b16 %v269
      %v301 = vunpack.c.l.b16 %v270
      %v302 = vunpack.c.l.b16 %v271
      %v303 = vunpack.c.l.b16 %v272
      %v304 = vunpack.c.l.b16 %v273
      %v305 = vunpack.c.l.b16 %v274
      %v306 = vpack.c.b16 %v295, %v294
      %v307 = vpack.c.b16 %v297, %v296
      %v308 = vpack.c.b16 %v299, %v298
      %v309 = vpack.c.b16 %v301, %v300
      %v310 = vpack.c.b16 %v303, %v302
      %v311 = vpack.c.b16 %v305, %v304
      %vm318 = vcmask 785408
      %v320 = vsel %vm318, %v262, 0
      %322 = vmatprep.subr.bf16.mxu0 0
      %323 = vmatpush1.bf16.msra.mxu0 %v306
      %324 = vmatprep.subr.bf16.mxu0 0
      %325 = vmatpush1.bf16.msra.mxu0 %v307
      %326 = vmatprep.subr.bf16.mxu0 0
      %327 = vmatpush1.bf16.msra.mxu0 %v308
      %328 = vmatprep.subr.bf16.mxu0 0
      %329 = vmatpush1.bf16.msra.mxu0 %v309
      %330 = vmatprep.subr.bf16.mxu0 0
      %331 = vmatpush1.bf16.msra.mxu0 %v310
      %332 = vmatprep.subr.bf16.mxu0 0
      %333 = vmatpush1.bf16.msra.mxu0 %v311
      %334 = vmatprep.subr.bf16.mxu0 0
      %335 = vmatpush1.bf16.msra.mxu0 0
      %336 = vmatprep.subr.bf16.mxu0 0
      %337 = vmatpush1.bf16.msra.mxu0 0
      %338 = vmatprep.subr.bf16.mxu0 0
      %339 = vmatpush1.bf16.msra.mxu0 0
      %340 = vmatprep.subr.bf16.mxu0 0
      %341 = vmatpush1.bf16.msra.mxu0 0
      %342 = vmatprep.subr.bf16.mxu0 0
      %343 = vmatpush1.bf16.msra.mxu0 0
      %344 = vmatprep.subr.bf16.mxu0 0
      %345 = vmatpush1.bf16.msra.mxu0 0
      %346 = vmatprep.subr.bf16.mxu0 0
      %347 = vmatpush1.bf16.msra.mxu0 0
      %348 = vmatprep.subr.bf16.mxu0 0
      %349 = vmatpush1.bf16.msra.mxu0 0
      %350 = vmatprep.subr.bf16.mxu0 0
      %351 = vmatpush1.bf16.msra.mxu0 0
      %352 = vmatprep.subr.bf16.mxu0 0
      %353 = vmatpush1.bf16.msra.mxu0 0
      %354 = vmatprep.mubr.bf16.mxu0 0
      %355 = vmatmul.mubr.bf16.gmra.mrb[0].mxu0 %v320
      %v356 = vpop.f32.mrb[0].mxu0
      %v357 = vadd.f32 %v280, %v356
      %v358 = vpop.f32.mrb[0].mxu0
      %v359 = vpop.f32.mrb[0].mxu0
      %v360 = vpop.f32.mrb[0].mxu0
      %361 = vdwg.mxu0
      %v362 = vmul.f32 %v357, 0.5
      %v363 = vmul.f32 %v357, 0.70710677
      %v364 = verf.f32.pop %v363
      %v365 = vadd.f32 %v364, 1.0
      %v366 = vmul.f32 %v362, %v365
      %v367 = vld [vmem:[%s253] sm:$0xf]
      %v368 = vunpack.c.l.bf16 %v367
      %v369 = vadd.f32 %v366, %v368
      %v370 = vpack.c.bf16 %v369, %v369
      %vm371 = vcmask 257024
      %372 = vst.msk [vmem:[%s260] sm:$0xf] %vm371, %v370
      %p373 = scmp.lt.s32.totalorder %s19, 1
      %s374 = scalar_select %p373, %s19, 1
      %p375 = scmp.lt.s32.totalorder %s20, 0
      %s376 = scalar_select %p375, %s20, 0
      %s377 = sadd.s32 %s376, %s374
      %s378 = smul.addr %s377, 4
      %s379 = scalar_lea.vmem %s4, %s378
      // Predicated region
      $region37: #{whisper_encoder_forward.14} parent=35 // pred_check
        %p380 = pneg %p151
      $region38: #{whisper_encoder_forward.14} parent=35 // pred_check_branch
        %382 = sbr.rel (%p380) target = $region40
      $region39: #{whisper_encoder_forward.14} parent=35 // pred_region
        _
      $region40: #{whisper_encoder_forward.14} parent=35 // pred_fallthru
        _
    $region36: #{whisper_encoder_forward.14} parent=5 // pred_fallthru
      _
    %p383 = scmp.le.s32.totalorder 2, %s10
    // Predicated region
    $region41: #{whisper_encoder_forward.14} parent=5 // pred_check
      %p384 = pneg %p383
    $region42: #{whisper_encoder_forward.14} parent=5 // pred_check_branch
      %386 = sbr.rel (%p384) target = $region44
    $region43: #{whisper_encoder_forward.14} parent=5 // pred_region
      %s387 = ssub.s32 %s10, 2
      // Predicated region
      $region45: #{whisper_encoder_forward.14} parent=43 // pred_check
        %p388 = pneg %p157
      $region46: #{whisper_encoder_forward.14} parent=43 // pred_check_branch
        %390 = sbr.rel (%p388) target = $region48
      $region47: #{whisper_encoder_forward.14} parent=43 // pred_region
        %p391 = scmp.lt.s32.totalorder %s21, 1
        %s392 = scalar_select %p391, %s21, 1
        %p393 = scmp.lt.s32.totalorder %s22, 0
        %s394 = scalar_select %p393, %s22, 0
        %s395 = sadd.s32 %s394, %s392
        %s396 = smul.addr %s395, 4
        %s397 = scalar_lea.vmem %s4, %s396
      $region48: #{whisper_encoder_forward.14} parent=43 // pred_fallthru
        _
    $region44: #{whisper_encoder_forward.14} parent=5 // pred_fallthru
      _
  $region6: #{whisper_encoder_forward.14} parent=0 // loop_footer
    %s14 = sadd.s32 1, %s10
  $region7: #{whisper_encoder_forward.14} parent=0 // loop_footer_branch
    %9 = sbr.rel target = $region3
  $region8: #{whisper_encoder_forward.14} parent=0 // loop_exit
    _

// kernel: whisper_encoder_forward.13
$region0: #{whisper_encoder_forward.13}
  #allocation0 [shape = 'u32[]', space=smem, size = 0x4, offset = 0x4, fixed_abs, tag = 'smem constant byte address 0x4 - core index']
  #allocation1 [shape = 'u32[144,128]{1,0:T(1,128)}', space=vmem, size = 0x12000, scoped, tag = 'internal scratch']
  %s0 = inlined_call_operand.vmem [shape: bf16[32,48], index: 0, kind: input, shape index: {}]
  %s1 = inlined_call_operand.vmem [shape: bf16[48,32], index: 1, kind: input, shape index: {}]
  %s2 = inlined_call_operand.vmem [shape: f32[1,32], index: 2, kind: input, shape index: {}]
  %s3 = inlined_call_operand.vmem [shape: bf16[32,32], index: 3, kind: output, shape index: {}]
  %s4 = sld [smem:[#allocation0]]
  $region22: #{whisper_encoder_forward.13} parent=0
    _
  %s6 = ssub.s32 1, %s4
  %s7 = scalar_select 0, %s6, %s4
  // Predicated region
  $region2: #{whisper_encoder_forward.13} parent=0 // pred_check
    _
  $region3: #{whisper_encoder_forward.13} parent=0 // pred_check_branch
    %9 = sbr.rel (0) target = $region5
  $region4: #{whisper_encoder_forward.13} parent=0 // pred_region
    _
  $region5: #{whisper_encoder_forward.13} parent=0 // pred_fallthru
    _
  // Predicated region
  $region6: #{whisper_encoder_forward.13} parent=0 // pred_check
    _
  $region7: #{whisper_encoder_forward.13} parent=0 // pred_check_branch
    %11 = sbr.rel (0) target = $region9
  $region8: #{whisper_encoder_forward.13} parent=0 // pred_region
    _
  $region9: #{whisper_encoder_forward.13} parent=0 // pred_fallthru
    _
  // Predicated region
  $region10: #{whisper_encoder_forward.13} parent=0 // pred_check
    _
  $region11: #{whisper_encoder_forward.13} parent=0 // pred_check_branch
    %13 = sbr.rel (0) target = $region13
  $region12: #{whisper_encoder_forward.13} parent=0 // pred_region
    _
  $region13: #{whisper_encoder_forward.13} parent=0 // pred_fallthru
    _
  %v15 = vld [vmem:[%s0] sm:$0xf]
  %v16 = vld [vmem:[%s0 + $0x4] sm:$0xf]
  %v17 = vld [vmem:[%s0 + $0x8] sm:$0xf]
  %v18 = vld [vmem:[%s0 + $0xc] sm:$0xf]
  %v19 = vld [vmem:[%s1] sm:$0xf]
  %v20 = vld [vmem:[%s1 + $0x4] sm:$0xf]
  %v21 = vld [vmem:[%s1 + $0x8] sm:$0xf]
  %v22 = vld [vmem:[%s1 + $0xc] sm:$0xf]
  %v23 = vld [vmem:[%s1 + $0x10] sm:$0xf]
  %v24 = vld [vmem:[%s1 + $0x14] sm:$0xf]
  %v25 = vld [vmem:[%s2] sm:$0x1]
  %v27 = vlaneseq
  %v28 = vshrl.u32 %v27, 7
  %v29 = vsub.s32 0, %v28
  %v30 = vrot.slane %v25, %v29
  %v36 = vunpack.c.l.b16 %v15
  %v37 = vunpack.c.l.b16 %v16
  %v38 = vunpack.c.l.b16 %v17
  %v39 = vunpack.c.l.b16 %v18
  %v40 = vpack.c.b16 %v37, %v36
  %v41 = vpack.c.b16 %v39, %v38
  %v48 = vunpack.c.l.b16 %v19
  %v49 = vunpack.c.l.b16 %v20
  %v50 = vunpack.c.l.b16 %v21
  %v51 = vunpack.c.l.b16 %v22
  %v52 = vunpack.c.l.b16 %v23
  %v53 = vunpack.c.l.b16 %v24
  %v54 = vpack.c.b16 %v49, %v48
  %v55 = vpack.c.b16 %v51, %v50
  %v56 = vpack.c.b16 %v53, %v52
  %vm60 = vcmask 392192
  %v62 = vsel %vm60, %v40, 0
  %v65 = vsel %vm60, %v41, 0
  %67 = vmatprep.subr.bf16.mxu0 0
  %68 = vmatpush1.bf16.msra.mxu0 %v54
  %69 = vmatprep.subr.bf16.mxu0 0
  %70 = vmatpush1.bf16.msra.mxu0 %v55
  %71 = vmatprep.subr.bf16.mxu0 0
  %72 = vmatpush1.bf16.msra.mxu0 %v56
  %73 = vmatprep.subr.bf16.mxu0 0
  %74 = vmatpush1.bf16.msra.mxu0 0
  %75 = vmatprep.subr.bf16.mxu0 0
  %76 = vmatpush1.bf16.msra.mxu0 0
  %77 = vmatprep.subr.bf16.mxu0 0
  %78 = vmatpush1.bf16.msra.mxu0 0
  %79 = vmatprep.subr.bf16.mxu0 0
  %80 = vmatpush1.bf16.msra.mxu0 0
  %81 = vmatprep.subr.bf16.mxu0 0
  %82 = vmatpush1.bf16.msra.mxu0 0
  %83 = vmatprep.subr.bf16.mxu0 0
  %84 = vmatpush1.bf16.msra.mxu0 0
  %85 = vmatprep.subr.bf16.mxu0 0
  %86 = vmatpush1.bf16.msra.mxu0 0
  %87 = vmatprep.subr.bf16.mxu0 0
  %88 = vmatpush1.bf16.msra.mxu0 0
  %89 = vmatprep.subr.bf16.mxu0 0
  %90 = vmatpush1.bf16.msra.mxu0 0
  %91 = vmatprep.subr.bf16.mxu0 0
  %92 = vmatpush1.bf16.msra.mxu0 0
  %93 = vmatprep.subr.bf16.mxu0 0
  %94 = vmatpush1.bf16.msra.mxu0 0
  %95 = vmatprep.subr.bf16.mxu0 0
  %96 = vmatpush1.bf16.msra.mxu0 0
  %97 = vmatprep.subr.bf16.mxu0 0
  %98 = vmatpush1.bf16.msra.mxu0 0
  %99 = vmatprep.mubr.bf16.mxu0 0
  %100 = vmatmul.mubr.bf16.gmra.mrb[0].mxu0 %v62
  %v101 = vpop.f32.mrb[0].mxu0
  %v102 = vadd.f32 %v30, %v101
  %v103 = vpop.f32.mrb[0].mxu0
  %v104 = vpop.f32.mrb[0].mxu0
  %v105 = vadd.f32 %v30, %v104
  %v106 = vpop.f32.mrb[0].mxu0
  %107 = vmatprep.mubr.bf16.mxu0 0
  %108 = vmatmul.mubr.bf16.gmra.mrb[0].mxu0 %v65
  %v109 = vpop.f32.mrb[0].mxu0
  %v110 = vadd.f32 %v30, %v109
  %v111 = vpop.f32.mrb[0].mxu0
  %v112 = vpop.f32.mrb[0].mxu0
  %v113 = vadd.f32 %v30, %v112
  %v114 = vpop.f32.mrb[0].mxu0
  %115 = vdwg.mxu0
  %v116 = vmul.f32 %v102, 0.5
  %v117 = vmul.f32 %v105, 0.5
  %v118 = vmul.f32 %v110, 0.5
  %v119 = vmul.f32 %v113, 0.5
  %v120 = vmul.f32 %v102, 0.70710677
  %v121 = vmul.f32 %v105, 0.70710677
  %v122 = vmul.f32 %v110, 0.70710677
  %v123 = vmul.f32 %v113, 0.70710677
  %v124 = verf.f32.pop %v120
  %v125 = verf.f32.pop %v121
  %v126 = verf.f32.pop %v122
  %v127 = verf.f32.pop %v123
  %v128 = vadd.f32 %v124, 1.0
  %v129 = vadd.f32 %v125, 1.0
  %v130 = vadd.f32 %v126, 1.0
  %v131 = vadd.f32 %v127, 1.0
  %v132 = vmul.f32 %v116, %v128
  %v133 = vmul.f32 %v117, %v129
  %v134 = vmul.f32 %v118, %v130
  %v135 = vmul.f32 %v119, %v131
  %v136 = vpack.c.bf16 %v133, %v132
  %v137 = vpack.c.bf16 %v135, %v134
  %v140 = vunpack.c.l.b16 %v136
  %v141 = vunpack.c.h.b16 %v136
  %v142 = vunpack.c.l.b16 %v137
  %v143 = vunpack.c.h.b16 %v137
  %v144 = vpack.c.b16 %v140, %v140
  %v145 = vpack.c.b16 %v141, %v141
  %v146 = vpack.c.b16 %v142, %v142
  %v147 = vpack.c.b16 %v143, %v143
  %vm152 = vcmask 257024
  %153 = vst.msk [vmem:[%s3] sm:$0xf] %vm152, %v144
  %154 = vst.msk [vmem:[%s3 + $0x4] sm:$0xf] %vm152, %v145
  %155 = vst.msk [vmem:[%s3 + $0x8] sm:$0xf] %vm152, %v146
  %156 = vst.msk [vmem:[%s3 + $0xc] sm:$0xf] %vm152, %v147
  // Predicated region
  $region14: #{whisper_encoder_forward.13} parent=0 // pred_check
    _
  $region15: #{whisper_encoder_forward.13} parent=0 // pred_check_branch
    %158 = sbr.rel (0) target = $region17
  $region16: #{whisper_encoder_forward.13} parent=0 // pred_region
    _
  $region17: #{whisper_encoder_forward.13} parent=0 // pred_fallthru
    _
  // Predicated region
  $region18: #{whisper_encoder_forward.13} parent=0 // pred_check
    _
  $region19: #{whisper_encoder_forward.13} parent=0 // pred_check_branch
    %160 = sbr.rel (0) target = $region21
  $region20: #{whisper_encoder_forward.13} parent=0 // pred_region
    _
  $region21: #{whisper_encoder_forward.13} parent=0 // pred_fallthru
    _

// kernel: whisper_encoder_forward.15
$region0: #{whisper_encoder_forward.15}
  #allocation0 [shape = 'u32[]', space=smem, size = 0x4, offset = 0x4, fixed_abs, tag = 'smem constant byte address 0x4 - core index']
  #allocation1 [shape = 'u32[144,128]{1,0:T(1,128)}', space=vmem, size = 0x12000, scoped, tag = 'internal scratch']
  %s0 = inlined_call_operand.vmem [shape: bf16[16,32], index: 0, kind: input, shape index: {}]
  %s1 = inlined_call_operand.vmem [shape: bf16[3,32,32], index: 1, kind: input, shape index: {}]
  %s2 = inlined_call_operand.vmem [shape: f32[3,1,32], index: 2, kind: input, shape index: {}]
  %s3 = inlined_call_operand.vmem [shape: f32[1,32], index: 3, kind: input, shape index: {}]
  %s4 = inlined_call_operand.vmem [shape: f32[1,32], index: 4, kind: input, shape index: {}]
  %s5 = inlined_call_operand.vmem [shape: bf16[3,16,32], index: 5, kind: output, shape index: {}]
  %s6 = sld [smem:[#allocation0]]
  $region53: #{whisper_encoder_forward.15} parent=0
    _
  %s8 = ssub.s32 1, %s6
  %s9 = scalar_select 0, %s8, %s6
  loop: start=0, step=1, limit=5
  $region2: #{whisper_encoder_forward.15} parent=0 // loop_pre_header
    _
  $region3: #{whisper_encoder_forward.15} parent=0 // loop_header
    %s11 = sphi 0, %s15
    %p12 = scmp.ge.s32.totalorder %s11, 5
    %s18 = sphi 0, %s37
    %s19 = sphi 0, %s33
    %s20 = sphi 0, %s29
    %s21 = sphi 0, %s18
    %s22 = sphi 0, %s19
    %s23 = sphi 0, %s20
    %s24 = sphi 0, %s21
    %s25 = sphi 0, %s22
    %s26 = sphi 0, %s23
    %s40 = sphi 0, %s42
    %s43 = sphi 0, %s40
    %s44 = sphi 0, %s43
    %s60 = sphi 0, %s44
    %s68 = sphi 0, %s70
    %s71 = sphi 0, %s68
    %s72 = sphi 0, %s71
    %s88 = sphi 0, %s72
    %s96 = sphi 0, %s98
    %s99 = sphi 0, %s96
    %s100 = sphi 0, %s99
    %s116 = sphi 0, %s100
    %s120 = sphi 0, %s120
    %s122 = sphi 0, %s120
    %s123 = sphi 0, %s122
    %s137 = sphi 0, %s123
    %s141 = sphi 0, %s141
    %s143 = sphi 0, %s141
    %s144 = sphi 0, %s143
    %s158 = sphi 0, %s144
    %s168 = sphi 0, %s170
    %s171 = sphi 0, %s168
    %s172 = sphi 0, %s171
    %s188 = sphi 0, %s172
  $region4: #{whisper_encoder_forward.15} parent=0 // loop_header_branch
    %14 = sbr.rel (%p12) target = $region8
  $region5: #{whisper_encoder_forward.15} parent=0 // loop_body
    %s16 = ssub.s32 %s11, 1
    %s17 = ssub.s32 %s11, 2
    %s27 = sadd.s32 1, %s20
    %p28 = scmp.ge.s32.totalorder %s27, 1
    %s29 = scalar_select %p28, 0, %s27
    %s30 = sadd.s32 1, %s19
    %s31 = scalar_select %p28, %s30, %s19
    %p32 = scmp.ge.s32.totalorder %s31, 1
    %s33 = scalar_select %p32, 0, %s31
    %s34 = sadd.s32 1, %s18
    %s35 = scalar_select %p32, %s34, %s18
    %p36 = scmp.ge.s32.totalorder %s35, 3
    %s37 = scalar_select %p36, 0, %s35
    %s38 = ssub.s32 %s19, %s33
    %p39 = scmp.eq.s32.totalorder %s38, 0
    %s41 = sadd.s32 %s40, 1
    %s42 = scalar_select %p39, %s40, %s41
    %p45 = pneg %p39
    %p46 = scmp.eq.s32.totalorder %s11, 2
    %p47 = por %p45, %p46
    %p48 = scmp.ne.s32.totalorder %s40, %s43
    %p49 = scmp.eq.s32.totalorder %s11, 0
    %p50 = por %p48, %p49
    %p51 = scmp.ne.s32.totalorder %s40, %s43
    %p52 = scmp.eq.s32.totalorder %s16, 2
    %p53 = por %p51, %p52
    %p54 = scmp.ne.s32.totalorder %s43, %s44
    %p55 = scmp.eq.s32.totalorder %s16, 0
    %p56 = por %p54, %p55
    %p57 = scmp.ne.s32.totalorder %s43, %s44
    %p58 = scmp.eq.s32.totalorder %s17, 2
    %p59 = por %p57, %p58
    %p61 = scmp.ne.s32.totalorder %s44, %s60
    %p62 = scmp.eq.s32.totalorder %s17, 0
    %p63 = por %p61, %p62
    %s64 = ssub.s32 %s18, %s37
    %s65 = ssub.s32 %s20, %s29
    %s66 = sor.u32 %s64, %s65
    %p67 = scmp.eq.s32.totalorder %s66, 0
    %s69 = sadd.s32 %s68, 1
    %s70 = scalar_select %p67, %s68, %s69
    %p73 = pneg %p67
    %p74 = scmp.eq.s32.totalorder %s11, 2
    %p75 = por %p73, %p74
    %p76 = scmp.ne.s32.totalorder %s68, %s71
    %p77 = scmp.eq.s32.totalorder %s11, 0
    %p78 = por %p76, %p77
    %p79 = scmp.ne.s32.totalorder %s68, %s71
    %p80 = scmp.eq.s32.totalorder %s16, 2
    %p81 = por %p79, %p80
    %p82 = scmp.ne.s32.totalorder %s71, %s72
    %p83 = scmp.eq.s32.totalorder %s16, 0
    %p84 = por %p82, %p83
    %p85 = scmp.ne.s32.totalorder %s71, %s72
    %p86 = scmp.eq.s32.totalorder %s17, 2
    %p87 = por %p85, %p86
    %p89 = scmp.ne.s32.totalorder %s72, %s88
    %p90 = scmp.eq.s32.totalorder %s17, 0
    %p91 = por %p89, %p90
    %s92 = ssub.s32 %s18, %s37
    %s93 = ssub.s32 %s20, %s29
    %s94 = sor.u32 %s92, %s93
    %p95 = scmp.eq.s32.totalorder %s94, 0
    %s97 = sadd.s32 %s96, 1
    %s98 = scalar_select %p95, %s96, %s97
    %p101 = pneg %p95
    %p102 = scmp.eq.s32.totalorder %s11, 2
    %p103 = por %p101, %p102
    %p104 = scmp.ne.s32.totalorder %s96, %s99
    %p105 = scmp.eq.s32.totalorder %s11, 0
    %p106 = por %p104, %p105
    %p107 = scmp.ne.s32.totalorder %s96, %s99
    %p108 = scmp.eq.s32.totalorder %s16, 2
    %p109 = por %p107, %p108
    %p110 = scmp.ne.s32.totalorder %s99, %s100
    %p111 = scmp.eq.s32.totalorder %s16, 0
    %p112 = por %p110, %p111
    %p113 = scmp.ne.s32.totalorder %s99, %s100
    %p114 = scmp.eq.s32.totalorder %s17, 2
    %p115 = por %p113, %p114
    %p117 = scmp.ne.s32.totalorder %s100, %s116
    %p118 = scmp.eq.s32.totalorder %s17, 0
    %p119 = por %p117, %p118
    %s121 = sadd.s32 %s120, 1
    %p124 = scmp.eq.s32.totalorder %s11, 2
    %p125 = scmp.ne.s32.totalorder %s120, %s122
    %p126 = scmp.eq.s32.totalorder %s11, 0
    %p127 = por %p125, %p126
    %p128 = scmp.ne.s32.totalorder %s120, %s122
    %p129 = scmp.eq.s32.totalorder %s16, 2
    %p130 = por %p128, %p129
    %p131 = scmp.ne.s32.totalorder %s122, %s123
    %p132 = scmp.eq.s32.totalorder %s16, 0
    %p133 = por %p131, %p132
    %p134 = scmp.ne.s32.totalorder %s122, %s123
    %p135 = scmp.eq.s32.totalorder %s17, 2
    %p136 = por %p134, %p135
    %p138 = scmp.ne.s32.totalorder %s123, %s137
    %p139 = scmp.eq.s32.totalorder %s17, 0
    %p140 = por %p138, %p139
    %s142 = sadd.s32 %s141, 1
    %p145 = scmp.eq.s32.totalorder %s11, 2
    %p146 = scmp.ne.s32.totalorder %s141, %s143
    %p147 = scmp.eq.s32.totalorder %s11, 0
    %p148 = por %p146, %p147
    %p149 = scmp.ne.s32.totalorder %s141, %s143
    %p150 = scmp.eq.s32.totalorder %s16, 2
    %p151 = por %p149, %p150
    %p152 = scmp.ne.s32.totalorder %s143, %s144
    %p153 = scmp.eq.s32.totalorder %s16, 0
    %p154 = por %p152, %p153
    %p155 = scmp.ne.s32.totalorder %s143, %s144
    %p156 = scmp.eq.s32.totalorder %s17, 2
    %p157 = por %p155, %p156
    %p159 = scmp.ne.s32.totalorder %s144, %s158
    %p160 = scmp.eq.s32.totalorder %s17, 0
    %p161 = por %p159, %p160
    %s162 = ssub.s32 %s18, %s37
    %s163 = ssub.s32 %s19, %s33
    %s164 = sor.u32 %s162, %s163
    %s165 = ssub.s32 %s20, %s29
    %s166 = sor.u32 %s164, %s165
    %p167 = scmp.eq.s32.totalorder %s166, 0
    %s169 = sadd.s32 %s168, 1
    %s170 = scalar_select %p167, %s168, %s169
    %p173 = pneg %p167
    %p174 = scmp.eq.s32.totalorder %s11, 2
    %p175 = por %p173, %p174
    %p176 = scmp.ne.s32.totalorder %s168, %s171
    %p177 = scmp.eq.s32.totalorder %s11, 0
    %p178 = por %p176, %p177
    %p179 = scmp.ne.s32.totalorder %s168, %s171
    %p180 = scmp.eq.s32.totalorder %s16, 2
    %p181 = por %p179, %p180
    %p182 = scmp.ne.s32.totalorder %s171, %s172
    %p183 = scmp.eq.s32.totalorder %s16, 0
    %p184 = por %p182, %p183
    %p185 = scmp.ne.s32.totalorder %s171, %s172
    %p186 = scmp.eq.s32.totalorder %s17, 2
    %p187 = por %p185, %p186
    %p189 = scmp.ne.s32.totalorder %s172, %s188
    %p190 = scmp.eq.s32.totalorder %s17, 0
    %p191 = por %p189, %p190
    %p192 = scmp.le.s32.totalorder 1, %s11
    %p193 = scmp.lt.s32.totalorder %s11, 4
    %p194 = pnand %p192, %p193
    %p195 = pneg %p194
    // Predicated region
    $region9: #{whisper_encoder_forward.15} parent=5 // pred_check
      _
    $region10: #{whisper_encoder_forward.15} parent=5 // pred_check_branch
      %197 = sbr.rel (%p194) target = $region12
    $region11: #{whisper_encoder_forward.15} parent=5 // pred_region
      %s198 = ssub.s32 %s11, 1
      // Predicated region
      $region13: #{whisper_encoder_forward.15} parent=11 // pred_check
        %p199 = pneg %p56
      $region14: #{whisper_encoder_forward.15} parent=11 // pred_check_branch
        %201 = sbr.rel (%p199) target = $region16
      $region15: #{whisper_encoder_forward.15} parent=11 // pred_region
        %s202 = smul.u32 2, %s22
        %p203 = scmp.lt.s32.totalorder %s202, 1
        %s204 = scalar_select %p203, %s202, 1
        %s205 = smul.addr %s204, 4
        %s206 = scalar_lea.vmem %s0, %s205
        %s207 = smul.u32 2, %s22
      $region16: #{whisper_encoder_forward.15} parent=11 // pred_fallthru
        _
      // Predicated region
      $region17: #{whisper_encoder_forward.15} parent=11 // pred_check
        %p208 = pneg %p133
      $region18: #{whisper_encoder_forward.15} parent=11 // pred_check_branch
        %210 = sbr.rel (%p208) target = $region20
      $region19: #{whisper_encoder_forward.15} parent=11 // pred_region
        _
      $region20: #{whisper_encoder_forward.15} parent=11 // pred_fallthru
        _
      // Predicated region
      $region21: #{whisper_encoder_forward.15} parent=11 // pred_check
        %p211 = pneg %p154
      $region22: #{whisper_encoder_forward.15} parent=11 // pred_check_branch
        %213 = sbr.rel (%p211) target = $region24
      $region23: #{whisper_encoder_forward.15} parent=11 // pred_region
        _
      $region24: #{whisper_encoder_forward.15} parent=11 // pred_fallthru
        _
    $region12: #{whisper_encoder_forward.15} parent=5 // pred_fallthru
      _
    %p214 = scmp.lt.s32.totalorder %s11, 3
    // Predicated region
    $region25: #{whisper_encoder_forward.15} parent=5 // pred_check
      %p215 = pneg %p214
    $region26: #{whisper_encoder_forward.15} parent=5 // pred_check_branch
      %217 = sbr.rel (%p215) target = $region28
    $region27: #{whisper_encoder_forward.15} parent=5 // pred_region
      // Predicated region
      $region29: #{whisper_encoder_forward.15} parent=27 // pred_check
        %p218 = pneg %p78
      $region30: #{whisper_encoder_forward.15} parent=27 // pred_check_branch
        %220 = sbr.rel (%p218) target = $region32
      $region31: #{whisper_encoder_forward.15} parent=27 // pred_region
        %p221 = scmp.lt.s32.totalorder %s18, 2
        %s222 = scalar_select %p221, %s18, 2
        %p223 = scmp.lt.s32.totalorder %s20, 0
        %s224 = scalar_select %p223, %s20, 0
        %s225 = smul.addr %s222, 4
        %s226 = sadd.s32 %s224, %s225
        %s227 = smul.addr %s226, 4
        %s228 = scalar_lea.vmem %s1, %s227
      $region32: #{whisper_encoder_forward.15} parent=27 // pred_fallthru
        _
      // Predicated region
      $region33: #{whisper_encoder_forward.15} parent=27 // pred_check
        %p229 = pneg %p106
      $region34: #{whisper_encoder_forward.15} parent=27 // pred_check_branch
        %231 = sbr.rel (%p229) target = $region36
      $region35: #{whisper_encoder_forward.15} parent=27 // pred_region
        %p232 = scmp.lt.s32.totalorder %s18, 2
        %s233 = scalar_select %p232, %s18, 2
        %p234 = scmp.lt.s32.totalorder %s20, 0
        %s235 = scalar_select %p234, %s20, 0
        %s236 = sadd.s32 %s235, %s233
        %s237 = scalar_lea.vmem %s2, %s236
      $region36: #{whisper_encoder_forward.15} parent=27 // pred_fallthru
        _
    $region28: #{whisper_encoder_forward.15} parent=5 // pred_fallthru
      _
    %p238 = scmp.le.s32.totalorder 1, %s11
    %p239 = scmp.lt.s32.totalorder %s11, 4
    %p240 = pnand %p238, %p239
    %p241 = pneg %p240
    // Predicated region
    $region37: #{whisper_encoder_forward.15} parent=5 // pred_check
      _
    $region38: #{whisper_encoder_forward.15} parent=5 // pred_check_branch
      %243 = sbr.rel (%p240) target = $region40
    $region39: #{whisper_encoder_forward.15} parent=5 // pred_region
      %s244 = ssub.s32 %s11, 1
      %s245 = smul.u32 2, %s22
      %p246 = scmp.lt.s32.totalorder %s245, 1
      %s247 = scalar_select %p246, %s245, 1
      %s248 = smul.addr %s247, 4
      %s249 = scalar_lea.vmem %s0, %s248
      %p250 = pneg %p56
      %p251 = pneg %p53
      %p252 = scmp.lt.s32.totalorder %s21, 2
      %s253 = scalar_select %p252, %s21, 2
      %p254 = scmp.lt.s32.totalorder %s23, 0
      %s255 = scalar_select %p254, %s23, 0
      %s256 = smul.addr %s253, 4
      %s257 = sadd.s32 %s255, %s256
      %s258 = smul.addr %s257, 4
      %s259 = scalar_lea.vmem %s1, %s258
      %p260 = pneg %p84
      %p261 = pneg %p81
      %p262 = scmp.lt.s32.totalorder %s21, 2
      %s263 = scalar_select %p262, %s21, 2
      %p264 = scmp.lt.s32.totalorder %s23, 0
      %s265 = scalar_select %p264, %s23, 0
      %s266 = sadd.s32 %s265, %s263
      %s267 = scalar_lea.vmem %s2, %s266
      %p268 = pneg %p112
      %p269 = pneg %p109
      %p270 = pneg %p133
      %p271 = pneg %p130
      %p272 = pneg %p154
      %p273 = pneg %p151
      %p274 = pneg %p184
      %p275 = pneg %p181
      %s276 = smul.u32 2, %s22
      %p277 = scmp.lt.s32.totalorder %s21, 2
      %s278 = scalar_select %p277, %s21, 2
      %p279 = scmp.lt.s32.totalorder %s276, 1
      %s280 = scalar_select %p279, %s276, 1
      %p281 = scmp.lt.s32.totalorder %s23, 0
      %s282 = scalar_select %p281, %s23, 0
      %s283 = sadd.s32 %s282, %s280
      %s284 = smul.addr %s278, 2
      %s285 = sadd.s32 %s283, %s284
      %s286 = smul.addr %s285, 4
      %s287 = scalar_lea.vmem %s5, %s286
      %s288 = smul.u32 2, %s22
      %p289 = scmp.lt.s32.totalorder %s288, 1
      %s290 = scalar_select %p289, %s288, 1
      %s291 = smul.addr %s290, 4
      %s292 = scalar_lea.vmem %s0, %s291
      %s293 = smul.u32 2, %s22
      %p294 = scmp.lt.s32.totalorder %s21, 2
      %s295 = scalar_select %p294, %s21, 2
      %p296 = scmp.lt.s32.totalorder %s23, 0
      %s297 = scalar_select %p296, %s23, 0
      %s298 = smul.addr %s295, 4
      %s299 = sadd.s32 %s297, %s298
      %s300 = smul.addr %s299, 4
      %s301 = scalar_lea.vmem %s1, %s300
      %p302 = scmp.lt.s32.totalorder %s21, 2
      %s303 = scalar_select %p302, %s21, 2
      %p304 = scmp.lt.s32.totalorder %s23, 0
      %s305 = scalar_select %p304, %s23, 0
      %s306 = sadd.s32 %s305, %s303
      %s307 = scalar_lea.vmem %s2, %s306
      %s308 = smul.u32 2, %s22
      %p309 = scmp.lt.s32.totalorder %s21, 2
      %s310 = scalar_select %p309, %s21, 2
      %p311 = scmp.lt.s32.totalorder %s308, 1
      %s312 = scalar_select %p311, %s308, 1
      %p313 = scmp.lt.s32.totalorder %s23, 0
      %s314 = scalar_select %p313, %s23, 0
      %s315 = sadd.s32 %s314, %s312
      %s316 = smul.addr %s310, 2
      %s317 = sadd.s32 %s315, %s316
      %s318 = smul.addr %s317, 4
      %s319 = scalar_lea.vmem %s5, %s318
      %s320 = smul.u32 2, %s22
      %v322 = vld [vmem:[%s292] sm:$0xf]
      %v323 = vld [vmem:[%s292 + $0x4] sm:$0xf]
      %v324 = vunpack.c.l.bf16 %v322
      %v325 = vunpack.c.l.bf16 %v323
      %vm326 = vcmask 261120
      %v327 = vsel %vm326, %v324, 0.0
      %328 = vadd.xlane.f32.xlu0 %v327
      %v329 = vpop.xlane.xlu0 %328
      %v330 = vsel %vm326, %v325, 0.0
      %331 = vadd.xlane.f32.xlu0 %v330
      %v332 = vpop.xlane.xlu0 %331
      %v333 = vrcp.pop 32.0
      %v334 = vmul.f32 %v329, %v333
      %v335 = vmul.f32 %v332, %v333
      %v336 = vsub.f32 %v324, %v334
      %v337 = vsub.f32 %v325, %v335
      %v338 = vmul.f32 %v336, %v336
      %v339 = vmul.f32 %v337, %v337
      %v340 = vsel %vm326, %v338, 0.0
      %341 = vadd.xlane.f32.xlu0 %v340
      %v342 = vpop.xlane.xlu0 %341
      %v343 = vsel %vm326, %v339, 0.0
      %344 = vadd.xlane.f32.xlu0 %v343
      %v345 = vpop.xlane.xlu0 %344
      %v346 = vmul.f32 %v342, %v333
      %v347 = vmul.f32 %v345, %v333
      %v348 = vadd.f32 %v346, 1e-05
      %v349 = vadd.f32 %v347, 1e-05
      %v350 = vrsqrt.pop %v348
      %v351 = vrsqrt.pop %v349
      %v352 = vmul.f32 %v336, %v350
      %v353 = vmul.f32 %v337, %v351
      %v354 = vld [vmem:[%s3] sm:$0x1]
      %v356 = vlaneseq
      %v357 = vshrl.u32 %v356, 7
      %v358 = vsub.s32 0, %v357
      %v359 = vrot.slane %v354, %v358
      %v361 = vmul.f32 %v352, %v359
      %v362 = vmul.f32 %v353, %v359
      %v363 = vld [vmem:[%s4] sm:$0x1]
      %v365 = vlaneseq
      %v366 = vshrl.u32 %v365, 7
      %v367 = vsub.s32 0, %v366
      %v368 = vrot.slane %v363, %v367
      %v370 = vadd.f32 %v361, %v368
      %v371 = vadd.f32 %v362, %v368
      %v372 = vpack.c.bf16 %v371, %v370
      %v373 = vld [vmem:[%s301] sm:$0xf]
      %v374 = vld [vmem:[%s301 + $0x4] sm:$0xf]
      %v375 = vld [vmem:[%s301 + $0x8] sm:$0xf]
      %v376 = vld [vmem:[%s301 + $0xc] sm:$0xf]
      %v377 = vld [vmem:[%s307] sm:$0x1]
      %v379 = vlaneseq
      %v380 = vshrl.u32 %v379, 7
      %v381 = vsub.s32 0, %v380
      %v382 = vrot.slane %v377, %v381
      %v388 = vunpack.c.l.b16 %v373
      %v389 = vunpack.c.l.b16 %v374
      %v390 = vunpack.c.l.b16 %v375
      %v391 = vunpack.c.l.b16 %v376
      %v392 = vpack.c.b16 %v389, %v388
      %v393 = vpack.c.b16 %v391, %v390
      %v397 = vsel %vm326, %v372, 0
      %399 = vmatprep.subr.bf16.mxu0 0
      %400 = vmatpush1.bf16.msra.mxu0 %v392
      %401 = vmatprep.subr.bf16.mxu0 0
      %402 = vmatpush1.bf16.msra.mxu0 %v393
      %403 = vmatprep.subr.bf16.mxu0 0
      %404 = vmatpush1.bf16.msra.mxu0 0
      %405 = vmatprep.subr.bf16.mxu0 0
      %406 = vmatpush1.bf16.msra.mxu0 0
      %407 = vmatprep.subr.bf16.mxu0 0
      %408 = vmatpush1.bf16.msra.mxu0 0
      %409 = vmatprep.subr.bf16.mxu0 0
      %410 = vmatpush1.bf16.msra.mxu0 0
      %411 = vmatprep.subr.bf16.mxu0 0
      %412 = vmatpush1.bf16.msra.mxu0 0
      %413 = vmatprep.subr.bf16.mxu0 0
      %414 = vmatpush1.bf16.msra.mxu0 0
      %415 = vmatprep.subr.bf16.mxu0 0
      %416 = vmatpush1.bf16.msra.mxu0 0
      %417 = vmatprep.subr.bf16.mxu0 0
      %418 = vmatpush1.bf16.msra.mxu0 0
      %419 = vmatprep.subr.bf16.mxu0 0
      %420 = vmatpush1.bf16.msra.mxu0 0
      %421 = vmatprep.subr.bf16.mxu0 0
      %422 = vmatpush1.bf16.msra.mxu0 0
      %423 = vmatprep.subr.bf16.mxu0 0
      %424 = vmatpush1.bf16.msra.mxu0 0
      %425 = vmatprep.subr.bf16.mxu0 0
      %426 = vmatpush1.bf16.msra.mxu0 0
      %427 = vmatprep.subr.bf16.mxu0 0
      %428 = vmatpush1.bf16.msra.mxu0 0
      %429 = vmatprep.subr.bf16.mxu0 0
      %430 = vmatpush1.bf16.msra.mxu0 0
      %431 = vmatprep.mubr.bf16.mxu0 0
      %432 = vmatmul.mubr.bf16.gmra.mrb[0].mxu0 %v397
      %v433 = vpop.f32.mrb[0].mxu0
      %v434 = vadd.f32 %v382, %v433
      %v435 = vpop.f32.mrb[0].mxu0
      %v436 = vpop.f32.mrb[0].mxu0
      %v437 = vadd.f32 %v382, %v436
      %v438 = vpop.f32.mrb[0].mxu0
      %439 = vdwg.mxu0
      %v440 = vpack.c.bf16 %v437, %v434
      %v442 = vunpack.c.l.b16 %v440
      %v443 = vunpack.c.h.b16 %v440
      %v444 = vpack.c.b16 %v442, %v442
      %v445 = vpack.c.b16 %v443, %v443
      %vm448 = vcmask 257024
      %449 = vst.msk [vmem:[%s319] sm:$0xf] %vm448, %v444
      %450 = vst.msk [vmem:[%s319 + $0x4] sm:$0xf] %vm448, %v445
      %s451 = smul.u32 2, %s22
      %p452 = scmp.lt.s32.totalorder %s21, 2
      %s453 = scalar_select %p452, %s21, 2
      %p454 = scmp.lt.s32.totalorder %s451, 1
      %s455 = scalar_select %p454, %s451, 1
      %p456 = scmp.lt.s32.totalorder %s23, 0
      %s457 = scalar_select %p456, %s23, 0
      %s458 = sadd.s32 %s457, %s455
      %s459 = smul.addr %s453, 2
      %s460 = sadd.s32 %s458, %s459
      %s461 = smul.addr %s460, 4
      %s462 = scalar_lea.vmem %s5, %s461
      // Predicated region
      $region41: #{whisper_encoder_forward.15} parent=39 // pred_check
        %p463 = pneg %p181
      $region42: #{whisper_encoder_forward.15} parent=39 // pred_check_branch
        %465 = sbr.rel (%p463) target = $region44
      $region43: #{whisper_encoder_forward.15} parent=39 // pred_region
        %s466 = smul.u32 2, %s22
      $region44: #{whisper_encoder_forward.15} parent=39 // pred_fallthru
        _
    $region40: #{whisper_encoder_forward.15} parent=5 // pred_fallthru
      _
    %p467 = scmp.le.s32.totalorder 2, %s11
    // Predicated region
    $region45: #{whisper_encoder_forward.15} parent=5 // pred_check
      %p468 = pneg %p467
    $region46: #{whisper_encoder_forward.15} parent=5 // pred_check_branch
      %470 = sbr.rel (%p468) target = $region48
    $region47: #{whisper_encoder_forward.15} parent=5 // pred_region
      %s471 = ssub.s32 %s11, 2
      // Predicated region
      $region49: #{whisper_encoder_forward.15} parent=47 // pred_check
        %p472 = pneg %p187
      $region50: #{whisper_encoder_forward.15} parent=47 // pred_check_branch
        %474 = sbr.rel (%p472) target = $region52
      $region51: #{whisper_encoder_forward.15} parent=47 // pred_region
        %s475 = smul.u32 2, %s25
        %p476 = scmp.lt.s32.totalorder %s24, 2
        %s477 = scalar_select %p476, %s24, 2
        %p478 = scmp.lt.s32.totalorder %s475, 1
        %s479 = scalar_select %p478, %s475, 1
        %p480 = scmp.lt.s32.totalorder %s26, 0
        %s481 = scalar_select %p480, %s26, 0
        %s482 = sadd.s32 %s481, %s479
        %s483 = smul.addr %s477, 2
        %s484 = sadd.s32 %s482, %s483
        %s485 = smul.addr %s484, 4
        %s486 = scalar_lea.vmem %s5, %s485
      $region52: #{whisper_encoder_forward.15} parent=47 // pred_fallthru
        _
    $region48: #{whisper_encoder_forward.15} parent=5 // pred_fallthru
      _
  $region6: #{whisper_encoder_forward.15} parent=0 // loop_footer
    %s15 = sadd.s32 1, %s11
  $region7: #{whisper_encoder_forward.15} parent=0 // loop_footer_branch
    %10 = sbr.rel target = $region3
  $region8: #{whisper_encoder_forward.15} parent=0 // loop_exit
    _

// kernel: whisper_encoder_forward.16
$region0: #{whisper_encoder_forward.16}
  #allocation0 [shape = 'u32[]', space=smem, size = 0x4, offset = 0x4, fixed_abs, tag = 'smem constant byte address 0x4 - core index']
  #allocation1 [shape = 'u32[144,128]{1,0:T(1,128)}', space=vmem, size = 0x12000, scoped, tag = 'internal scratch']
  #allocation2 [shape = 'f32[4,8,1]{2,1,0:T(8,128)}', space=vmem, size = 0x4000, scoped, tag = 'scratch operand']
  #allocation3 [shape = 'f32[4,8,1]{2,1,0:T(8,128)}', space=vmem, size = 0x4000, scoped, tag = 'scratch operand']
  #allocation4 [shape = 'f32[4,8,8]{2,1,0:T(8,128)}', space=vmem, size = 0x4000, scoped, tag = 'scratch operand']
  %s0 = inlined_call_operand.vmem [shape: bf16[3,2,8,32], index: 0, kind: input, shape index: {}, may-alias: {0,1,2}]
  %s1 = inlined_call_operand.vmem [shape: bf16[3,2,8,32], index: 1, kind: input, shape index: {}, may-alias: {0,1,2}]
  %s2 = inlined_call_operand.vmem [shape: bf16[3,2,8,32], index: 2, kind: input, shape index: {}, may-alias: {0,1,2}]
  %s3 = inlined_call_operand.vmem [shape: bf16[2,8,32], index: 3, kind: output, shape index: {}]
  %s4 = sld [smem:[#allocation0]]
  $region53: #{whisper_encoder_forward.16} parent=0
    _
  %s6 = ssub.s32 1, %s4
  %s7 = scalar_select 0, %s6, %s4
  loop: start=0, step=1, limit=4
  $region2: #{whisper_encoder_forward.16} parent=0 // loop_pre_header
    _
  $region3: #{whisper_encoder_forward.16} parent=0 // loop_header
    %s9 = sphi 0, %s13
    %p10 = scmp.ge.s32.totalorder %s9, 4
    %s16 = sphi 0, %s42
    %s17 = sphi 0, %s38
    %s18 = sphi 0, %s34
    %s19 = sphi 0, %s30
    %s20 = sphi 0, %s16
    %s21 = sphi 0, %s17
    %s22 = sphi 0, %s18
    %s23 = sphi 0, %s19
    %s24 = sphi 0, %s20
    %s25 = sphi 0, %s21
    %s26 = sphi 0, %s22
    %s27 = sphi 0, %s23
    %s49 = sphi 0, %s51
    %s52 = sphi 0, %s49
    %s53 = sphi 0, %s52
    %s69 = sphi 0, %s53
    %s79 = sphi 0, %s81
    %s82 = sphi 0, %s79
    %s83 = sphi 0, %s82
    %s99 = sphi 0, %s83
    %s109 = sphi 0, %s111
    %s112 = sphi 0, %s109
    %s113 = sphi 0, %s112
    %s129 = sphi 0, %s113
    %s139 = sphi 0, %s141
    %s142 = sphi 0, %s139
    %s143 = sphi 0, %s142
    %s159 = sphi 0, %s143
  $region4: #{whisper_encoder_forward.16} parent=0 // loop_header_branch
    %12 = sbr.rel (%p10) target = $region8
  $region5: #{whisper_encoder_forward.16} parent=0 // loop_body
    %s14 = ssub.s32 %s9, 1
    %s15 = ssub.s32 %s9, 2
    %s28 = sadd.s32 1, %s19
    %p29 = scmp.ge.s32.totalorder %s28, 1
    %s30 = scalar_select %p29, 0, %s28
    %s31 = sadd.s32 1, %s18
    %s32 = scalar_select %p29, %s31, %s18
    %p33 = scmp.ge.s32.totalorder %s32, 1
    %s34 = scalar_select %p33, 0, %s32
    %s35 = sadd.s32 1, %s17
    %s36 = scalar_select %p33, %s35, %s17
    %p37 = scmp.ge.s32.totalorder %s36, 1
    %s38 = scalar_select %p37, 0, %s36
    %s39 = sadd.s32 1, %s16
    %s40 = scalar_select %p37, %s39, %s16
    %p41 = scmp.ge.s32.totalorder %s40, 2
    %s42 = scalar_select %p41, 0, %s40
    %s43 = ssub.s32 %s16, %s42
    %s44 = ssub.s32 %s18, %s34
    %s45 = sor.u32 %s43, %s44
    %s46 = ssub.s32 %s17, %s38
    %s47 = sor.u32 %s45, %s46
    %p48 = scmp.eq.s32.totalorder %s47, 0
    %s50 = sadd.s32 %s49, 1
    %s51 = scalar_select %p48, %s49, %s50
    %p54 = pneg %p48
    %p55 = scmp.eq.s32.totalorder %s9, 1
    %p56 = por %p54, %p55
    %p57 = scmp.ne.s32.totalorder %s49, %s52
    %p58 = scmp.eq.s32.totalorder %s9, 0
    %p59 = por %p57, %p58
    %p60 = scmp.ne.s32.totalorder %s49, %s52
    %p61 = scmp.eq.s32.totalorder %s14, 1
    %p62 = por %p60, %p61
    %p63 = scmp.ne.s32.totalorder %s52, %s53
    %p64 = scmp.eq.s32.totalorder %s14, 0
    %p65 = por %p63, %p64
    %p66 = scmp.ne.s32.totalorder %s52, %s53
    %p67 = scmp.eq.s32.totalorder %s15, 1
    %p68 = por %p66, %p67
    %p70 = scmp.ne.s32.totalorder %s53, %s69
    %p71 = scmp.eq.s32.totalorder %s15, 0
    %p72 = por %p70, %p71
    %s73 = ssub.s32 %s16, %s42
    %s74 = ssub.s32 %s19, %s30
    %s75 = sor.u32 %s73, %s74
    %s76 = ssub.s32 %s17, %s38
    %s77 = sor.u32 %s75, %s76
    %p78 = scmp.eq.s32.totalorder %s77, 0
    %s80 = sadd.s32 %s79, 1
    %s81 = scalar_select %p78, %s79, %s80
    %p84 = pneg %p78
    %p85 = scmp.eq.s32.totalorder %s9, 1
    %p86 = por %p84, %p85
    %p87 = scmp.ne.s32.totalorder %s79, %s82
    %p88 = scmp.eq.s32.totalorder %s9, 0
    %p89 = por %p87, %p88
    %p90 = scmp.ne.s32.totalorder %s79, %s82
    %p91 = scmp.eq.s32.totalorder %s14, 1
    %p92 = por %p90, %p91
    %p93 = scmp.ne.s32.totalorder %s82, %s83
    %p94 = scmp.eq.s32.totalorder %s14, 0
    %p95 = por %p93, %p94
    %p96 = scmp.ne.s32.totalorder %s82, %s83
    %p97 = scmp.eq.s32.totalorder %s15, 1
    %p98 = por %p96, %p97
    %p100 = scmp.ne.s32.totalorder %s83, %s99
    %p101 = scmp.eq.s32.totalorder %s15, 0
    %p102 = por %p100, %p101
    %s103 = ssub.s32 %s16, %s42
    %s104 = ssub.s32 %s19, %s30
    %s105 = sor.u32 %s103, %s104
    %s106 = ssub.s32 %s17, %s38
    %s107 = sor.u32 %s105, %s106
    %p108 = scmp.eq.s32.totalorder %s107, 0
    %s110 = sadd.s32 %s109, 1
    %s111 = scalar_select %p108, %s109, %s110
    %p114 = pneg %p108
    %p115 = scmp.eq.s32.totalorder %s9, 1
    %p116 = por %p114, %p115
    %p117 = scmp.ne.s32.totalorder %s109, %s112
    %p118 = scmp.eq.s32.totalorder %s9, 0
    %p119 = por %p117, %p118
    %p120 = scmp.ne.s32.totalorder %s109, %s112
    %p121 = scmp.eq.s32.totalorder %s14, 1
    %p122 = por %p120, %p121
    %p123 = scmp.ne.s32.totalorder %s112, %s113
    %p124 = scmp.eq.s32.totalorder %s14, 0
    %p125 = por %p123, %p124
    %p126 = scmp.ne.s32.totalorder %s112, %s113
    %p127 = scmp.eq.s32.totalorder %s15, 1
    %p128 = por %p126, %p127
    %p130 = scmp.ne.s32.totalorder %s113, %s129
    %p131 = scmp.eq.s32.totalorder %s15, 0
    %p132 = por %p130, %p131
    %s133 = ssub.s32 %s16, %s42
    %s134 = ssub.s32 %s18, %s34
    %s135 = sor.u32 %s133, %s134
    %s136 = ssub.s32 %s17, %s38
    %s137 = sor.u32 %s135, %s136
    %p138 = scmp.eq.s32.totalorder %s137, 0
    %s140 = sadd.s32 %s139, 1
    %s141 = scalar_select %p138, %s139, %s140
    %p144 = pneg %p138
    %p145 = scmp.eq.s32.totalorder %s9, 1
    %p146 = por %p144, %p145
    %p147 = scmp.ne.s32.totalorder %s139, %s142
    %p148 = scmp.eq.s32.totalorder %s9, 0
    %p149 = por %p147, %p148
    %p150 = scmp.ne.s32.totalorder %s139, %s142
    %p151 = scmp.eq.s32.totalorder %s14, 1
    %p152 = por %p150, %p151
    %p153 = scmp.ne.s32.totalorder %s142, %s143
    %p154 = scmp.eq.s32.totalorder %s14, 0
    %p155 = por %p153, %p154
    %p156 = scmp.ne.s32.totalorder %s142, %s143
    %p157 = scmp.eq.s32.totalorder %s15, 1
    %p158 = por %p156, %p157
    %p160 = scmp.ne.s32.totalorder %s143, %s159
    %p161 = scmp.eq.s32.totalorder %s15, 0
    %p162 = por %p160, %p161
    %p163 = scmp.le.s32.totalorder 1, %s9
    %p164 = scmp.lt.s32.totalorder %s9, 3
    %p165 = pnand %p163, %p164
    %p166 = pneg %p165
    // Predicated region
    $region9: #{whisper_encoder_forward.16} parent=5 // pred_check
      _
    $region10: #{whisper_encoder_forward.16} parent=5 // pred_check_branch
      %168 = sbr.rel (%p165) target = $region12
    $region11: #{whisper_encoder_forward.16} parent=5 // pred_region
      %s169 = ssub.s32 %s9, 1
    $region12: #{whisper_encoder_forward.16} parent=5 // pred_fallthru
      _
    %p170 = scmp.lt.s32.totalorder %s9, 2
    // Predicated region
    $region13: #{whisper_encoder_forward.16} parent=5 // pred_check
      %p171 = pneg %p170
    $region14: #{whisper_encoder_forward.16} parent=5 // pred_check_branch
      %173 = sbr.rel (%p171) target = $region16
    $region15: #{whisper_encoder_forward.16} parent=5 // pred_region
      // Predicated region
      $region17: #{whisper_encoder_forward.16} parent=15 // pred_check
        %p174 = pneg %p59
      $region18: #{whisper_encoder_forward.16} parent=15 // pred_check_branch
        %176 = sbr.rel (%p174) target = $region20
      $region19: #{whisper_encoder_forward.16} parent=15 // pred_region
        %p177 = scmp.lt.s32.totalorder %s16, 1
        %s178 = scalar_select %p177, %s16, 1
        %p179 = scmp.lt.s32.totalorder %s18, 0
        %s180 = scalar_select %p179, %s18, 0
        %p181 = scmp.lt.s32.totalorder %s17, 0
        %s182 = scalar_select %p181, %s17, 0
        %s183 = sadd.s32 %s182, %s180
        %s184 = sadd.s32 %s183, %s178
        %s185 = smul.addr %s184, 4
        %s186 = scalar_lea.vmem %s0, %s185
      $region20: #{whisper_encoder_forward.16} parent=15 // pred_fallthru
        _
      // Predicated region
      $region21: #{whisper_encoder_forward.16} parent=15 // pred_check
        %p187 = pneg %p89
      $region22: #{whisper_encoder_forward.16} parent=15 // pred_check_branch
        %189 = sbr.rel (%p187) target = $region24
      $region23: #{whisper_encoder_forward.16} parent=15 // pred_region
        %p190 = scmp.lt.s32.totalorder %s16, 1
        %s191 = scalar_select %p190, %s16, 1
        %p192 = scmp.lt.s32.totalorder %s19, 0
        %s193 = scalar_select %p192, %s19, 0
        %p194 = scmp.lt.s32.totalorder %s17, 0
        %s195 = scalar_select %p194, %s17, 0
        %s196 = sadd.s32 %s195, %s193
        %s197 = sadd.s32 %s196, %s191
        %s198 = sadd.s32 %s197, 2
        %s199 = smul.addr %s198, 4
        %s200 = scalar_lea.vmem %s1, %s199
      $region24: #{whisper_encoder_forward.16} parent=15 // pred_fallthru
        _
      // Predicated region
      $region25: #{whisper_encoder_forward.16} parent=15 // pred_check
        %p201 = pneg %p119
      $region26: #{whisper_encoder_forward.16} parent=15 // pred_check_branch
        %203 = sbr.rel (%p201) target = $region28
      $region27: #{whisper_encoder_forward.16} parent=15 // pred_region
        %p204 = scmp.lt.s32.totalorder %s16, 1
        %s205 = scalar_select %p204, %s16, 1
        %p206 = scmp.lt.s32.totalorder %s19, 0
        %s207 = scalar_select %p206, %s19, 0
        %p208 = scmp.lt.s32.totalorder %s17, 0
        %s209 = scalar_select %p208, %s17, 0
        %s210 = sadd.s32 %s209, %s207
        %s211 = sadd.s32 %s210, %s205
        %s212 = sadd.s32 %s211, 4
        %s213 = smul.addr %s212, 4
        %s214 = scalar_lea.vmem %s2, %s213
      $region28: #{whisper_encoder_forward.16} parent=15 // pred_fallthru
        _
    $region16: #{whisper_encoder_forward.16} parent=5 // pred_fallthru
      _
    %p215 = scmp.le.s32.totalorder 1, %s9
    %p216 = scmp.lt.s32.totalorder %s9, 3
    %p217 = pnand %p215, %p216
    %p218 = pneg %p217
    // Predicated region
    $region29: #{whisper_encoder_forward.16} parent=5 // pred_check
      _
    $region30: #{whisper_encoder_forward.16} parent=5 // pred_check_branch
      %220 = sbr.rel (%p217) target = $region32
    $region31: #{whisper_encoder_forward.16} parent=5 // pred_region
      %s221 = ssub.s32 %s9, 1
      %p222 = scmp.lt.s32.totalorder %s20, 1
      %s223 = scalar_select %p222, %s20, 1
      %p224 = scmp.lt.s32.totalorder %s22, 0
      %s225 = scalar_select %p224, %s22, 0
      %p226 = scmp.lt.s32.totalorder %s21, 0
      %s227 = scalar_select %p226, %s21, 0
      %s228 = sadd.s32 %s227, %s225
      %s229 = sadd.s32 %s228, %s223
      %s230 = smul.addr %s229, 4
      %s231 = scalar_lea.vmem %s0, %s230
      %p232 = pneg %p65
      %p233 = pneg %p62
      %p234 = scmp.lt.s32.totalorder %s20, 1
      %s235 = scalar_select %p234, %s20, 1
      %p236 = scmp.lt.s32.totalorder %s23, 0
      %s237 = scalar_select %p236, %s23, 0
      %p238 = scmp.lt.s32.totalorder %s21, 0
      %s239 = scalar_select %p238, %s21, 0
      %s240 = sadd.s32 %s239, %s237
      %s241 = sadd.s32 %s240, %s235
      %s242 = sadd.s32 %s241, 2
      %s243 = smul.addr %s242, 4
      %s244 = scalar_lea.vmem %s1, %s243
      %p245 = pneg %p95
      %p246 = pneg %p92
      %p247 = scmp.lt.s32.totalorder %s20, 1
      %s248 = scalar_select %p247, %s20, 1
      %p249 = scmp.lt.s32.totalorder %s23, 0
      %s250 = scalar_select %p249, %s23, 0
      %p251 = scmp.lt.s32.totalorder %s21, 0
      %s252 = scalar_select %p251, %s21, 0
      %s253 = sadd.s32 %s252, %s250
      %s254 = sadd.s32 %s253, %s248
      %s255 = sadd.s32 %s254, 4
      %s256 = smul.addr %s255, 4
      %s257 = scalar_lea.vmem %s2, %s256
      %p258 = pneg %p125
      %p259 = pneg %p122
      %p260 = pneg %p155
      %p261 = pneg %p152
      %p262 = scmp.lt.s32.totalorder %s20, 1
      %s263 = scalar_select %p262, %s20, 1
      %p264 = scmp.lt.s32.totalorder %s22, 0
      %s265 = scalar_select %p264, %s22, 0
      %p266 = scmp.lt.s32.totalorder %s21, 0
      %s267 = scalar_select %p266, %s21, 0
      %s268 = sadd.s32 %s267, %s265
      %s269 = sadd.s32 %s268, %s263
      %s270 = smul.addr %s269, 4
      %s271 = scalar_lea.vmem %s3, %s270
      %p272 = scmp.lt.s32.totalorder %s20, 1
      %s273 = scalar_select %p272, %s20, 1
      %p274 = scmp.lt.s32.totalorder %s22, 0
      %s275 = scalar_select %p274, %s22, 0
      %p276 = scmp.lt.s32.totalorder %s21, 0
      %s277 = scalar_select %p276, %s21, 0
      %s278 = sadd.s32 %s277, %s275
      %s279 = sadd.s32 %s278, %s273
      %s280 = smul.addr %s279, 4
      %s281 = scalar_lea.vmem %s0, %s280
      %p282 = scmp.lt.s32.totalorder %s20, 1
      %s283 = scalar_select %p282, %s20, 1
      %p284 = scmp.lt.s32.totalorder %s23, 0
      %s285 = scalar_select %p284, %s23, 0
      %p286 = scmp.lt.s32.totalorder %s21, 0
      %s287 = scalar_select %p286, %s21, 0
      %s288 = sadd.s32 %s287, %s285
      %s289 = sadd.s32 %s288, %s283
      %s290 = sadd.s32 %s289, 2
      %s291 = smul.addr %s290, 4
      %s292 = scalar_lea.vmem %s1, %s291
      %p293 = scmp.lt.s32.totalorder %s20, 1
      %s294 = scalar_select %p293, %s20, 1
      %p295 = scmp.lt.s32.totalorder %s23, 0
      %s296 = scalar_select %p295, %s23, 0
      %p297 = scmp.lt.s32.totalorder %s21, 0
      %s298 = scalar_select %p297, %s21, 0
      %s299 = sadd.s32 %s298, %s296
      %s300 = sadd.s32 %s299, %s294
      %s301 = sadd.s32 %s300, 4
      %s302 = smul.addr %s301, 4
      %s303 = scalar_lea.vmem %s2, %s302
      %p304 = scmp.lt.s32.totalorder %s20, 1
      %s305 = scalar_select %p304, %s20, 1
      %p306 = scmp.lt.s32.totalorder %s22, 0
      %s307 = scalar_select %p306, %s22, 0
      %p308 = scmp.lt.s32.totalorder %s21, 0
      %s309 = scalar_select %p308, %s21, 0
      %s310 = sadd.s32 %s309, %s307
      %s311 = sadd.s32 %s310, %s305
      %s312 = smul.addr %s311, 4
      %s313 = scalar_lea.vmem %s3, %s312
      %p315 = scmp.eq.s32.totalorder %s23, 0
      // Predicated region
      $region33: #{whisper_encoder_forward.16} parent=31 // pred_check
        %p316 = pneg %p315
      $region34: #{whisper_encoder_forward.16} parent=31 // pred_check_branch
        %318 = sbr.rel (%p316) target = $region36
      $region35: #{whisper_encoder_forward.16} parent=31 // pred_region
        %vm319 = vcmask 7168
        %320 = vst.msk [vmem:[#allocation2] sm:$0xff] %vm319, -inf
        %321 = vst.msk [vmem:[#allocation2 + $0x8] sm:$0xff] %vm319, -inf
        %322 = vst.msk [vmem:[#allocation2 + $0x10] sm:$0xff] %vm319, -inf
        %323 = vst.msk [vmem:[#allocation2 + $0x18] sm:$0xff] %vm319, -inf
        %324 = vst.msk [vmem:[#allocation3] sm:$0xff] %vm319, 0.0
        %325 = vst.msk [vmem:[#allocation3 + $0x8] sm:$0xff] %vm319, 0.0
        %326 = vst.msk [vmem:[#allocation3 + $0x10] sm:$0xff] %vm319, 0.0
        %327 = vst.msk [vmem:[#allocation3 + $0x18] sm:$0xff] %vm319, 0.0
        %vm328 = vcmask 64512
        %329 = vst.msk [vmem:[#allocation4] sm:$0xff] %vm328, 0.0
        %330 = vst.msk [vmem:[#allocation4 + $0x8] sm:$0xff] %vm328, 0.0
        %331 = vst.msk [vmem:[#allocation4 + $0x10] sm:$0xff] %vm328, 0.0
        %332 = vst.msk [vmem:[#allocation4 + $0x18] sm:$0xff] %vm328, 0.0
      $region36: #{whisper_encoder_forward.16} parent=31 // pred_fallthru
        _
      %v333 = vld [vmem:[%s281] sm:$0xf]
      %v334 = vld [vmem:[%s292] sm:$0xf]
      %v335 = vld [vmem:[%s303] sm:$0xf]
      %vm336 = vcmask 64512
      %v338 = vsel %vm336, %v333, 0
      %v341 = vsel %vm336, %v334, 0
      %343 = vmatprep.subr.bf16.mxu0 0
      %344 = vmatpush1.bf16.xpose.msra.mxu0 %v341
      %345 = vmatprep.subr.bf16.mxu0 0
      %346 = vmatpush1.bf16.xpose.msra.mxu0 0
      %347 = vmatprep.subr.bf16.mxu0 0
      %348 = vmatpush1.bf16.xpose.msra.mxu0 0
      %349 = vmatprep.subr.bf16.mxu0 0
      %350 = vmatpush1.bf16.xpose.msra.mxu0 0
      %351 = vmatprep.subr.bf16.mxu0 0
      %352 = vmatpush1.bf16.xpose.msra.mxu0 0
      %353 = vmatprep.subr.bf16.mxu0 0
      %354 = vmatpush1.bf16.xpose.msra.mxu0 0
      %355 = vmatprep.subr.bf16.mxu0 0
      %356 = vmatpush1.bf16.xpose.msra.mxu0 0
      %357 = vmatprep.subr.bf16.mxu0 0
      %358 = vmatpush1.bf16.xpose.msra.mxu0 0
      %359 = vmatprep.subr.bf16.mxu0 0
      %360 = vmatpush1.bf16.xpose.msra.mxu0 0
      %361 = vmatprep.subr.bf16.mxu0 0
      %362 = vmatpush1.bf16.xpose.msra.mxu0 0
      %363 = vmatprep.subr.bf16.mxu0 0
      %364 = vmatpush1.bf16.xpose.msra.mxu0 0
      %365 = vmatprep.subr.bf16.mxu0 0
      %366 = vmatpush1.bf16.xpose.msra.mxu0 0
      %367 = vmatprep.subr.bf16.mxu0 0
      %368 = vmatpush1.bf16.xpose.msra.mxu0 0
      %369 = vmatprep.subr.bf16.mxu0 0
      %370 = vmatpush1.bf16.xpose.msra.mxu0 0
      %371 = vmatprep.subr.bf16.mxu0 0
      %372 = vmatpush1.bf16.xpose.msra.mxu0 0
      %373 = vmatprep.subr.bf16.mxu0 0
      %374 = vmatpush1.bf16.xpose.msra.mxu0 0
      %375 = vmatprep.mubr.bf16.mxu0 0
      %376 = vmatmul.mubr.bf16.gmra.mrb[0].mxu0 %v338
      %v377 = vpop.f32.mrb[0].mxu0
      %v378 = vadd.f32 0.0, %v377
      %v379 = vpop.f32.mrb[0].mxu0
      %v380 = vpop.f32.mrb[0].mxu0
      %v381 = vpop.f32.mrb[0].mxu0
      %382 = vdwg.mxu0
      %v383 = vld [vmem:[#allocation2] sm:$0xff]
      %v384 = vsel %vm336, %v378, -inf
      %385 = vmax.xlane.f32.xlu0 %v384
      %v386 = vpop.xlane.xlu0 %385
      %v387 = vmax.f32 %v383, %v386
      %v388 = vsub.f32 %v383, %v387
      %v389 = vmul.f32 %v388, 1.442695
      %v390 = vpow.pop %v389
      %392 = vset.pattern.permute.xlu0 0
      %393 = vperm.xlu0 %392, %v387
      %v394 = vpop.permute.xlu0 %393
      %v396 = vsub.f32 %v378, %v394
      %v397 = vmul.f32 %v396, 1.442695
      %v398 = vpow.pop %v397
      %v399 = vld [vmem:[#allocation3] sm:$0xff]
      %v400 = vmul.f32 %v390, %v399
      %v401 = vsel %vm336, %v398, 0.0
      %402 = vadd.xlane.f32.xlu0 %v401
      %v403 = vpop.xlane.xlu0 %402
      %v404 = vadd.f32 %v400, %v403
      %vm405 = vcmask 7168
      %406 = vst.msk [vmem:[#allocation3] sm:$0xff] %vm405, %v404
      %v407 = vld [vmem:[#allocation4] sm:$0xff]
      %409 = vset.pattern.permute.xlu0 0
      %410 = vperm.xlu0 %409, %v390
      %v411 = vpop.permute.xlu0 %410
      %v413 = vmul.f32 %v411, %v407
      %v414 = vpack.c.bf16 %v398, %v398
      %v416 = vsel %vm336, %v414, 0
      %vm418 = vcmask 1043456
      %v420 = vsel %vm418, %v335, 0
      %422 = vmatprep.subr.bf16.mxu0 0
      %423 = vmatpush1.bf16.msra.mxu0 %v420
      %424 = vmatprep.subr.bf16.mxu0 0
      %425 = vmatpush1.bf16.msra.mxu0 0
      %426 = vmatprep.subr.bf16.mxu0 0
      %427 = vmatpush1.bf16.msra.mxu0 0
      %428 = vmatprep.subr.bf16.mxu0 0
      %429 = vmatpush1.bf16.msra.mxu0 0
      %430 = vmatprep.subr.bf16.mxu0 0
      %431 = vmatpush1.bf16.msra.mxu0 0
      %432 = vmatprep.subr.bf16.mxu0 0
      %433 = vmatpush1.bf16.msra.mxu0 0
      %434 = vmatprep.subr.bf16.mxu0 0
      %435 = vmatpush1.bf16.msra.mxu0 0
      %436 = vmatprep.subr.bf16.mxu0 0
      %437 = vmatpush1.bf16.msra.mxu0 0
      %438 = vmatprep.subr.bf16.mxu0 0
      %439 = vmatpush1.bf16.msra.mxu0 0
      %440 = vmatprep.subr.bf16.mxu0 0
      %441 = vmatpush1.bf16.msra.mxu0 0
      %442 = vmatprep.subr.bf16.mxu0 0
      %443 = vmatpush1.bf16.msra.mxu0 0
      %444 = vmatprep.subr.bf16.mxu0 0
      %445 = vmatpush1.bf16.msra.mxu0 0
      %446 = vmatprep.subr.bf16.mxu0 0
      %447 = vmatpush1.bf16.msra.mxu0 0
      %448 = vmatprep.subr.bf16.mxu0 0
      %449 = vmatpush1.bf16.msra.mxu0 0
      %450 = vmatprep.subr.bf16.mxu0 0
      %451 = vmatpush1.bf16.msra.mxu0 0
      %452 = vmatprep.subr.bf16.mxu0 0
      %453 = vmatpush1.bf16.msra.mxu0 0
      %454 = vmatprep.mubr.bf16.mxu0 0
      %455 = vmatmul.mubr.bf16.gmra.mrb[0].mxu0 %v416
      %v456 = vpop.f32.mrb[0].mxu0
      %v457 = vadd.f32 0.0, %v456
      %v458 = vpop.f32.mrb[0].mxu0
      %v459 = vpop.f32.mrb[0].mxu0
      %v460 = vpop.f32.mrb[0].mxu0
      %461 = vdwg.mxu0
      %v462 = vadd.f32 %v413, %v457
      %463 = vst.msk [vmem:[#allocation4] sm:$0xff] %vm336, %v462
      %464 = vst.msk [vmem:[#allocation2] sm:$0xff] %vm405, %v387
      %v465 = vld [vmem:[%s281] sm:$0xf]
      %v466 = vld [vmem:[%s292] sm:$0xf]
      %v467 = vld [vmem:[%s303] sm:$0xf]
      %v469 = vunpack.c.l.b16 %v465
      %v470 = vpack.c.b16 %v469, %v469
      %471 = vrot.lane.b32.xlu0 %v470, 120
      %v472 = vpop.permute.xlu0 %471
      %v474 = vunpack.c.l.b16 %v466
      %v475 = vpack.c.b16 %v474, %v474
      %476 = vrot.lane.b32.xlu0 %v475, 120
      %v477 = vpop.permute.xlu0 %476
      %v479 = vsel %vm336, %v472, 0
      %v482 = vsel %vm336, %v477, 0
      %484 = vmatprep.subr.bf16.mxu0 0
      %485 = vmatpush1.bf16.xpose.msra.mxu0 %v482
      %486 = vmatprep.subr.bf16.mxu0 0
      %487 = vmatpush1.bf16.xpose.msra.mxu0 0
      %488 = vmatprep.subr.bf16.mxu0 0
      %489 = vmatpush1.bf16.xpose.msra.mxu0 0
      %490 = vmatprep.subr.bf16.mxu0 0
      %491 = vmatpush1.bf16.xpose.msra.mxu0 0
      %492 = vmatprep.subr.bf16.mxu0 0
      %493 = vmatpush1.bf16.xpose.msra.mxu0 0
      %494 = vmatprep.subr.bf16.mxu0 0
      %495 = vmatpush1.bf16.xpose.msra.mxu0 0
      %496 = vmatprep.subr.bf16.mxu0 0
      %497 = vmatpush1.bf16.xpose.msra.mxu0 0
      %498 = vmatprep.subr.bf16.mxu0 0
      %499 = vmatpush1.bf16.xpose.msra.mxu0 0
      %500 = vmatprep.subr.bf16.mxu0 0
      %501 = vmatpush1.bf16.xpose.msra.mxu0 0
      %502 = vmatprep.subr.bf16.mxu0 0
      %503 = vmatpush1.bf16.xpose.msra.mxu0 0
      %504 = vmatprep.subr.bf16.mxu0 0
      %505 = vmatpush1.bf16.xpose.msra.mxu0 0
      %506 = vmatprep.subr.bf16.mxu0 0
      %507 = vmatpush1.bf16.xpose.msra.mxu0 0
      %508 = vmatprep.subr.bf16.mxu0 0
      %509 = vmatpush1.bf16.xpose.msra.mxu0 0
      %510 = vmatprep.subr.bf16.mxu0 0
      %511 = vmatpush1.bf16.xpose.msra.mxu0 0
      %512 = vmatprep.subr.bf16.mxu0 0
      %513 = vmatpush1.bf16.xpose.msra.mxu0 0
      %514 = vmatprep.subr.bf16.mxu0 0
      %515 = vmatpush1.bf16.xpose.msra.mxu0 0
      %516 = vmatprep.mubr.bf16.mxu0 0
      %517 = vmatmul.mubr.bf16.gmra.mrb[0].mxu0 %v479
      %v518 = vpop.f32.mrb[0].mxu0
      %v519 = vadd.f32 0.0, %v518
      %v520 = vpop.f32.mrb[0].mxu0
      %v521 = vpop.f32.mrb[0].mxu0
      %v522 = vpop.f32.mrb[0].mxu0
      %523 = vdwg.mxu0
      %s524 = scalar_lea.vmem [#allocation2], 8
      %v525 = vld [vmem:[%s524] sm:$0xff]
      %v526 = vsel %vm336, %v519, -inf
      %527 = vmax.xlane.f32.xlu0 %v526
      %v528 = vpop.xlane.xlu0 %527
      %v529 = vmax.f32 %v525, %v528
      %v530 = vsub.f32 %v525, %v529
      %v531 = vmul.f32 %v530, 1.442695
      %v532 = vpow.pop %v531
      %534 = vset.pattern.permute.xlu0 0
      %535 = vperm.xlu0 %534, %v529
      %v536 = vpop.permute.xlu0 %535
      %v538 = vsub.f32 %v519, %v536
      %v539 = vmul.f32 %v538, 1.442695
      %v540 = vpow.pop %v539
      %s541 = scalar_lea.vmem [#allocation3], 8
      %v542 = vld [vmem:[%s541] sm:$0xff]
      %v543 = vmul.f32 %v532, %v542
      %v544 = vsel %vm336, %v540, 0.0
      %545 = vadd.xlane.f32.xlu0 %v544
      %v546 = vpop.xlane.xlu0 %545
      %v547 = vadd.f32 %v543, %v546
      %548 = vst.msk [vmem:[%s541] sm:$0xff] %vm405, %v547
      %s549 = scalar_lea.vmem [#allocation4], 8
      %v550 = vld [vmem:[%s549] sm:$0xff]
      %552 = vset.pattern.permute.xlu0 0
      %553 = vperm.xlu0 %552, %v532
      %v554 = vpop.permute.xlu0 %553
      %v556 = vmul.f32 %v554, %v550
      %v557 = vpack.c.bf16 %v540, %v540
      %v559 = vunpack.c.l.b16 %v467
      %v560 = vpack.c.b16 %v559, %v559
      %561 = vrot.lane.b32.xlu0 %v560, 120
      %v562 = vpop.permute.xlu0 %561
      %v564 = vsel %vm336, %v557, 0
      %v567 = vsel %vm418, %v562, 0
      %569 = vmatprep.subr.bf16.mxu0 0
      %570 = vmatpush1.bf16.msra.mxu0 %v567
      %571 = vmatprep.subr.bf16.mxu0 0
      %572 = vmatpush1.bf16.msra.mxu0 0
      %573 = vmatprep.subr.bf16.mxu0 0
      %574 = vmatpush1.bf16.msra.mxu0 0
      %575 = vmatprep.subr.bf16.mxu0 0
      %576 = vmatpush1.bf16.msra.mxu0 0
      %577 = vmatprep.subr.bf16.mxu0 0
      %578 = vmatpush1.bf16.msra.mxu0 0
      %579 = vmatprep.subr.bf16.mxu0 0
      %580 = vmatpush1.bf16.msra.mxu0 0
      %581 = vmatprep.subr.bf16.mxu0 0
      %582 = vmatpush1.bf16.msra.mxu0 0
      %583 = vmatprep.subr.bf16.mxu0 0
      %584 = vmatpush1.bf16.msra.mxu0 0
      %585 = vmatprep.subr.bf16.mxu0 0
      %586 = vmatpush1.bf16.msra.mxu0 0
      %587 = vmatprep.subr.bf16.mxu0 0
      %588 = vmatpush1.bf16.msra.mxu0 0
      %589 = vmatprep.subr.bf16.mxu0 0
      %590 = vmatpush1.bf16.msra.mxu0 0
      %591 = vmatprep.subr.bf16.mxu0 0
      %592 = vmatpush1.bf16.msra.mxu0 0
      %593 = vmatprep.subr.bf16.mxu0 0
      %594 = vmatpush1.bf16.msra.mxu0 0
      %595 = vmatprep.subr.bf16.mxu0 0
      %596 = vmatpush1.bf16.msra.mxu0 0
      %597 = vmatprep.subr.bf16.mxu0 0
      %598 = vmatpush1.bf16.msra.mxu0 0
      %599 = vmatprep.subr.bf16.mxu0 0
      %600 = vmatpush1.bf16.msra.mxu0 0
      %601 = vmatprep.mubr.bf16.mxu0 0
      %602 = vmatmul.mubr.bf16.gmra.mrb[0].mxu0 %v564
      %v603 = vpop.f32.mrb[0].mxu0
      %v604 = vadd.f32 0.0, %v603
      %v605 = vpop.f32.mrb[0].mxu0
      %v606 = vpop.f32.mrb[0].mxu0
      %v607 = vpop.f32.mrb[0].mxu0
      %608 = vdwg.mxu0
      %v609 = vadd.f32 %v556, %v604
      %610 = vst.msk [vmem:[%s549] sm:$0xff] %vm336, %v609
      %611 = vst.msk [vmem:[%s524] sm:$0xff] %vm405, %v529
      %v612 = vld [vmem:[%s281] sm:$0xf]
      %v613 = vld [vmem:[%s292] sm:$0xf]
      %v614 = vld [vmem:[%s303] sm:$0xf]
      %v616 = vunpack.c.l.b16 %v612
      %v617 = vpack.c.b16 %v616, %v616
      %618 = vrot.lane.b32.xlu0 %v617, 112
      %v619 = vpop.permute.xlu0 %618
      %v621 = vunpack.c.l.b16 %v613
      %v622 = vpack.c.b16 %v621, %v621
      %623 = vrot.lane.b32.xlu0 %v622, 112
      %v624 = vpop.permute.xlu0 %623
      %v626 = vsel %vm336, %v619, 0
      %v629 = vsel %vm336, %v624, 0
      %631 = vmatprep.subr.bf16.mxu0 0
      %632 = vmatpush1.bf16.xpose.msra.mxu0 %v629
      %633 = vmatprep.subr.bf16.mxu0 0
      %634 = vmatpush1.bf16.xpose.msra.mxu0 0
      %635 = vmatprep.subr.bf16.mxu0 0
      %636 = vmatpush1.bf16.xpose.msra.mxu0 0
      %637 = vmatprep.subr.bf16.mxu0 0
      %638 = vmatpush1.bf16.xpose.msra.mxu0 0
      %639 = vmatprep.subr.bf16.mxu0 0
      %640 = vmatpush1.bf16.xpose.msra.mxu0 0
      %641 = vmatprep.subr.bf16.mxu0 0
      %642 = vmatpush1.bf16.xpose.msra.mxu0 0
      %643 = vmatprep.subr.bf16.mxu0 0
      %644 = vmatpush1.bf16.xpose.msra.mxu0 0
      %645 = vmatprep.subr.bf16.mxu0 0
      %646 = vmatpush1.bf16.xpose.msra.mxu0 0
      %647 = vmatprep.subr.bf16.mxu0 0
      %648 = vmatpush1.bf16.xpose.msra.mxu0 0
      %649 = vmatprep.subr.bf16.mxu0 0
      %650 = vmatpush1.bf16.xpose.msra.mxu0 0
      %651 = vmatprep.subr.bf16.mxu0 0
      %652 = vmatpush1.bf16.xpose.msra.mxu0 0
      %653 = vmatprep.subr.bf16.mxu0 0
      %654 = vmatpush1.bf16.xpose.msra.mxu0 0
      %655 = vmatprep.subr.bf16.mxu0 0
      %656 = vmatpush1.bf16.xpose.msra.mxu0 0
      %657 = vmatprep.subr.bf16.mxu0 0
      %658 = vmatpush1.bf16.xpose.msra.mxu0 0
      %659 = vmatprep.subr.bf16.mxu0 0
      %660 = vmatpush1.bf16.xpose.msra.mxu0 0
      %661 = vmatprep.subr.bf16.mxu0 0
      %662 = vmatpush1.bf16.xpose.msra.mxu0 0
      %663 = vmatprep.mubr.bf16.mxu0 0
      %664 = vmatmul.mubr.bf16.gmra.mrb[0].mxu0 %v626
      %v665 = vpop.f32.mrb[0].mxu0
      %v666 = vadd.f32 0.0, %v665
      %v667 = vpop.f32.mrb[0].mxu0
      %v668 = vpop.f32.mrb[0].mxu0
      %v669 = vpop.f32.mrb[0].mxu0
      %670 = vdwg.mxu0
      %s671 = scalar_lea.vmem [#allocation2], 16
      %v672 = vld [vmem:[%s671] sm:$0xff]
      %v673 = vsel %vm336, %v666, -inf
      %674 = vmax.xlane.f32.xlu0 %v673
      %v675 = vpop.xlane.xlu0 %674
      %v676 = vmax.f32 %v672, %v675
      %v677 = vsub.f32 %v672, %v676
      %v678 = vmul.f32 %v677, 1.442695
      %v679 = vpow.pop %v678
      %681 = vset.pattern.permute.xlu0 0
      %682 = vperm.xlu0 %681, %v676
      %v683 = vpop.permute.xlu0 %682
      %v685 = vsub.f32 %v666, %v683
      %v686 = vmul.f32 %v685, 1.442695
      %v687 = vpow.pop %v686
      %s688 = scalar_lea.vmem [#allocation3], 16
      %v689 = vld [vmem:[%s688] sm:$0xff]
      %v690 = vmul.f32 %v679, %v689
      %v691 = vsel %vm336, %v687, 0.0
      %692 = vadd.xlane.f32.xlu0 %v691
      %v693 = vpop.xlane.xlu0 %692
      %v694 = vadd.f32 %v690, %v693
      %695 = vst.msk [vmem:[%s688] sm:$0xff] %vm405, %v694
      %s696 = scalar_lea.vmem [#allocation4], 16
      %v697 = vld [vmem:[%s696] sm:$0xff]
      %699 = vset.pattern.permute.xlu0 0
      %700 = vperm.xlu0 %699, %v679
      %v701 = vpop.permute.xlu0 %700
      %v703 = vmul.f32 %v701, %v697
      %v704 = vpack.c.bf16 %v687, %v687
      %v706 = vunpack.c.l.b16 %v614
      %v707 = vpack.c.b16 %v706, %v706
      %708 = vrot.lane.b32.xlu0 %v707, 112
      %v709 = vpop.permute.xlu0 %708
      %v711 = vsel %vm336, %v704, 0
      %v714 = vsel %vm418, %v709, 0
      %716 = vmatprep.subr.bf16.mxu0 0
      %717 = vmatpush1.bf16.msra.mxu0 %v714
      %718 = vmatprep.subr.bf16.mxu0 0
      %719 = vmatpush1.bf16.msra.mxu0 0
      %720 = vmatprep.subr.bf16.mxu0 0
      %721 = vmatpush1.bf16.msra.mxu0 0
      %722 = vmatprep.subr.bf16.mxu0 0
      %723 = vmatpush1.bf16.msra.mxu0 0
      %724 = vmatprep.subr.bf16.mxu0 0
      %725 = vmatpush1.bf16.msra.mxu0 0
      %726 = vmatprep.subr.bf16.mxu0 0
      %727 = vmatpush1.bf16.msra.mxu0 0
      %728 = vmatprep.subr.bf16.mxu0 0
      %729 = vmatpush1.bf16.msra.mxu0 0
      %730 = vmatprep.subr.bf16.mxu0 0
      %731 = vmatpush1.bf16.msra.mxu0 0
      %732 = vmatprep.subr.bf16.mxu0 0
      %733 = vmatpush1.bf16.msra.mxu0 0
      %734 = vmatprep.subr.bf16.mxu0 0
      %735 = vmatpush1.bf16.msra.mxu0 0
      %736 = vmatprep.subr.bf16.mxu0 0
      %737 = vmatpush1.bf16.msra.mxu0 0
      %738 = vmatprep.subr.bf16.mxu0 0
      %739 = vmatpush1.bf16.msra.mxu0 0
      %740 = vmatprep.subr.bf16.mxu0 0
      %741 = vmatpush1.bf16.msra.mxu0 0
      %742 = vmatprep.subr.bf16.mxu0 0
      %743 = vmatpush1.bf16.msra.mxu0 0
      %744 = vmatprep.subr.bf16.mxu0 0
      %745 = vmatpush1.bf16.msra.mxu0 0
      %746 = vmatprep.subr.bf16.mxu0 0
      %747 = vmatpush1.bf16.msra.mxu0 0
      %748 = vmatprep.mubr.bf16.mxu0 0
      %749 = vmatmul.mubr.bf16.gmra.mrb[0].mxu0 %v711
      %v750 = vpop.f32.mrb[0].mxu0
      %v751 = vadd.f32 0.0, %v750
      %v752 = vpop.f32.mrb[0].mxu0
      %v753 = vpop.f32.mrb[0].mxu0
      %v754 = vpop.f32.mrb[0].mxu0
      %755 = vdwg.mxu0
      %v756 = vadd.f32 %v703, %v751
      %757 = vst.msk [vmem:[%s696] sm:$0xff] %vm336, %v756
      %758 = vst.msk [vmem:[%s671] sm:$0xff] %vm405, %v676
      %v759 = vld [vmem:[%s281] sm:$0xf]
      %v760 = vld [vmem:[%s292] sm:$0xf]
      %v761 = vld [vmem:[%s303] sm:$0xf]
      %v763 = vunpack.c.l.b16 %v759
      %v764 = vpack.c.b16 %v763, %v763
      %765 = vrot.lane.b32.xlu0 %v764, 104
      %v766 = vpop.permute.xlu0 %765
      %v768 = vunpack.c.l.b16 %v760
      %v769 = vpack.c.b16 %v768, %v768
      %770 = vrot.lane.b32.xlu0 %v769, 104
      %v771 = vpop.permute.xlu0 %770
      %v773 = vsel %vm336, %v766, 0
      %v776 = vsel %vm336, %v771, 0
      %778 = vmatprep.subr.bf16.mxu0 0
      %779 = vmatpush1.bf16.xpose.msra.mxu0 %v776
      %780 = vmatprep.subr.bf16.mxu0 0
      %781 = vmatpush1.bf16.xpose.msra.mxu0 0
      %782 = vmatprep.subr.bf16.mxu0 0
      %783 = vmatpush1.bf16.xpose.msra.mxu0 0
      %784 = vmatprep.subr.bf16.mxu0 0
      %785 = vmatpush1.bf16.xpose.msra.mxu0 0
      %786 = vmatprep.subr.bf16.mxu0 0
      %787 = vmatpush1.bf16.xpose.msra.mxu0 0
      %788 = vmatprep.subr.bf16.mxu0 0
      %789 = vmatpush1.bf16.xpose.msra.mxu0 0
      %790 = vmatprep.subr.bf16.mxu0 0
      %791 = vmatpush1.bf16.xpose.msra.mxu0 0
      %792 = vmatprep.subr.bf16.mxu0 0
      %793 = vmatpush1.bf16.xpose.msra.mxu0 0
      %794 = vmatprep.subr.bf16.mxu0 0
      %795 = vmatpush1.bf16.xpose.msra.mxu0 0
      %796 = vmatprep.subr.bf16.mxu0 0
      %797 = vmatpush1.bf16.xpose.msra.mxu0 0
      %798 = vmatprep.subr.bf16.mxu0 0
      %799 = vmatpush1.bf16.xpose.msra.mxu0 0
      %800 = vmatprep.subr.bf16.mxu0 0
      %801 = vmatpush1.bf16.xpose.msra.mxu0 0
      %802 = vmatprep.subr.bf16.mxu0 0
      %803 = vmatpush1.bf16.xpose.msra.mxu0 0
      %804 = vmatprep.subr.bf16.mxu0 0
      %805 = vmatpush1.bf16.xpose.msra.mxu0 0
      %806 = vmatprep.subr.bf16.mxu0 0
      %807 = vmatpush1.bf16.xpose.msra.mxu0 0
      %808 = vmatprep.subr.bf16.mxu0 0
      %809 = vmatpush1.bf16.xpose.msra.mxu0 0
      %810 = vmatprep.mubr.bf16.mxu0 0
      %811 = vmatmul.mubr.bf16.gmra.mrb[0].mxu0 %v773
      %v812 = vpop.f32.mrb[0].mxu0
      %v813 = vadd.f32 0.0, %v812
      %v814 = vpop.f32.mrb[0].mxu0
      %v815 = vpop.f32.mrb[0].mxu0
      %v816 = vpop.f32.mrb[0].mxu0
      %817 = vdwg.mxu0
      %s818 = scalar_lea.vmem [#allocation2], 24
      %v819 = vld [vmem:[%s818] sm:$0xff]
      %v820 = vsel %vm336, %v813, -inf
      %821 = vmax.xlane.f32.xlu0 %v820
      %v822 = vpop.xlane.xlu0 %821
      %v823 = vmax.f32 %v819, %v822
      %v824 = vsub.f32 %v819, %v823
      %v825 = vmul.f32 %v824, 1.442695
      %v826 = vpow.pop %v825
      %828 = vset.pattern.permute.xlu0 0
      %829 = vperm.xlu0 %828, %v823
      %v830 = vpop.permute.xlu0 %829
      %v832 = vsub.f32 %v813, %v830
      %v833 = vmul.f32 %v832, 1.442695
      %v834 = vpow.pop %v833
      %s835 = scalar_lea.vmem [#allocation3], 24
      %v836 = vld [vmem:[%s835] sm:$0xff]
      %v837 = vmul.f32 %v826, %v836
      %v838 = vsel %vm336, %v834, 0.0
      %839 = vadd.xlane.f32.xlu0 %v838
      %v840 = vpop.xlane.xlu0 %839
      %v841 = vadd.f32 %v837, %v840
      %842 = vst.msk [vmem:[%s835] sm:$0xff] %vm405, %v841
      %s843 = scalar_lea.vmem [#allocation4], 24
      %v844 = vld [vmem:[%s843] sm:$0xff]
      %846 = vset.pattern.permute.xlu0 0
      %847 = vperm.xlu0 %846, %v826
      %v848 = vpop.permute.xlu0 %847
      %v850 = vmul.f32 %v848, %v844
      %v851 = vpack.c.bf16 %v834, %v834
      %v853 = vunpack.c.l.b16 %v761
      %v854 = vpack.c.b16 %v853, %v853
      %855 = vrot.lane.b32.xlu0 %v854, 104
      %v856 = vpop.permute.xlu0 %855
      %v858 = vsel %vm336, %v851, 0
      %v861 = vsel %vm418, %v856, 0
      %863 = vmatprep.subr.bf16.mxu0 0
      %864 = vmatpush1.bf16.msra.mxu0 %v861
      %865 = vmatprep.subr.bf16.mxu0 0
      %866 = vmatpush1.bf16.msra.mxu0 0
      %867 = vmatprep.subr.bf16.mxu0 0
      %868 = vmatpush1.bf16.msra.mxu0 0
      %869 = vmatprep.subr.bf16.mxu0 0
      %870 = vmatpush1.bf16.msra.mxu0 0
      %871 = vmatprep.subr.bf16.mxu0 0
      %872 = vmatpush1.bf16.msra.mxu0 0
      %873 = vmatprep.subr.bf16.mxu0 0
      %874 = vmatpush1.bf16.msra.mxu0 0
      %875 = vmatprep.subr.bf16.mxu0 0
      %876 = vmatpush1.bf16.msra.mxu0 0
      %877 = vmatprep.subr.bf16.mxu0 0
      %878 = vmatpush1.bf16.msra.mxu0 0
      %879 = vmatprep.subr.bf16.mxu0 0
      %880 = vmatpush1.bf16.msra.mxu0 0
      %881 = vmatprep.subr.bf16.mxu0 0
      %882 = vmatpush1.bf16.msra.mxu0 0
      %883 = vmatprep.subr.bf16.mxu0 0
      %884 = vmatpush1.bf16.msra.mxu0 0
      %885 = vmatprep.subr.bf16.mxu0 0
      %886 = vmatpush1.bf16.msra.mxu0 0
      %887 = vmatprep.subr.bf16.mxu0 0
      %888 = vmatpush1.bf16.msra.mxu0 0
      %889 = vmatprep.subr.bf16.mxu0 0
      %890 = vmatpush1.bf16.msra.mxu0 0
      %891 = vmatprep.subr.bf16.mxu0 0
      %892 = vmatpush1.bf16.msra.mxu0 0
      %893 = vmatprep.subr.bf16.mxu0 0
      %894 = vmatpush1.bf16.msra.mxu0 0
      %895 = vmatprep.mubr.bf16.mxu0 0
      %896 = vmatmul.mubr.bf16.gmra.mrb[0].mxu0 %v858
      %v897 = vpop.f32.mrb[0].mxu0
      %v898 = vadd.f32 0.0, %v897
      %v899 = vpop.f32.mrb[0].mxu0
      %v900 = vpop.f32.mrb[0].mxu0
      %v901 = vpop.f32.mrb[0].mxu0
      %902 = vdwg.mxu0
      %v903 = vadd.f32 %v850, %v898
      %904 = vst.msk [vmem:[%s843] sm:$0xff] %vm336, %v903
      %905 = vst.msk [vmem:[%s818] sm:$0xff] %vm405, %v823
      // Predicated region
      $region37: #{whisper_encoder_forward.16} parent=31 // pred_check
        %p906 = pneg %p315
      $region38: #{whisper_encoder_forward.16} parent=31 // pred_check_branch
        %908 = sbr.rel (%p906) target = $region40
      $region39: #{whisper_encoder_forward.16} parent=31 // pred_region
        %v909 = vld [vmem:[#allocation4] sm:$0xff]
        %v910 = vld [vmem:[#allocation3] sm:$0xff]
        %v911 = vrcp.pop %v910
        %913 = vset.pattern.permute.xlu0 0
        %914 = vperm.xlu0 %913, %v911
        %v915 = vpop.permute.xlu0 %914
        %v917 = vmul.f32 %v909, %v915
        %v918 = vld [vmem:[%s549] sm:$0xff]
        %v919 = vld [vmem:[%s541] sm:$0xff]
        %v920 = vrcp.pop %v919
        %922 = vset.pattern.permute.xlu0 0
        %923 = vperm.xlu0 %922, %v920
        %v924 = vpop.permute.xlu0 %923
        %v926 = vmul.f32 %v918, %v924
        %v927 = vld [vmem:[%s696] sm:$0xff]
        %v928 = vld [vmem:[%s688] sm:$0xff]
        %v929 = vrcp.pop %v928
        %931 = vset.pattern.permute.xlu0 0
        %932 = vperm.xlu0 %931, %v929
        %v933 = vpop.permute.xlu0 %932
        %v935 = vmul.f32 %v927, %v933
        %v936 = vld [vmem:[%s843] sm:$0xff]
        %v937 = vld [vmem:[%s835] sm:$0xff]
        %v938 = vrcp.pop %v937
        %940 = vset.pattern.permute.xlu0 0
        %941 = vperm.xlu0 %940, %v938
        %v942 = vpop.permute.xlu0 %941
        %v944 = vmul.f32 %v936, %v942
        %946 = vrot.lane.b32.xlu0 %v926, 8
        %v947 = vpop.permute.xlu0 %946
        %950 = vrot.lane.b32.xlu0 %v935, 16
        %v951 = vpop.permute.xlu0 %950
        %954 = vrot.lane.b32.xlu0 %v944, 24
        %v955 = vpop.permute.xlu0 %954
        %v957 = vsel %vm336, %v917, %v947
        %vm958 = vcmask 130048
        %v959 = vsel %vm958, %v957, %v951
        %vm960 = vcmask 195584
        %v961 = vsel %vm960, %v959, %v955
        %v962 = vpack.c.bf16 %v961, %v961
        %vm963 = vcmask 257024
        %964 = vst.msk [vmem:[%s313] sm:$0xf] %vm963, %v962
      $region40: #{whisper_encoder_forward.16} parent=31 // pred_fallthru
        _
      %p965 = scmp.lt.s32.totalorder %s20, 1
      %s966 = scalar_select %p965, %s20, 1
      %p967 = scmp.lt.s32.totalorder %s22, 0
      %s968 = scalar_select %p967, %s22, 0
      %p969 = scmp.lt.s32.totalorder %s21, 0
      %s970 = scalar_select %p969, %s21, 0
      %s971 = sadd.s32 %s970, %s968
      %s972 = sadd.s32 %s971, %s966
      %s973 = smul.addr %s972, 4
      %s974 = scalar_lea.vmem %s3, %s973
      // Predicated region
      $region41: #{whisper_encoder_forward.16} parent=31 // pred_check
        %p975 = pneg %p152
      $region42: #{whisper_encoder_forward.16} parent=31 // pred_check_branch
        %977 = sbr.rel (%p975) target = $region44
      $region43: #{whisper_encoder_forward.16} parent=31 // pred_region
        _
      $region44: #{whisper_encoder_forward.16} parent=31 // pred_fallthru
        _
    $region32: #{whisper_encoder_forward.16} parent=5 // pred_fallthru
      _
    %p978 = scmp.le.s32.totalorder 2, %s9
    // Predicated region
    $region45: #{whisper_encoder_forward.16} parent=5 // pred_check
      %p979 = pneg %p978
    $region46: #{whisper_encoder_forward.16} parent=5 // pred_check_branch
      %981 = sbr.rel (%p979) target = $region48
    $region47: #{whisper_encoder_forward.16} parent=5 // pred_region
      %s982 = ssub.s32 %s9, 2
      // Predicated region
      $region49: #{whisper_encoder_forward.16} parent=47 // pred_check
        %p983 = pneg %p158
      $region50: #{whisper_encoder_forward.16} parent=47 // pred_check_branch
        %985 = sbr.rel (%p983) target = $region52
      $region51: #{whisper_encoder_forward.16} parent=47 // pred_region
        %p986 = scmp.lt.s32.totalorder %s24, 1
        %s987 = scalar_select %p986, %s24, 1
        %p988 = scmp.lt.s32.totalorder %s26, 0
        %s989 = scalar_select %p988, %s26, 0
        %p990 = scmp.lt.s32.totalorder %s25, 0
        %s991 = scalar_select %p990, %s25, 0
        %s992 = sadd.s32 %s991, %s989
        %s993 = sadd.s32 %s992, %s987
        %s994 = smul.addr %s993, 4
        %s995 = scalar_lea.vmem %s3, %s994
      $region52: #{whisper_encoder_forward.16} parent=47 // pred_fallthru
        _
    $region48: #{whisper_encoder_forward.16} parent=5 // pred_fallthru
      _
  $region6: #{whisper_encoder_forward.16} parent=0 // loop_footer
    %s13 = sadd.s32 1, %s9
  $region7: #{whisper_encoder_forward.16} parent=0 // loop_footer_branch
    %8 = sbr.rel target = $region3
  $region8: #{whisper_encoder_forward.16} parent=0 // loop_exit
    _

// kernel: whisper_encoder_forward.17
$region0: #{whisper_encoder_forward.17}
  #allocation0 [shape = 'u32[]', space=smem, size = 0x4, offset = 0x4, fixed_abs, tag = 'smem constant byte address 0x4 - core index']
  #allocation1 [shape = 'u32[144,128]{1,0:T(1,128)}', space=vmem, size = 0x12000, scoped, tag = 'internal scratch']
  %s0 = inlined_call_operand.vmem [shape: bf16[16,32], index: 0, kind: input, shape index: {}]
  %s1 = inlined_call_operand.vmem [shape: bf16[32,32], index: 1, kind: input, shape index: {}]
  %s2 = inlined_call_operand.vmem [shape: f32[1,32], index: 2, kind: input, shape index: {}]
  %s3 = inlined_call_operand.vmem [shape: bf16[16,32], index: 3, kind: input, shape index: {}]
  %s4 = inlined_call_operand.vmem [shape: bf16[16,32], index: 4, kind: output, shape index: {}]
  %s5 = sld [smem:[#allocation0]]
  $region26: #{whisper_encoder_forward.17} parent=0
    _
  %s7 = ssub.s32 1, %s5
  %s8 = scalar_select 0, %s7, %s5
  // Predicated region
  $region2: #{whisper_encoder_forward.17} parent=0 // pred_check
    _
  $region3: #{whisper_encoder_forward.17} parent=0 // pred_check_branch
    %10 = sbr.rel (0) target = $region5
  $region4: #{whisper_encoder_forward.17} parent=0 // pred_region
    _
  $region5: #{whisper_encoder_forward.17} parent=0 // pred_fallthru
    _
  // Predicated region
  $region6: #{whisper_encoder_forward.17} parent=0 // pred_check
    _
  $region7: #{whisper_encoder_forward.17} parent=0 // pred_check_branch
    %12 = sbr.rel (0) target = $region9
  $region8: #{whisper_encoder_forward.17} parent=0 // pred_region
    _
  $region9: #{whisper_encoder_forward.17} parent=0 // pred_fallthru
    _
  // Predicated region
  $region10: #{whisper_encoder_forward.17} parent=0 // pred_check
    _
  $region11: #{whisper_encoder_forward.17} parent=0 // pred_check_branch
    %14 = sbr.rel (0) target = $region13
  $region12: #{whisper_encoder_forward.17} parent=0 // pred_region
    _
  $region13: #{whisper_encoder_forward.17} parent=0 // pred_fallthru
    _
  // Predicated region
  $region14: #{whisper_encoder_forward.17} parent=0 // pred_check
    _
  $region15: #{whisper_encoder_forward.17} parent=0 // pred_check_branch
    %16 = sbr.rel (0) target = $region17
  $region16: #{whisper_encoder_forward.17} parent=0 // pred_region
    _
  $region17: #{whisper_encoder_forward.17} parent=0 // pred_fallthru
    _
  %v18 = vld [vmem:[%s0] sm:$0xf]
  %v19 = vld [vmem:[%s0 + $0x4] sm:$0xf]
  %v20 = vld [vmem:[%s1] sm:$0xf]
  %v21 = vld [vmem:[%s1 + $0x4] sm:$0xf]
  %v22 = vld [vmem:[%s1 + $0x8] sm:$0xf]
  %v23 = vld [vmem:[%s1 + $0xc] sm:$0xf]
  %v24 = vld [vmem:[%s2] sm:$0x1]
  %v26 = vlaneseq
  %v27 = vshrl.u32 %v26, 7
  %v28 = vsub.s32 0, %v27
  %v29 = vrot.slane %v24, %v28
  %v33 = vunpack.c.l.b16 %v18
  %v34 = vunpack.c.l.b16 %v19
  %v35 = vpack.c.b16 %v34, %v33
  %v40 = vunpack.c.l.b16 %v20
  %v41 = vunpack.c.l.b16 %v21
  %v42 = vunpack.c.l.b16 %v22
  %v43 = vunpack.c.l.b16 %v23
  %v44 = vpack.c.b16 %v41, %v40
  %v45 = vpack.c.b16 %v43, %v42
  %vm48 = vcmask 261120
  %v50 = vsel %vm48, %v35, 0
  %52 = vmatprep.subr.bf16.mxu0 0
  %53 = vmatpush1.bf16.msra.mxu0 %v44
  %54 = vmatprep.subr.bf16.mxu0 0
  %55 = vmatpush1.bf16.msra.mxu0 %v45
  %56 = vmatprep.subr.bf16.mxu0 0
  %57 = vmatpush1.bf16.msra.mxu0 0
  %58 = vmatprep.subr.bf16.mxu0 0
  %59 = vmatpush1.bf16.msra.mxu0 0
  %60 = vmatprep.subr.bf16.mxu0 0
  %61 = vmatpush1.bf16.msra.mxu0 0
  %62 = vmatprep.subr.bf16.mxu0 0
  %63 = vmatpush1.bf16.msra.mxu0 0
  %64 = vmatprep.subr.bf16.mxu0 0
  %65 = vmatpush1.bf16.msra.mxu0 0
  %66 = vmatprep.subr.bf16.mxu0 0
  %67 = vmatpush1.bf16.msra.mxu0 0
  %68 = vmatprep.subr.bf16.mxu0 0
  %69 = vmatpush1.bf16.msra.mxu0 0
  %70 = vmatprep.subr.bf16.mxu0 0
  %71 = vmatpush1.bf16.msra.mxu0 0
  %72 = vmatprep.subr.bf16.mxu0 0
  %73 = vmatpush1.bf16.msra.mxu0 0
  %74 = vmatprep.subr.bf16.mxu0 0
  %75 = vmatpush1.bf16.msra.mxu0 0
  %76 = vmatprep.subr.bf16.mxu0 0
  %77 = vmatpush1.bf16.msra.mxu0 0
  %78 = vmatprep.subr.bf16.mxu0 0
  %79 = vmatpush1.bf16.msra.mxu0 0
  %80 = vmatprep.subr.bf16.mxu0 0
  %81 = vmatpush1.bf16.msra.mxu0 0
  %82 = vmatprep.subr.bf16.mxu0 0
  %83 = vmatpush1.bf16.msra.mxu0 0
  %84 = vmatprep.mubr.bf16.mxu0 0
  %85 = vmatmul.mubr.bf16.gmra.mrb[0].mxu0 %v50
  %v86 = vpop.f32.mrb[0].mxu0
  %v87 = vadd.f32 %v29, %v86
  %v88 = vpop.f32.mrb[0].mxu0
  %v89 = vpop.f32.mrb[0].mxu0
  %v90 = vadd.f32 %v29, %v89
  %v91 = vpop.f32.mrb[0].mxu0
  %92 = vdwg.mxu0
  %v93 = vld [vmem:[%s3] sm:$0xf]
  %v94 = vld [vmem:[%s3 + $0x4] sm:$0xf]
  %v95 = vunpack.c.l.bf16 %v93
  %v96 = vunpack.c.l.bf16 %v94
  %v97 = vadd.f32 %v87, %v95
  %v98 = vadd.f32 %v90, %v96
  %v99 = vpack.c.bf16 %v98, %v97
  %v101 = vunpack.c.l.b16 %v99
  %v102 = vunpack.c.h.b16 %v99
  %v103 = vpack.c.b16 %v101, %v101
  %v104 = vpack.c.b16 %v102, %v102
  %vm107 = vcmask 257024
  %108 = vst.msk [vmem:[%s4] sm:$0xf] %vm107, %v103
  %109 = vst.msk [vmem:[%s4 + $0x4] sm:$0xf] %vm107, %v104
  // Predicated region
  $region18: #{whisper_encoder_forward.17} parent=0 // pred_check
    _
  $region19: #{whisper_encoder_forward.17} parent=0 // pred_check_branch
    %111 = sbr.rel (0) target = $region21
  $region20: #{whisper_encoder_forward.17} parent=0 // pred_region
    _
  $region21: #{whisper_encoder_forward.17} parent=0 // pred_fallthru
    _
  // Predicated region
  $region22: #{whisper_encoder_forward.17} parent=0 // pred_check
    _
  $region23: #{whisper_encoder_forward.17} parent=0 // pred_check_branch
    %113 = sbr.rel (0) target = $region25
  $region24: #{whisper_encoder_forward.17} parent=0 // pred_region
    _
  $region25: #{whisper_encoder_forward.17} parent=0 // pred_fallthru
    _

// kernel: whisper_encoder_forward.18
$region0: #{whisper_encoder_forward.18}
  #allocation0 [shape = 'u32[]', space=smem, size = 0x4, offset = 0x4, fixed_abs, tag = 'smem constant byte address 0x4 - core index']
  #allocation1 [shape = 'u32[144,128]{1,0:T(1,128)}', space=vmem, size = 0x12000, scoped, tag = 'internal scratch']
  %s0 = inlined_call_operand.vmem [shape: bf16[16,32], index: 0, kind: input, shape index: {}]
  %s1 = inlined_call_operand.vmem [shape: bf16[32,128], index: 1, kind: input, shape index: {}]
  %s2 = inlined_call_operand.vmem [shape: f32[1,128], index: 2, kind: input, shape index: {}]
  %s3 = inlined_call_operand.vmem [shape: f32[1,32], index: 3, kind: input, shape index: {}]
  %s4 = inlined_call_operand.vmem [shape: f32[1,32], index: 4, kind: input, shape index: {}]
  %s5 = inlined_call_operand.vmem [shape: bf16[16,128], index: 5, kind: output, shape index: {}]
  %s6 = sld [smem:[#allocation0]]
  $region30: #{whisper_encoder_forward.18} parent=0
    _
  %s8 = ssub.s32 1, %s6
  %s9 = scalar_select 0, %s8, %s6
  // Predicated region
  $region2: #{whisper_encoder_forward.18} parent=0 // pred_check
    _
  $region3: #{whisper_encoder_forward.18} parent=0 // pred_check_branch
    %11 = sbr.rel (0) target = $region5
  $region4: #{whisper_encoder_forward.18} parent=0 // pred_region
    _
  $region5: #{whisper_encoder_forward.18} parent=0 // pred_fallthru
    _
  // Predicated region
  $region6: #{whisper_encoder_forward.18} parent=0 // pred_check
    _
  $region7: #{whisper_encoder_forward.18} parent=0 // pred_check_branch
    %13 = sbr.rel (0) target = $region9
  $region8: #{whisper_encoder_forward.18} parent=0 // pred_region
    _
  $region9: #{whisper_encoder_forward.18} parent=0 // pred_fallthru
    _
  // Predicated region
  $region10: #{whisper_encoder_forward.18} parent=0 // pred_check
    _
  $region11: #{whisper_encoder_forward.18} parent=0 // pred_check_branch
    %15 = sbr.rel (0) target = $region13
  $region12: #{whisper_encoder_forward.18} parent=0 // pred_region
    _
  $region13: #{whisper_encoder_forward.18} parent=0 // pred_fallthru
    _
  // Predicated region
  $region14: #{whisper_encoder_forward.18} parent=0 // pred_check
    _
  $region15: #{whisper_encoder_forward.18} parent=0 // pred_check_branch
    %17 = sbr.rel (0) target = $region17
  $region16: #{whisper_encoder_forward.18} parent=0 // pred_region
    _
  $region17: #{whisper_encoder_forward.18} parent=0 // pred_fallthru
    _
  // Predicated region
  $region18: #{whisper_encoder_forward.18} parent=0 // pred_check
    _
  $region19: #{whisper_encoder_forward.18} parent=0 // pred_check_branch
    %19 = sbr.rel (0) target = $region21
  $region20: #{whisper_encoder_forward.18} parent=0 // pred_region
    _
  $region21: #{whisper_encoder_forward.18} parent=0 // pred_fallthru
    _
  %v21 = vld [vmem:[%s0] sm:$0xf]
  %v22 = vld [vmem:[%s0 + $0x4] sm:$0xf]
  %v23 = vunpack.c.l.bf16 %v21
  %v24 = vunpack.c.l.bf16 %v22
  %vm25 = vcmask 261120
  %v26 = vsel %vm25, %v23, 0.0
  %27 = vadd.xlane.f32.xlu0 %v26
  %v28 = vpop.xlane.xlu0 %27
  %v29 = vsel %vm25, %v24, 0.0
  %30 = vadd.xlane.f32.xlu0 %v29
  %v31 = vpop.xlane.xlu0 %30
  %v32 = vrcp.pop 32.0
  %v33 = vmul.f32 %v28, %v32
  %v34 = vmul.f32 %v31, %v32
  %v35 = vsub.f32 %v23, %v33
  %v36 = vsub.f32 %v24, %v34
  %v37 = vmul.f32 %v35, %v35
  %v38 = vmul.f32 %v36, %v36
  %v39 = vsel %vm25, %v37, 0.0
  %40 = vadd.xlane.f32.xlu0 %v39
  %v41 = vpop.xlane.xlu0 %40
  %v42 = vsel %vm25, %v38, 0.0
  %43 = vadd.xlane.f32.xlu0 %v42
  %v44 = vpop.xlane.xlu0 %43
  %v45 = vmul.f32 %v41, %v32
  %v46 = vmul.f32 %v44, %v32
  %v47 = vadd.f32 %v45, 1e-05
  %v48 = vadd.f32 %v46, 1e-05
  %v49 = vrsqrt.pop %v47
  %v50 = vrsqrt.pop %v48
  %v51 = vmul.f32 %v35, %v49
  %v52 = vmul.f32 %v36, %v50
  %v53 = vld [vmem:[%s3] sm:$0x1]
  %v55 = vlaneseq
  %v56 = vshrl.u32 %v55, 7
  %v57 = vsub.s32 0, %v56
  %v58 = vrot.slane %v53, %v57
  %v60 = vmul.f32 %v51, %v58
  %v61 = vmul.f32 %v52, %v58
  %v62 = vld [vmem:[%s4] sm:$0x1]
  %v64 = vlaneseq
  %v65 = vshrl.u32 %v64, 7
  %v66 = vsub.s32 0, %v65
  %v67 = vrot.slane %v62, %v66
  %v69 = vadd.f32 %v60, %v67
  %v70 = vadd.f32 %v61, %v67
  %v71 = vpack.c.bf16 %v70, %v69
  %v72 = vld [vmem:[%s1] sm:$0xf]
  %v73 = vld [vmem:[%s1 + $0x4] sm:$0xf]
  %v74 = vld [vmem:[%s1 + $0x8] sm:$0xf]
  %v75 = vld [vmem:[%s1 + $0xc] sm:$0xf]
  %v76 = vld [vmem:[%s2] sm:$0x1]
  %v78 = vlaneseq
  %v79 = vshrl.u32 %v78, 7
  %v80 = vsub.s32 0, %v79
  %v81 = vrot.slane %v76, %v80
  %v87 = vunpack.c.l.b16 %v72
  %v88 = vunpack.c.l.b16 %v73
  %v89 = vunpack.c.l.b16 %v74
  %v90 = vunpack.c.l.b16 %v75
  %v91 = vpack.c.b16 %v88, %v87
  %v92 = vpack.c.b16 %v90, %v89
  %v96 = vsel %vm25, %v71, 0
  %98 = vmatprep.subr.bf16.mxu0 0
  %99 = vmatpush1.bf16.msra.mxu0 %v91
  %100 = vmatprep.subr.bf16.mxu0 0
  %101 = vmatpush1.bf16.msra.mxu0 %v92
  %102 = vmatprep.subr.bf16.mxu0 0
  %103 = vmatpush1.bf16.msra.mxu0 0
  %104 = vmatprep.subr.bf16.mxu0 0
  %105 = vmatpush1.bf16.msra.mxu0 0
  %106 = vmatprep.subr.bf16.mxu0 0
  %107 = vmatpush1.bf16.msra.mxu0 0
  %108 = vmatprep.subr.bf16.mxu0 0
  %109 = vmatpush1.bf16.msra.mxu0 0
  %110 = vmatprep.subr.bf16.mxu0 0
  %111 = vmatpush1.bf16.msra.mxu0 0
  %112 = vmatprep.subr.bf16.mxu0 0
  %113 = vmatpush1.bf16.msra.mxu0 0
  %114 = vmatprep.subr.bf16.mxu0 0
  %115 = vmatpush1.bf16.msra.mxu0 0
  %116 = vmatprep.subr.bf16.mxu0 0
  %117 = vmatpush1.bf16.msra.mxu0 0
  %118 = vmatprep.subr.bf16.mxu0 0
  %119 = vmatpush1.bf16.msra.mxu0 0
  %120 = vmatprep.subr.bf16.mxu0 0
  %121 = vmatpush1.bf16.msra.mxu0 0
  %122 = vmatprep.subr.bf16.mxu0 0
  %123 = vmatpush1.bf16.msra.mxu0 0
  %124 = vmatprep.subr.bf16.mxu0 0
  %125 = vmatpush1.bf16.msra.mxu0 0
  %126 = vmatprep.subr.bf16.mxu0 0
  %127 = vmatpush1.bf16.msra.mxu0 0
  %128 = vmatprep.subr.bf16.mxu0 0
  %129 = vmatpush1.bf16.msra.mxu0 0
  %130 = vmatprep.mubr.bf16.mxu0 0
  %131 = vmatmul.mubr.bf16.gmra.mrb[0].mxu0 %v96
  %v132 = vpop.f32.mrb[0].mxu0
  %v133 = vadd.f32 %v81, %v132
  %v134 = vpop.f32.mrb[0].mxu0
  %v135 = vpop.f32.mrb[0].mxu0
  %v136 = vadd.f32 %v81, %v135
  %v137 = vpop.f32.mrb[0].mxu0
  %138 = vdwg.mxu0
  %v139 = vmul.f32 %v133, 0.5
  %v140 = vmul.f32 %v136, 0.5
  %v141 = vmul.f32 %v133, 0.70710677
  %v142 = vmul.f32 %v136, 0.70710677
  %v143 = verf.f32.pop %v141
  %v144 = verf.f32.pop %v142
  %v145 = vadd.f32 %v143, 1.0
  %v146 = vadd.f32 %v144, 1.0
  %v147 = vmul.f32 %v139, %v145
  %v148 = vmul.f32 %v140, %v146
  %v149 = vpack.c.bf16 %v148, %v147
  %v151 = vunpack.c.l.b16 %v149
  %v152 = vunpack.c.h.b16 %v149
  %v153 = vpack.c.b16 %v151, %v151
  %v154 = vpack.c.b16 %v152, %v152
  %157 = vst [vmem:[%s5] sm:$0xf] %v153
  %158 = vst [vmem:[%s5 + $0x4] sm:$0xf] %v154
  // Predicated region
  $region22: #{whisper_encoder_forward.18} parent=0 // pred_check
    _
  $region23: #{whisper_encoder_forward.18} parent=0 // pred_check_branch
    %160 = sbr.rel (0) target = $region25
  $region24: #{whisper_encoder_forward.18} parent=0 // pred_region
    _
  $region25: #{whisper_encoder_forward.18} parent=0 // pred_fallthru
    _
  // Predicated region
  $region26: #{whisper_encoder_forward.18} parent=0 // pred_check
    _
  $region27: #{whisper_encoder_forward.18} parent=0 // pred_check_branch
    %162 = sbr.rel (0) target = $region29
  $region28: #{whisper_encoder_forward.18} parent=0 // pred_region
    _
  $region29: #{whisper_encoder_forward.18} parent=0 // pred_fallthru
    _

// kernel: whisper_encoder_forward.19
$region0: #{whisper_encoder_forward.19}
  #allocation0 [shape = 'u32[]', space=smem, size = 0x4, offset = 0x4, fixed_abs, tag = 'smem constant byte address 0x4 - core index']
  #allocation1 [shape = 'u32[144,128]{1,0:T(1,128)}', space=vmem, size = 0x12000, scoped, tag = 'internal scratch']
  %s0 = inlined_call_operand.vmem [shape: bf16[16,128], index: 0, kind: input, shape index: {}]
  %s1 = inlined_call_operand.vmem [shape: bf16[128,32], index: 1, kind: input, shape index: {}]
  %s2 = inlined_call_operand.vmem [shape: f32[1,32], index: 2, kind: input, shape index: {}]
  %s3 = inlined_call_operand.vmem [shape: bf16[16,32], index: 3, kind: input, shape index: {}]
  %s4 = inlined_call_operand.vmem [shape: bf16[16,32], index: 4, kind: output, shape index: {}]
  %s5 = sld [smem:[#allocation0]]
  $region26: #{whisper_encoder_forward.19} parent=0
    _
  %s7 = ssub.s32 1, %s5
  %s8 = scalar_select 0, %s7, %s5
  // Predicated region
  $region2: #{whisper_encoder_forward.19} parent=0 // pred_check
    _
  $region3: #{whisper_encoder_forward.19} parent=0 // pred_check_branch
    %10 = sbr.rel (0) target = $region5
  $region4: #{whisper_encoder_forward.19} parent=0 // pred_region
    _
  $region5: #{whisper_encoder_forward.19} parent=0 // pred_fallthru
    _
  // Predicated region
  $region6: #{whisper_encoder_forward.19} parent=0 // pred_check
    _
  $region7: #{whisper_encoder_forward.19} parent=0 // pred_check_branch
    %12 = sbr.rel (0) target = $region9
  $region8: #{whisper_encoder_forward.19} parent=0 // pred_region
    _
  $region9: #{whisper_encoder_forward.19} parent=0 // pred_fallthru
    _
  // Predicated region
  $region10: #{whisper_encoder_forward.19} parent=0 // pred_check
    _
  $region11: #{whisper_encoder_forward.19} parent=0 // pred_check_branch
    %14 = sbr.rel (0) target = $region13
  $region12: #{whisper_encoder_forward.19} parent=0 // pred_region
    _
  $region13: #{whisper_encoder_forward.19} parent=0 // pred_fallthru
    _
  // Predicated region
  $region14: #{whisper_encoder_forward.19} parent=0 // pred_check
    _
  $region15: #{whisper_encoder_forward.19} parent=0 // pred_check_branch
    %16 = sbr.rel (0) target = $region17
  $region16: #{whisper_encoder_forward.19} parent=0 // pred_region
    _
  $region17: #{whisper_encoder_forward.19} parent=0 // pred_fallthru
    _
  %v18 = vld [vmem:[%s0] sm:$0xf]
  %v19 = vld [vmem:[%s0 + $0x4] sm:$0xf]
  %v20 = vld [vmem:[%s1] sm:$0xf]
  %v21 = vld [vmem:[%s1 + $0x4] sm:$0xf]
  %v22 = vld [vmem:[%s1 + $0x8] sm:$0xf]
  %v23 = vld [vmem:[%s1 + $0xc] sm:$0xf]
  %v24 = vld [vmem:[%s1 + $0x10] sm:$0xf]
  %v25 = vld [vmem:[%s1 + $0x14] sm:$0xf]
  %v26 = vld [vmem:[%s1 + $0x18] sm:$0xf]
  %v27 = vld [vmem:[%s1 + $0x1c] sm:$0xf]
  %v28 = vld [vmem:[%s1 + $0x20] sm:$0xf]
  %v29 = vld [vmem:[%s1 + $0x24] sm:$0xf]
  %v30 = vld [vmem:[%s1 + $0x28] sm:$0xf]
  %v31 = vld [vmem:[%s1 + $0x2c] sm:$0xf]
  %v32 = vld [vmem:[%s1 + $0x30] sm:$0xf]
  %v33 = vld [vmem:[%s1 + $0x34] sm:$0xf]
  %v34 = vld [vmem:[%s1 + $0x38] sm:$0xf]
  %v35 = vld [vmem:[%s1 + $0x3c] sm:$0xf]
  %v36 = vld [vmem:[%s2] sm:$0x1]
  %v38 = vlaneseq
  %v39 = vshrl.u32 %v38, 7
  %v40 = vsub.s32 0, %v39
  %v41 = vrot.slane %v36, %v40
  %v45 = vunpack.c.l.b16 %v18
  %v46 = vunpack.c.l.b16 %v19
  %v47 = vpack.c.b16 %v46, %v45
  %v65 = vunpack.c.l.b16 %v20
  %v66 = vunpack.c.l.b16 %v21
  %v67 = vunpack.c.l.b16 %v22
  %v68 = vunpack.c.l.b16 %v23
  %v69 = vunpack.c.l.b16 %v24
  %v70 = vunpack.c.l.b16 %v25
  %v71 = vunpack.c.l.b16 %v26
  %v72 = vunpack.c.l.b16 %v27
  %v73 = vunpack.c.l.b16 %v28
  %v74 = vunpack.c.l.b16 %v29
  %v75 = vunpack.c.l.b16 %v30
  %v76 = vunpack.c.l.b16 %v31
  %v77 = vunpack.c.l.b16 %v32
  %v78 = vunpack.c.l.b16 %v33
  %v79 = vunpack.c.l.b16 %v34
  %v80 = vunpack.c.l.b16 %v35
  %v81 = vpack.c.b16 %v66, %v65
  %v82 = vpack.c.b16 %v68, %v67
  %v83 = vpack.c.b16 %v70, %v69
  %v84 = vpack.c.b16 %v72, %v71
  %v85 = vpack.c.b16 %v74, %v73
  %v86 = vpack.c.b16 %v76, %v75
  %v87 = vpack.c.b16 %v78, %v77
  %v88 = vpack.c.b16 %v80, %v79
  %97 = vmatprep.subr.bf16.mxu0 0
  %98 = vmatpush1.bf16.msra.mxu0 %v81
  %99 = vmatprep.subr.bf16.mxu0 0
  %100 = vmatpush1.bf16.msra.mxu0 %v82
  %101 = vmatprep.subr.bf16.mxu0 0
  %102 = vmatpush1.bf16.msra.mxu0 %v83
  %103 = vmatprep.subr.bf16.mxu0 0
  %104 = vmatpush1.bf16.msra.mxu0 %v84
  %105 = vmatprep.subr.bf16.mxu0 0
  %106 = vmatpush1.bf16.msra.mxu0 %v85
  %107 = vmatprep.subr.bf16.mxu0 0
  %108 = vmatpush1.bf16.msra.mxu0 %v86
  %109 = vmatprep.subr.bf16.mxu0 0
  %110 = vmatpush1.bf16.msra.mxu0 %v87
  %111 = vmatprep.subr.bf16.mxu0 0
  %112 = vmatpush1.bf16.msra.mxu0 %v88
  %113 = vmatprep.subr.bf16.mxu0 0
  %114 = vmatpush1.bf16.msra.mxu0 0
  %115 = vmatprep.subr.bf16.mxu0 0
  %116 = vmatpush1.bf16.msra.mxu0 0
  %117 = vmatprep.subr.bf16.mxu0 0
  %118 = vmatpush1.bf16.msra.mxu0 0
  %119 = vmatprep.subr.bf16.mxu0 0
  %120 = vmatpush1.bf16.msra.mxu0 0
  %121 = vmatprep.subr.bf16.mxu0 0
  %122 = vmatpush1.bf16.msra.mxu0 0
  %123 = vmatprep.subr.bf16.mxu0 0
  %124 = vmatpush1.bf16.msra.mxu0 0
  %125 = vmatprep.subr.bf16.mxu0 0
  %126 = vmatpush1.bf16.msra.mxu0 0
  %127 = vmatprep.subr.bf16.mxu0 0
  %128 = vmatpush1.bf16.msra.mxu0 0
  %129 = vmatprep.mubr.bf16.mxu0 0
  %130 = vmatmul.mubr.bf16.gmra.mrb[0].mxu0 %v47
  %v131 = vpop.f32.mrb[0].mxu0
  %v132 = vadd.f32 %v41, %v131
  %v133 = vpop.f32.mrb[0].mxu0
  %v134 = vpop.f32.mrb[0].mxu0
  %v135 = vadd.f32 %v41, %v134
  %v136 = vpop.f32.mrb[0].mxu0
  %137 = vdwg.mxu0
  %v138 = vld [vmem:[%s3] sm:$0xf]
  %v139 = vld [vmem:[%s3 + $0x4] sm:$0xf]
  %v140 = vunpack.c.l.bf16 %v138
  %v141 = vunpack.c.l.bf16 %v139
  %v142 = vadd.f32 %v132, %v140
  %v143 = vadd.f32 %v135, %v141
  %v144 = vpack.c.bf16 %v143, %v142
  %v146 = vunpack.c.l.b16 %v144
  %v147 = vunpack.c.h.b16 %v144
  %v148 = vpack.c.b16 %v146, %v146
  %v149 = vpack.c.b16 %v147, %v147
  %vm152 = vcmask 257024
  %153 = vst.msk [vmem:[%s4] sm:$0xf] %vm152, %v148
  %154 = vst.msk [vmem:[%s4 + $0x4] sm:$0xf] %vm152, %v149
  // Predicated region
  $region18: #{whisper_encoder_forward.19} parent=0 // pred_check
    _
  $region19: #{whisper_encoder_forward.19} parent=0 // pred_check_branch
    %156 = sbr.rel (0) target = $region21
  $region20: #{whisper_encoder_forward.19} parent=0 // pred_region
    _
  $region21: #{whisper_encoder_forward.19} parent=0 // pred_fallthru
    _
  // Predicated region
  $region22: #{whisper_encoder_forward.19} parent=0 // pred_check
    _
  $region23: #{whisper_encoder_forward.19} parent=0 // pred_check_branch
    %158 = sbr.rel (0) target = $region25
  $region24: #{whisper_encoder_forward.19} parent=0 // pred_region
    _
  $region25: #{whisper_encoder_forward.19} parent=0 // pred_fallthru
    _

// kernel: whisper_encoder_forward.25
$region0: #{whisper_encoder_forward.25}
  #allocation0 [shape = 'u32[]', space=smem, size = 0x4, offset = 0x4, fixed_abs, tag = 'smem constant byte address 0x4 - core index']
  #allocation1 [shape = 'u32[144,128]{1,0:T(1,128)}', space=vmem, size = 0x12000, scoped, tag = 'internal scratch']
  %s0 = inlined_call_operand.vmem [shape: bf16[16,32], index: 0, kind: input, shape index: {}]
  %s1 = inlined_call_operand.vmem [shape: f32[1,32], index: 1, kind: input, shape index: {}]
  %s2 = inlined_call_operand.vmem [shape: f32[1,32], index: 2, kind: input, shape index: {}]
  %s3 = inlined_call_operand.hbm [shape: f32[16,32], index: 3, kind: output, shape index: {}]
  %s4 = sld [smem:[#allocation0]]
  $region22: #{whisper_encoder_forward.25} parent=0
    _
  %s6 = ssub.s32 1, %s4
  %s7 = scalar_select 0, %s6, %s4
  $region1: #{whisper_encoder_forward.25} parent=0
    #allocation2 [shape = 'u8[8192]{0}', space=vmem, size = 0x2000, scoped, tag = 'output window, operand 0, single buffered']
    #allocation3 [shape = 's32[1]{0}', space=sflag, size = 0x4, scoped, tag = 'scoped memory for whisper_encoder_forward.25']
    %8 = vsyncpa [#allocation3], 0
    // Predicated region
    $region2: #{whisper_encoder_forward.25} parent=1 // pred_check
      _
    $region3: #{whisper_encoder_forward.25} parent=1 // pred_check_branch
      %10 = sbr.rel (0) target = $region5
    $region4: #{whisper_encoder_forward.25} parent=1 // pred_region
      _
    $region5: #{whisper_encoder_forward.25} parent=1 // pred_fallthru
      _
    // Predicated region
    $region6: #{whisper_encoder_forward.25} parent=1 // pred_check
      _
    $region7: #{whisper_encoder_forward.25} parent=1 // pred_check_branch
      %12 = sbr.rel (0) target = $region9
    $region8: #{whisper_encoder_forward.25} parent=1 // pred_region
      _
    $region9: #{whisper_encoder_forward.25} parent=1 // pred_fallthru
      _
    // Predicated region
    $region10: #{whisper_encoder_forward.25} parent=1 // pred_check
      _
    $region11: #{whisper_encoder_forward.25} parent=1 // pred_check_branch
      %14 = sbr.rel (0) target = $region13
    $region12: #{whisper_encoder_forward.25} parent=1 // pred_region
      _
    $region13: #{whisper_encoder_forward.25} parent=1 // pred_fallthru
      _
    %v15 = vld [vmem:[%s0] sm:$0xf]
    %v16 = vld [vmem:[%s0 + $0x4] sm:$0xf]
    %v17 = vunpack.c.l.bf16 %v15
    %v18 = vunpack.c.l.bf16 %v16
    %vm19 = vcmask 261120
    %v20 = vsel %vm19, %v17, 0.0
    %21 = vadd.xlane.f32.xlu0 %v20
    %v22 = vpop.xlane.xlu0 %21
    %v23 = vsel %vm19, %v18, 0.0
    %24 = vadd.xlane.f32.xlu0 %v23
    %v25 = vpop.xlane.xlu0 %24
    %v26 = vrcp.pop 32.0
    %v27 = vmul.f32 %v22, %v26
    %v28 = vmul.f32 %v25, %v26
    %v29 = vsub.f32 %v17, %v27
    %v30 = vsub.f32 %v18, %v28
    %v31 = vmul.f32 %v29, %v29
    %v32 = vmul.f32 %v30, %v30
    %v33 = vsel %vm19, %v31, 0.0
    %34 = vadd.xlane.f32.xlu0 %v33
    %v35 = vpop.xlane.xlu0 %34
    %v36 = vsel %vm19, %v32, 0.0
    %37 = vadd.xlane.f32.xlu0 %v36
    %v38 = vpop.xlane.xlu0 %37
    %v39 = vmul.f32 %v35, %v26
    %v40 = vmul.f32 %v38, %v26
    %v41 = vadd.f32 %v39, 1e-05
    %v42 = vadd.f32 %v40, 1e-05
    %v43 = vrsqrt.pop %v41
    %v44 = vrsqrt.pop %v42
    %v45 = vmul.f32 %v29, %v43
    %v46 = vmul.f32 %v30, %v44
    %v47 = vld [vmem:[%s1] sm:$0x1]
    %v49 = vlaneseq
    %v50 = vshrl.u32 %v49, 7
    %v51 = vsub.s32 0, %v50
    %v52 = vrot.slane %v47, %v51
    %v54 = vmul.f32 %v45, %v52
    %v55 = vmul.f32 %v46, %v52
    %v56 = vld [vmem:[%s2] sm:$0x1]
    %v58 = vlaneseq
    %v59 = vshrl.u32 %v58, 7
    %v60 = vsub.s32 0, %v59
    %v61 = vrot.slane %v56, %v60
    %v63 = vadd.f32 %v54, %v61
    %v64 = vadd.f32 %v55, %v61
    %65 = vst.msk [vmem:[#allocation2] sm:$0xff] %vm19, %v63
    %66 = vst.msk [vmem:[#allocation2 + $0x8] sm:$0xff] %vm19, %v64
    // Predicated region
    $region14: #{whisper_encoder_forward.25} parent=1 // pred_check
      _
    $region15: #{whisper_encoder_forward.25} parent=1 // pred_check_branch
      %68 = sbr.rel (0) target = $region17
    $region16: #{whisper_encoder_forward.25} parent=1 // pred_region
      %s70 = ssub.s32 256, 256
      %71 = vsyncadd [#allocation3], %s70
      %s72 = sshll.u32 [#allocation2], 4
      %s73 = int_to_ptr.vmem [resolvable:$true] %s72
      %78 = dma.vmem_to_hbm [thread:$0]  %s73, 256, %s3, [#allocation3], 128, 128, 8
    $region17: #{whisper_encoder_forward.25} parent=1 // pred_fallthru
      _
    // Predicated region
    $region18: #{whisper_encoder_forward.25} parent=1 // pred_check
      _
    $region19: #{whisper_encoder_forward.25} parent=1 // pred_check_branch
      %80 = sbr.rel (0) target = $region21
    $region20: #{whisper_encoder_forward.25} parent=1 // pred_region
      %81 = dma.done [#allocation3], 256
    $region21: #{whisper_encoder_forward.25} parent=1 // pred_fallthru
      _
    %82 = vsyncpa [#allocation3], 1

</llo_original>
